<compile_context>
chip_gen: v5e
topology: v5e:2x2
jax: 0.10.0
libtpu: 0.0.40
codegen_flags: <defaults>
</compile_context>

<pallas_src>
import math
from functools import partial

import numpy as np
import jax
import jax.numpy as jnp
from jax import lax
from jax.experimental import pallas as pl
from jax.experimental.pallas import tpu as pltpu


# ----------------------------------------------------------------------------
# helpers
# ----------------------------------------------------------------------------
def _gelu_tanh(x):
    # TODO(synk): PyTorch nn.GELU() default is the exact erf form; erf has no
    # guaranteed Mosaic lowering, so the tanh form (max-abs-err ~3e-4) is used.
    c = math.sqrt(2.0 / math.pi)
    return 0.5 * x * (1.0 + jnp.tanh(c * (x + 0.044715 * x * x * x)))


def _dw_premasked_weights(wdw, H, W, D):
    """Fold the 27 spatial-validity masks into the depthwise weights.

    Returns mw of shape (27, N, hid) with
      mw[t, n, ch] = valid(t, n) * wdw[ch, 0, a, b, c],  t = (a*3+b)*3+c.
    """
    hid = wdw.shape[0]
    N = H * W * D
    wdw27 = wdw.reshape(hid, 27).T                      # (27, hid)
    n = np.arange(N)
    ih, iw, idd = n // (W * D), (n // D) % W, n % D
    mask = np.zeros((27, N), np.float32)
    for a in range(3):
        for b in range(3):
            for c in range(3):
                t = (a * 3 + b) * 3 + c
                ok = ((ih + a - 1 >= 0) & (ih + a - 1 < H) &
                      (iw + b - 1 >= 0) & (iw + b - 1 < W) &
                      (idd + c - 1 >= 0) & (idd + c - 1 < D))
                mask[t] = ok.astype(np.float32)
    mw = jnp.asarray(mask)[:, :, None] * wdw27[:, None, :]   # (27, N, hid)
    return mw.astype(jnp.float32)


# ----------------------------------------------------------------------------
# the fused Block kernel (one program = one batch element)
# ----------------------------------------------------------------------------
def _fused_block_kernel(x_ref, wqkv_ref, wproj_ref, bproj_ref,
                        g1_ref, be1_ref, g2_ref, be2_ref,
                        w1_ref, b1_ref, mw_ref, w2_ref, b2_ref,
                        o_ref, *, N, C, num_heads, hid, H, W, D):
    hd = C // num_heads
    scale = float(hd) ** -0.5
    eps = 1e-5

    x = x_ref[...]                                               # (N, C) f32

    # ---------------- LayerNorm 1 (f32) ----------------
    mu = jnp.mean(x, axis=-1, keepdims=True)
    xc = x - mu
    var = jnp.mean(xc * xc, axis=-1, keepdims=True)
    h1 = xc * lax.rsqrt(var + eps) * g1_ref[...] + be1_ref[...]

    # ---------------- fused q | k | v projection (single MXU matmul) --------
    qkv = jnp.dot(h1.astype(jnp.bfloat16), wqkv_ref[...],
                  preferred_element_type=jnp.float32)            # (N, 3C)

    # ---------------- multi-head attention ----------------
    heads = []
    for h_i in range(num_heads):
        c0 = h_i * hd
        q = qkv[:, c0:c0 + hd].astype(jnp.bfloat16)
        k = qkv[:, C + c0:C + c0 + hd].astype(jnp.bfloat16)
        v = qkv[:, 2 * C + c0:2 * C + c0 + hd].astype(jnp.bfloat16)
        # s = q @ k^T * scale
        s = lax.dot_general(q, k, (((1,), (1,)), ((), ())),
                            preferred_element_type=jnp.float32) * scale
        s = s - jnp.max(s, axis=-1, keepdims=True)
        p = jnp.exp(s)
        p = p * pl.reciprocal(jnp.sum(p, axis=-1, keepdims=True), approx=True)
        heads.append(jnp.dot(p.astype(jnp.bfloat16), v,
                             preferred_element_type=jnp.float32))  # (N, hd)
    o = jnp.concatenate(heads, axis=-1)                          # (N, C)

    # single output projection (N, C) @ (C, C)
    attn = jnp.dot(o.astype(jnp.bfloat16), wproj_ref[...],
                   preferred_element_type=jnp.float32) + bproj_ref[...]
    x1 = x + attn                                                # residual 1

    # ---------------- LayerNorm 2 ----------------
    mu2 = jnp.mean(x1, axis=-1, keepdims=True)
    x2c = x1 - mu2
    var2 = jnp.mean(x2c * x2c, axis=-1, keepdims=True)
    h2 = x2c * lax.rsqrt(var2 + eps) * g2_ref[...] + be2_ref[...]

    # ---------------- MLP fc1 + GELU ----------------
    f1 = jnp.dot(h2.astype(jnp.bfloat16), w1_ref[...],
                 preferred_element_type=jnp.float32) + b1_ref[...]   # (N, hid)
    f1 = _gelu_tanh(f1)

    # ---------------- depthwise 3x3x3 conv via 27 XLU rolls ----------------
    # tokens are (H, W, D) row-major flattened; a valid spatial neighbour is a
    # pure row shift, so each tap is a circular roll along the token axis.
    # Out-of-volume (wrapped) taps are zeroed because the validity mask has
    # already been folded into mw in the wrapper.
    acc = jnp.zeros((N, hid), jnp.float32)
    for a in range(3):
        for bb in range(3):
            for cc in range(3):
                t = (a * 3 + bb) * 3 + cc
                off = ((a - 1) * W + (bb - 1)) * D + (cc - 1)
                shift = (-off) % N
                tap = pltpu.roll(f1, shift=shift, axis=0) if shift else f1
                acc = acc + tap * mw_ref[t]                      # (N, hid)
    f1 = _gelu_tanh(acc)

    # ---------------- MLP fc2 + residual ----------------
    f2 = jnp.dot(f1.astype(jnp.bfloat16), w2_ref[...],
                 preferred_element_type=jnp.float32) + b2_ref[...]
    o_ref[...] = x1 + f2


# ----------------------------------------------------------------------------
# wrapper
# ----------------------------------------------------------------------------
def block_forward(x, params, *, H, W, D, num_heads):
    """x: (B, N, C) with N = H*W*D.  Weights are stored in (in, out) layout
    (i.e. the transpose of torch's nn.Linear.weight)."""
    B, N, C = x.shape
    assert N == H * W * D and C % num_heads == 0
    hid = params["w1"].shape[1]
    BN = B * N

    wqkv = jnp.concatenate([params["wq"], params["wkv"]], axis=1)  # (C, 3C)
    mw = _dw_premasked_weights(params["wdw"], H, W, D)             # (27, N, hid)

    def r1(v):
        return v.reshape(1, -1).astype(jnp.float32)

    args = (
        x.reshape(BN, C).astype(jnp.float32),
        wqkv.astype(jnp.bfloat16),
        params["wproj"].astype(jnp.bfloat16),
        r1(params["bproj"]),
        r1(params["g1"]), r1(params["be1"]),
        r1(params["g2"]), r1(params["be2"]),
        params["w1"].astype(jnp.bfloat16),
        r1(params["b1"]),
        mw,
        params["w2"].astype(jnp.bfloat16),
        r1(params["b2"]),
    )

    def const_spec(shape):
        zeros = (0,) * len(shape)
        return pl.BlockSpec(shape, lambda b, z=zeros: z)

    in_specs = [
        pl.BlockSpec((N, C), lambda b: (b, 0)),     # x (per-batch block)
        const_spec((C, 3 * C)),                     # wqkv
        const_spec((C, C)),                         # wproj
        const_spec((1, C)),                         # bproj
        const_spec((1, C)), const_spec((1, C)),     # g1, be1
        const_spec((1, C)), const_spec((1, C)),     # g2, be2
        const_spec((C, hid)),                       # w1
        const_spec((1, hid)),                       # b1
        const_spec((27, N, hid)),                   # pre-masked dw weights
        const_spec((hid, C)),                       # w2
        const_spec((1, C)),                         # b2
    ]

    kernel = partial(_fused_block_kernel, N=N, C=C, num_heads=num_heads,
                     hid=hid, H=H, W=W, D=D)

    out = pl.pallas_call(
        kernel,
        out_shape=jax.ShapeDtypeStruct((BN, C), jnp.float32),
        grid=(B,),
        in_specs=in_specs,
        out_specs=pl.BlockSpec((N, C), lambda b: (b, 0)),
        compiler_params=pltpu.CompilerParams(
            dimension_semantics=("parallel",)),
    )(*args)
    return out.reshape(B, N, C)


# ----------------------------------------------------------------------------
# pure-JAX (f32, exact-GELU) reference of Block.forward
# ----------------------------------------------------------------------------
def block_reference(x, params, *, H, W, D, num_heads):
    B, N, C = x.shape
    hid = params["w1"].shape[1]
    hd = C // num_heads
    eps = 1e-5

    def ln(v, g, b):
        mu = jnp.mean(v, axis=-1, keepdims=True)
        var = jnp.mean((v - mu) ** 2, axis=-1, keepdims=True)
        return (v - mu) / jnp.sqrt(var + eps) * g + b

    h = ln(x, params["g1"], params["be1"])
    q = (h @ params["wq"]).reshape(B, N, num_heads, hd).transpose(0, 2, 1, 3)
    kv = h @ params["wkv"]
    k = kv[..., :C].reshape(B, N, num_heads, hd).transpose(0, 2, 1, 3)
    v = kv[..., C:].reshape(B, N, num_heads, hd).transpose(0, 2, 1, 3)
    s = (q @ jnp.swapaxes(k, -1, -2)) * (hd ** -0.5)
    p = jax.nn.softmax(s, axis=-1)
    o = (p @ v).transpose(0, 2, 1, 3).reshape(B, N, C)
    x = x + (o @ params["wproj"] + params["bproj"])

    h2 = ln(x, params["g2"], params["be2"])
    f1 = jax.nn.gelu(h2 @ params["w1"] + params["b1"], approximate=False)

    vol = f1.reshape(B, H, W, D, hid)
    volp = jnp.pad(vol, ((0, 0), (1, 1), (1, 1), (1, 1), (0, 0)))
    dw = jnp.zeros_like(vol)
    wdw = params["wdw"]                                            # (hid, 1, 3, 3, 3)
    for a in range(3):
        for b in range(3):
            for c in range(3):
                dw = dw + volp[:, a:a + H, b:b + W, c:c + D, :] * wdw[:, 0, a, b, c]
    f1 = jax.nn.gelu(dw.reshape(B, N, hid), approximate=False)
    x = x + (f1 @ params["w2"] + params["b2"])
    return x


# ----------------------------------------------------------------------------
# deterministic init + harness
# ----------------------------------------------------------------------------
def init_params(key, C, hid):
    ks = jax.random.split(key, 12)
    std = 0.02
    return {
        "g1": 1.0 + 0.1 * jax.random.normal(ks[0], (C,), jnp.float32),
        "be1": 0.05 * jax.random.normal(ks[1], (C,), jnp.float32),
        "g2": 1.0 + 0.1 * jax.random.normal(ks[2], (C,), jnp.float32),
        "be2": 0.05 * jax.random.normal(ks[3], (C,), jnp.float32),
        "wq": std * jax.random.normal(ks[4], (C, C), jnp.float32),
        "wkv": std * jax.random.normal(ks[5], (C, 2 * C), jnp.float32),
        "wproj": std * jax.random.normal(ks[6], (C, C), jnp.float32),
        "bproj": jnp.zeros((C,), jnp.float32),
        "w1": std * jax.random.normal(ks[7], (C, hid), jnp.float32),
        "b1": 0.02 * jax.random.normal(ks[8], (hid,), jnp.float32),
        "wdw": math.sqrt(2.0 / 27.0)
               * jax.random.normal(ks[9], (hid, 1, 3, 3, 3), jnp.float32),
        "w2": std * jax.random.normal(ks[10], (hid, C), jnp.float32),
        "b2": 0.02 * jax.random.normal(ks[11], (C,), jnp.float32),
    }


if __name__ == "__main__":
    B, H, W, D = 2, 4, 4, 4
    C, num_heads, mlp_ratio = 32, 2, 2
    hid = C * mlp_ratio
    N = H * W * D

    key = jax.random.PRNGKey(0)
    kx, kp = jax.random.split(key)
    x = jax.random.normal(kx, (B, N, C), jnp.float32)
    params = init_params(kp, C, hid)

    fwd = jax.jit(partial(block_forward, H=H, W=W, D=D, num_heads=num_heads))
    out = fwd(x, params)
    out = jax.block_until_ready(out)

    ref = jax.block_until_ready(
        block_reference(x, params, H=H, W=W, D=D, num_heads=num_heads))

    assert out.shape == (B, N, C)
    assert bool(jnp.all(jnp.isfinite(out)))
    err = float(jnp.max(jnp.abs(out - ref)))
    assert err < 2e-2, f"max abs err vs f32 reference: {err}"
    print("KERNEL_OK")
</pallas_src>

<mosaic_0001>
module attributes {stable_mosaic.version = 11 : i64} {
  func.func @_fused_block_kernel(%arg0: i32, %arg1: memref<64x32xf32, #tpu.memory_space<vmem>>, %arg2: memref<32x96xbf16, #tpu.memory_space<vmem>>, %arg3: memref<32x32xbf16, #tpu.memory_space<vmem>>, %arg4: memref<1x32xf32, #tpu.memory_space<vmem>>, %arg5: memref<1x32xf32, #tpu.memory_space<vmem>>, %arg6: memref<1x32xf32, #tpu.memory_space<vmem>>, %arg7: memref<1x32xf32, #tpu.memory_space<vmem>>, %arg8: memref<1x32xf32, #tpu.memory_space<vmem>>, %arg9: memref<32x64xbf16, #tpu.memory_space<vmem>>, %arg10: memref<1x64xf32, #tpu.memory_space<vmem>>, %arg11: memref<27x64x64xf32, #tpu.memory_space<vmem>>, %arg12: memref<64x32xbf16, #tpu.memory_space<vmem>>, %arg13: memref<1x32xf32, #tpu.memory_space<vmem>>, %arg14: memref<64x32xf32, #tpu.memory_space<vmem>>) attributes {dimension_semantics = [#tpu.dimension_semantics<parallel>], iteration_bounds = array<i64: 2>, scalar_prefetch = 0 : i64, scratch_operands = 0 : i64, tpu.core_type = #tpu.core_type<tc>, window_params = [{transform_indices = @transform_0, window_bounds = array<i64: 64, 32>}, {pipeline_mode = #tpu.pipeline_mode<synchronous>, transform_indices = @transform_1, window_bounds = array<i64: 32, 96>}, {pipeline_mode = #tpu.pipeline_mode<synchronous>, transform_indices = @transform_2, window_bounds = array<i64: 32, 32>}, {pipeline_mode = #tpu.pipeline_mode<synchronous>, transform_indices = @transform_3, window_bounds = array<i64: 1, 32>}, {pipeline_mode = #tpu.pipeline_mode<synchronous>, transform_indices = @transform_4, window_bounds = array<i64: 1, 32>}, {pipeline_mode = #tpu.pipeline_mode<synchronous>, transform_indices = @transform_5, window_bounds = array<i64: 1, 32>}, {pipeline_mode = #tpu.pipeline_mode<synchronous>, transform_indices = @transform_6, window_bounds = array<i64: 1, 32>}, {pipeline_mode = #tpu.pipeline_mode<synchronous>, transform_indices = @transform_7, window_bounds = array<i64: 1, 32>}, {pipeline_mode = #tpu.pipeline_mode<synchronous>, transform_indices = @transform_8, window_bounds = array<i64: 32, 64>}, {pipeline_mode = #tpu.pipeline_mode<synchronous>, transform_indices = @transform_9, window_bounds = array<i64: 1, 64>}, {pipeline_mode = #tpu.pipeline_mode<synchronous>, transform_indices = @transform_10, window_bounds = array<i64: 27, 64, 64>}, {pipeline_mode = #tpu.pipeline_mode<synchronous>, transform_indices = @transform_11, window_bounds = array<i64: 64, 32>}, {pipeline_mode = #tpu.pipeline_mode<synchronous>, transform_indices = @transform_12, window_bounds = array<i64: 1, 32>}, {transform_indices = @transform_13, window_bounds = array<i64: 64, 32>}]} {
    %c0 = arith.constant 0 : index
    %c0_0 = arith.constant 0 : index
    %0 = vector.load %arg1[%c0, %c0_0] : memref<64x32xf32, #tpu.memory_space<vmem>>, vector<64x32xf32>
    %cst = arith.constant dense<0.000000e+00> : vector<64xf32>
    %1 = vector.multi_reduction <add>, %0, %cst [1] : vector<64x32xf32> to vector<64xf32>
    %2 = vector.shape_cast %1 : vector<64xf32> to vector<64x1xf32>
    %cst_1 = arith.constant 3.200000e+01 : f32
    %3 = vector.broadcast %cst_1 : f32 to vector<64x1xf32>
    %4 = arith.divf %2, %3 : vector<64x1xf32>
    %5 = vector.broadcast %4 : vector<64x1xf32> to vector<64x32xf32>
    %6 = arith.subf %0, %5 : vector<64x32xf32>
    %7 = arith.mulf %6, %6 : vector<64x32xf32>
    %cst_2 = arith.constant dense<0.000000e+00> : vector<64xf32>
    %8 = vector.multi_reduction <add>, %7, %cst_2 [1] : vector<64x32xf32> to vector<64xf32>
    %9 = vector.shape_cast %8 : vector<64xf32> to vector<64x1xf32>
    %cst_3 = arith.constant 3.200000e+01 : f32
    %10 = vector.broadcast %cst_3 : f32 to vector<64x1xf32>
    %11 = arith.divf %9, %10 : vector<64x1xf32>
    %cst_4 = arith.constant 9.99999974E-6 : f32
    %12 = vector.broadcast %cst_4 : f32 to vector<64x1xf32>
    %13 = arith.addf %11, %12 : vector<64x1xf32>
    %14 = math.rsqrt %13 : vector<64x1xf32>
    %15 = vector.broadcast %14 : vector<64x1xf32> to vector<64x32xf32>
    %16 = arith.mulf %6, %15 : vector<64x32xf32>
    %c0_5 = arith.constant 0 : index
    %c0_6 = arith.constant 0 : index
    %17 = vector.load %arg5[%c0_5, %c0_6] : memref<1x32xf32, #tpu.memory_space<vmem>>, vector<1x32xf32>
    %18 = vector.broadcast %17 : vector<1x32xf32> to vector<64x32xf32>
    %19 = arith.mulf %16, %18 : vector<64x32xf32>
    %c0_7 = arith.constant 0 : index
    %c0_8 = arith.constant 0 : index
    %20 = vector.load %arg6[%c0_7, %c0_8] : memref<1x32xf32, #tpu.memory_space<vmem>>, vector<1x32xf32>
    %21 = vector.broadcast %20 : vector<1x32xf32> to vector<64x32xf32>
    %22 = arith.addf %19, %21 : vector<64x32xf32>
    %23 = arith.truncf %22 : vector<64x32xf32> to vector<64x32xbf16>
    %c0_9 = arith.constant 0 : index
    %c0_10 = arith.constant 0 : index
    %24 = vector.load %arg2[%c0_9, %c0_10] : memref<32x96xbf16, #tpu.memory_space<vmem>>, vector<32x96xbf16>
    %cst_11 = arith.constant dense<0.000000e+00> : vector<64x96xf32>
    %25 = tpu.matmul %23, %24, %cst_11 {dimension_numbers = #tpu.dot_dimension_numbers<[1], [0], [0], [1], [0, 0, 1, 1], [], []>} : vector<64x32xbf16>, vector<32x96xbf16>, vector<64x96xf32> -> vector<64x96xf32>
    %26 = vector.extract_strided_slice %25 {offsets = [0, 0], sizes = [64, 16], strides = [1, 1]} : vector<64x96xf32> to vector<64x16xf32>
    %27 = arith.truncf %26 : vector<64x16xf32> to vector<64x16xbf16>
    %28 = vector.extract_strided_slice %25 {offsets = [0, 32], sizes = [64, 16], strides = [1, 1]} : vector<64x96xf32> to vector<64x16xf32>
    %29 = arith.truncf %28 : vector<64x16xf32> to vector<64x16xbf16>
    %30 = vector.extract_strided_slice %25 {offsets = [0, 64], sizes = [64, 16], strides = [1, 1]} : vector<64x96xf32> to vector<64x16xf32>
    %31 = arith.truncf %30 : vector<64x16xf32> to vector<64x16xbf16>
    %cst_12 = arith.constant dense<0.000000e+00> : vector<64x64xf32>
    %32 = tpu.matmul %27, %29, %cst_12 {dimension_numbers = #tpu.dot_dimension_numbers<[1], [1], [0], [0], [0, 0, 1, 0], [], []>} : vector<64x16xbf16>, vector<64x16xbf16>, vector<64x64xf32> -> vector<64x64xf32>
    %cst_13 = arith.constant 2.500000e-01 : f32
    %33 = vector.broadcast %cst_13 : f32 to vector<64x64xf32>
    %34 = arith.mulf %32, %33 : vector<64x64xf32>
    %cst_14 = arith.constant dense<0xFF800000> : vector<64xf32>
    %35 = vector.multi_reduction <maximumf>, %34, %cst_14 [1] : vector<64x64xf32> to vector<64xf32>
    %36 = vector.shape_cast %35 : vector<64xf32> to vector<64x1xf32>
    %37 = vector.broadcast %36 : vector<64x1xf32> to vector<64x64xf32>
    %38 = arith.subf %34, %37 : vector<64x64xf32>
    %39 = math.exp %38 : vector<64x64xf32>
    %cst_15 = arith.constant dense<0.000000e+00> : vector<64xf32>
    %40 = vector.multi_reduction <add>, %39, %cst_15 [1] : vector<64x64xf32> to vector<64xf32>
    %41 = vector.shape_cast %40 : vector<64xf32> to vector<64x1xf32>
    %42 = tpu.reciprocal %41 {approx = true} : vector<64x1xf32> -> vector<64x1xf32>
    %43 = vector.broadcast %42 : vector<64x1xf32> to vector<64x64xf32>
    %44 = arith.mulf %39, %43 : vector<64x64xf32>
    %45 = arith.truncf %44 : vector<64x64xf32> to vector<64x64xbf16>
    %cst_16 = arith.constant dense<0.000000e+00> : vector<64x16xf32>
    %46 = tpu.matmul %45, %31, %cst_16 {dimension_numbers = #tpu.dot_dimension_numbers<[1], [0], [0], [1], [0, 0, 1, 1], [], []>} : vector<64x64xbf16>, vector<64x16xbf16>, vector<64x16xf32> -> vector<64x16xf32>
    %47 = vector.extract_strided_slice %25 {offsets = [0, 16], sizes = [64, 16], strides = [1, 1]} : vector<64x96xf32> to vector<64x16xf32>
    %48 = arith.truncf %47 : vector<64x16xf32> to vector<64x16xbf16>
    %49 = vector.extract_strided_slice %25 {offsets = [0, 48], sizes = [64, 16], strides = [1, 1]} : vector<64x96xf32> to vector<64x16xf32>
    %50 = arith.truncf %49 : vector<64x16xf32> to vector<64x16xbf16>
    %51 = vector.extract_strided_slice %25 {offsets = [0, 80], sizes = [64, 16], strides = [1, 1]} : vector<64x96xf32> to vector<64x16xf32>
    %52 = arith.truncf %51 : vector<64x16xf32> to vector<64x16xbf16>
    %cst_17 = arith.constant dense<0.000000e+00> : vector<64x64xf32>
    %53 = tpu.matmul %48, %50, %cst_17 {dimension_numbers = #tpu.dot_dimension_numbers<[1], [1], [0], [0], [0, 0, 1, 0], [], []>} : vector<64x16xbf16>, vector<64x16xbf16>, vector<64x64xf32> -> vector<64x64xf32>
    %cst_18 = arith.constant 2.500000e-01 : f32
    %54 = vector.broadcast %cst_18 : f32 to vector<64x64xf32>
    %55 = arith.mulf %53, %54 : vector<64x64xf32>
    %cst_19 = arith.constant dense<0xFF800000> : vector<64xf32>
    %56 = vector.multi_reduction <maximumf>, %55, %cst_19 [1] : vector<64x64xf32> to vector<64xf32>
    %57 = vector.shape_cast %56 : vector<64xf32> to vector<64x1xf32>
    %58 = vector.broadcast %57 : vector<64x1xf32> to vector<64x64xf32>
    %59 = arith.subf %55, %58 : vector<64x64xf32>
    %60 = math.exp %59 : vector<64x64xf32>
    %cst_20 = arith.constant dense<0.000000e+00> : vector<64xf32>
    %61 = vector.multi_reduction <add>, %60, %cst_20 [1] : vector<64x64xf32> to vector<64xf32>
    %62 = vector.shape_cast %61 : vector<64xf32> to vector<64x1xf32>
    %63 = tpu.reciprocal %62 {approx = true} : vector<64x1xf32> -> vector<64x1xf32>
    %64 = vector.broadcast %63 : vector<64x1xf32> to vector<64x64xf32>
    %65 = arith.mulf %60, %64 : vector<64x64xf32>
    %66 = arith.truncf %65 : vector<64x64xf32> to vector<64x64xbf16>
    %cst_21 = arith.constant dense<0.000000e+00> : vector<64x16xf32>
    %67 = tpu.matmul %66, %52, %cst_21 {dimension_numbers = #tpu.dot_dimension_numbers<[1], [0], [0], [1], [0, 0, 1, 1], [], []>} : vector<64x64xbf16>, vector<64x16xbf16>, vector<64x16xf32> -> vector<64x16xf32>
    %68 = tpu.concatenate %46, %67 in 1 : vector<64x16xf32>, vector<64x16xf32> -> vector<64x32xf32>
    %69 = arith.truncf %68 : vector<64x32xf32> to vector<64x32xbf16>
    %c0_22 = arith.constant 0 : index
    %c0_23 = arith.constant 0 : index
    %70 = vector.load %arg3[%c0_22, %c0_23] : memref<32x32xbf16, #tpu.memory_space<vmem>>, vector<32x32xbf16>
    %cst_24 = arith.constant dense<0.000000e+00> : vector<64x32xf32>
    %71 = tpu.matmul %69, %70, %cst_24 {dimension_numbers = #tpu.dot_dimension_numbers<[1], [0], [0], [1], [0, 0, 1, 1], [], []>} : vector<64x32xbf16>, vector<32x32xbf16>, vector<64x32xf32> -> vector<64x32xf32>
    %c0_25 = arith.constant 0 : index
    %c0_26 = arith.constant 0 : index
    %72 = vector.load %arg4[%c0_25, %c0_26] : memref<1x32xf32, #tpu.memory_space<vmem>>, vector<1x32xf32>
    %73 = vector.broadcast %72 : vector<1x32xf32> to vector<64x32xf32>
    %74 = arith.addf %71, %73 : vector<64x32xf32>
    %75 = arith.addf %0, %74 : vector<64x32xf32>
    %cst_27 = arith.constant dense<0.000000e+00> : vector<64xf32>
    %76 = vector.multi_reduction <add>, %75, %cst_27 [1] : vector<64x32xf32> to vector<64xf32>
    %77 = vector.shape_cast %76 : vector<64xf32> to vector<64x1xf32>
    %cst_28 = arith.constant 3.200000e+01 : f32
    %78 = vector.broadcast %cst_28 : f32 to vector<64x1xf32>
    %79 = arith.divf %77, %78 : vector<64x1xf32>
    %80 = vector.broadcast %79 : vector<64x1xf32> to vector<64x32xf32>
    %81 = arith.subf %75, %80 : vector<64x32xf32>
    %82 = arith.mulf %81, %81 : vector<64x32xf32>
    %cst_29 = arith.constant dense<0.000000e+00> : vector<64xf32>
    %83 = vector.multi_reduction <add>, %82, %cst_29 [1] : vector<64x32xf32> to vector<64xf32>
    %84 = vector.shape_cast %83 : vector<64xf32> to vector<64x1xf32>
    %cst_30 = arith.constant 3.200000e+01 : f32
    %85 = vector.broadcast %cst_30 : f32 to vector<64x1xf32>
    %86 = arith.divf %84, %85 : vector<64x1xf32>
    %cst_31 = arith.constant 9.99999974E-6 : f32
    %87 = vector.broadcast %cst_31 : f32 to vector<64x1xf32>
    %88 = arith.addf %86, %87 : vector<64x1xf32>
    %89 = math.rsqrt %88 : vector<64x1xf32>
    %90 = vector.broadcast %89 : vector<64x1xf32> to vector<64x32xf32>
    %91 = arith.mulf %81, %90 : vector<64x32xf32>
    %c0_32 = arith.constant 0 : index
    %c0_33 = arith.constant 0 : index
    %92 = vector.load %arg7[%c0_32, %c0_33] : memref<1x32xf32, #tpu.memory_space<vmem>>, vector<1x32xf32>
    %93 = vector.broadcast %92 : vector<1x32xf32> to vector<64x32xf32>
    %94 = arith.mulf %91, %93 : vector<64x32xf32>
    %c0_34 = arith.constant 0 : index
    %c0_35 = arith.constant 0 : index
    %95 = vector.load %arg8[%c0_34, %c0_35] : memref<1x32xf32, #tpu.memory_space<vmem>>, vector<1x32xf32>
    %96 = vector.broadcast %95 : vector<1x32xf32> to vector<64x32xf32>
    %97 = arith.addf %94, %96 : vector<64x32xf32>
    %98 = arith.truncf %97 : vector<64x32xf32> to vector<64x32xbf16>
    %c0_36 = arith.constant 0 : index
    %c0_37 = arith.constant 0 : index
    %99 = vector.load %arg9[%c0_36, %c0_37] : memref<32x64xbf16, #tpu.memory_space<vmem>>, vector<32x64xbf16>
    %cst_38 = arith.constant dense<0.000000e+00> : vector<64x64xf32>
    %100 = tpu.matmul %98, %99, %cst_38 {dimension_numbers = #tpu.dot_dimension_numbers<[1], [0], [0], [1], [0, 0, 1, 1], [], []>} : vector<64x32xbf16>, vector<32x64xbf16>, vector<64x64xf32> -> vector<64x64xf32>
    %c0_39 = arith.constant 0 : index
    %c0_40 = arith.constant 0 : index
    %101 = vector.load %arg10[%c0_39, %c0_40] : memref<1x64xf32, #tpu.memory_space<vmem>>, vector<1x64xf32>
    %102 = vector.broadcast %101 : vector<1x64xf32> to vector<64x64xf32>
    %103 = arith.addf %100, %102 : vector<64x64xf32>
    %cst_41 = arith.constant 5.000000e-01 : f32
    %104 = vector.broadcast %cst_41 : f32 to vector<64x64xf32>
    %105 = arith.mulf %104, %103 : vector<64x64xf32>
    %cst_42 = arith.constant 4.471500e-02 : f32
    %106 = vector.broadcast %cst_42 : f32 to vector<64x64xf32>
    %107 = arith.mulf %106, %103 : vector<64x64xf32>
    %108 = arith.mulf %107, %103 : vector<64x64xf32>
    %109 = arith.mulf %108, %103 : vector<64x64xf32>
    %110 = arith.addf %103, %109 : vector<64x64xf32>
    %cst_43 = arith.constant 0.797884583 : f32
    %111 = vector.broadcast %cst_43 : f32 to vector<64x64xf32>
    %112 = arith.mulf %111, %110 : vector<64x64xf32>
    %113 = math.tanh %112 : vector<64x64xf32>
    %cst_44 = arith.constant 1.000000e+00 : f32
    %114 = vector.broadcast %cst_44 : f32 to vector<64x64xf32>
    %115 = arith.addf %114, %113 : vector<64x64xf32>
    %116 = arith.mulf %105, %115 : vector<64x64xf32>
    %cst_45 = arith.constant 0.000000e+00 : f32
    %117 = vector.broadcast %cst_45 : f32 to vector<64x64xf32>
    %c21_i32 = arith.constant 21 : i32
    %118 = tpu.dynamic_rotate %116 by %c21_i32 dim 0 : vector<64x64xf32>, i32 -> vector<64x64xf32>
    %c0_46 = arith.constant 0 : index
    %c0_47 = arith.constant 0 : index
    %c0_48 = arith.constant 0 : index
    %119 = vector.load %arg11[%c0_46, %c0_47, %c0_48] : memref<27x64x64xf32, #tpu.memory_space<vmem>>, vector<1x64x64xf32>
    %120 = vector.shape_cast %119 : vector<1x64x64xf32> to vector<64x64xf32>
    %121 = arith.mulf %118, %120 : vector<64x64xf32>
    %122 = arith.addf %117, %121 : vector<64x64xf32>
    %c20_i32 = arith.constant 20 : i32
    %123 = tpu.dynamic_rotate %116 by %c20_i32 dim 0 : vector<64x64xf32>, i32 -> vector<64x64xf32>
    %c1 = arith.constant 1 : index
    %c0_49 = arith.constant 0 : index
    %c0_50 = arith.constant 0 : index
    %124 = vector.load %arg11[%c1, %c0_49, %c0_50] : memref<27x64x64xf32, #tpu.memory_space<vmem>>, vector<1x64x64xf32>
    %125 = vector.shape_cast %124 : vector<1x64x64xf32> to vector<64x64xf32>
    %126 = arith.mulf %123, %125 : vector<64x64xf32>
    %127 = arith.addf %122, %126 : vector<64x64xf32>
    %c19_i32 = arith.constant 19 : i32
    %128 = tpu.dynamic_rotate %116 by %c19_i32 dim 0 : vector<64x64xf32>, i32 -> vector<64x64xf32>
    %c2 = arith.constant 2 : index
    %c0_51 = arith.constant 0 : index
    %c0_52 = arith.constant 0 : index
    %129 = vector.load %arg11[%c2, %c0_51, %c0_52] : memref<27x64x64xf32, #tpu.memory_space<vmem>>, vector<1x64x64xf32>
    %130 = vector.shape_cast %129 : vector<1x64x64xf32> to vector<64x64xf32>
    %131 = arith.mulf %128, %130 : vector<64x64xf32>
    %132 = arith.addf %127, %131 : vector<64x64xf32>
    %c17_i32 = arith.constant 17 : i32
    %133 = tpu.dynamic_rotate %116 by %c17_i32 dim 0 : vector<64x64xf32>, i32 -> vector<64x64xf32>
    %c3 = arith.constant 3 : index
    %c0_53 = arith.constant 0 : index
    %c0_54 = arith.constant 0 : index
    %134 = vector.load %arg11[%c3, %c0_53, %c0_54] : memref<27x64x64xf32, #tpu.memory_space<vmem>>, vector<1x64x64xf32>
    %135 = vector.shape_cast %134 : vector<1x64x64xf32> to vector<64x64xf32>
    %136 = arith.mulf %133, %135 : vector<64x64xf32>
    %137 = arith.addf %132, %136 : vector<64x64xf32>
    %c16_i32 = arith.constant 16 : i32
    %138 = tpu.dynamic_rotate %116 by %c16_i32 dim 0 : vector<64x64xf32>, i32 -> vector<64x64xf32>
    %c4 = arith.constant 4 : index
    %c0_55 = arith.constant 0 : index
    %c0_56 = arith.constant 0 : index
    %139 = vector.load %arg11[%c4, %c0_55, %c0_56] : memref<27x64x64xf32, #tpu.memory_space<vmem>>, vector<1x64x64xf32>
    %140 = vector.shape_cast %139 : vector<1x64x64xf32> to vector<64x64xf32>
    %141 = arith.mulf %138, %140 : vector<64x64xf32>
    %142 = arith.addf %137, %141 : vector<64x64xf32>
    %c15_i32 = arith.constant 15 : i32
    %143 = tpu.dynamic_rotate %116 by %c15_i32 dim 0 : vector<64x64xf32>, i32 -> vector<64x64xf32>
    %c5 = arith.constant 5 : index
    %c0_57 = arith.constant 0 : index
    %c0_58 = arith.constant 0 : index
    %144 = vector.load %arg11[%c5, %c0_57, %c0_58] : memref<27x64x64xf32, #tpu.memory_space<vmem>>, vector<1x64x64xf32>
    %145 = vector.shape_cast %144 : vector<1x64x64xf32> to vector<64x64xf32>
    %146 = arith.mulf %143, %145 : vector<64x64xf32>
    %147 = arith.addf %142, %146 : vector<64x64xf32>
    %c13_i32 = arith.constant 13 : i32
    %148 = tpu.dynamic_rotate %116 by %c13_i32 dim 0 : vector<64x64xf32>, i32 -> vector<64x64xf32>
    %c6 = arith.constant 6 : index
    %c0_59 = arith.constant 0 : index
    %c0_60 = arith.constant 0 : index
    %149 = vector.load %arg11[%c6, %c0_59, %c0_60] : memref<27x64x64xf32, #tpu.memory_space<vmem>>, vector<1x64x64xf32>
    %150 = vector.shape_cast %149 : vector<1x64x64xf32> to vector<64x64xf32>
    %151 = arith.mulf %148, %150 : vector<64x64xf32>
    %152 = arith.addf %147, %151 : vector<64x64xf32>
    %c12_i32 = arith.constant 12 : i32
    %153 = tpu.dynamic_rotate %116 by %c12_i32 dim 0 : vector<64x64xf32>, i32 -> vector<64x64xf32>
    %c7 = arith.constant 7 : index
    %c0_61 = arith.constant 0 : index
    %c0_62 = arith.constant 0 : index
    %154 = vector.load %arg11[%c7, %c0_61, %c0_62] : memref<27x64x64xf32, #tpu.memory_space<vmem>>, vector<1x64x64xf32>
    %155 = vector.shape_cast %154 : vector<1x64x64xf32> to vector<64x64xf32>
    %156 = arith.mulf %153, %155 : vector<64x64xf32>
    %157 = arith.addf %152, %156 : vector<64x64xf32>
    %c11_i32 = arith.constant 11 : i32
    %158 = tpu.dynamic_rotate %116 by %c11_i32 dim 0 : vector<64x64xf32>, i32 -> vector<64x64xf32>
    %c8 = arith.constant 8 : index
    %c0_63 = arith.constant 0 : index
    %c0_64 = arith.constant 0 : index
    %159 = vector.load %arg11[%c8, %c0_63, %c0_64] : memref<27x64x64xf32, #tpu.memory_space<vmem>>, vector<1x64x64xf32>
    %160 = vector.shape_cast %159 : vector<1x64x64xf32> to vector<64x64xf32>
    %161 = arith.mulf %158, %160 : vector<64x64xf32>
    %162 = arith.addf %157, %161 : vector<64x64xf32>
    %c5_i32 = arith.constant 5 : i32
    %163 = tpu.dynamic_rotate %116 by %c5_i32 dim 0 : vector<64x64xf32>, i32 -> vector<64x64xf32>
    %c9 = arith.constant 9 : index
    %c0_65 = arith.constant 0 : index
    %c0_66 = arith.constant 0 : index
    %164 = vector.load %arg11[%c9, %c0_65, %c0_66] : memref<27x64x64xf32, #tpu.memory_space<vmem>>, vector<1x64x64xf32>
    %165 = vector.shape_cast %164 : vector<1x64x64xf32> to vector<64x64xf32>
    %166 = arith.mulf %163, %165 : vector<64x64xf32>
    %167 = arith.addf %162, %166 : vector<64x64xf32>
    %c4_i32 = arith.constant 4 : i32
    %168 = tpu.dynamic_rotate %116 by %c4_i32 dim 0 : vector<64x64xf32>, i32 -> vector<64x64xf32>
    %c10 = arith.constant 10 : index
    %c0_67 = arith.constant 0 : index
    %c0_68 = arith.constant 0 : index
    %169 = vector.load %arg11[%c10, %c0_67, %c0_68] : memref<27x64x64xf32, #tpu.memory_space<vmem>>, vector<1x64x64xf32>
    %170 = vector.shape_cast %169 : vector<1x64x64xf32> to vector<64x64xf32>
    %171 = arith.mulf %168, %170 : vector<64x64xf32>
    %172 = arith.addf %167, %171 : vector<64x64xf32>
    %c3_i32 = arith.constant 3 : i32
    %173 = tpu.dynamic_rotate %116 by %c3_i32 dim 0 : vector<64x64xf32>, i32 -> vector<64x64xf32>
    %c11 = arith.constant 11 : index
    %c0_69 = arith.constant 0 : index
    %c0_70 = arith.constant 0 : index
    %174 = vector.load %arg11[%c11, %c0_69, %c0_70] : memref<27x64x64xf32, #tpu.memory_space<vmem>>, vector<1x64x64xf32>
    %175 = vector.shape_cast %174 : vector<1x64x64xf32> to vector<64x64xf32>
    %176 = arith.mulf %173, %175 : vector<64x64xf32>
    %177 = arith.addf %172, %176 : vector<64x64xf32>
    %c1_i32 = arith.constant 1 : i32
    %178 = tpu.dynamic_rotate %116 by %c1_i32 dim 0 : vector<64x64xf32>, i32 -> vector<64x64xf32>
    %c12 = arith.constant 12 : index
    %c0_71 = arith.constant 0 : index
    %c0_72 = arith.constant 0 : index
    %179 = vector.load %arg11[%c12, %c0_71, %c0_72] : memref<27x64x64xf32, #tpu.memory_space<vmem>>, vector<1x64x64xf32>
    %180 = vector.shape_cast %179 : vector<1x64x64xf32> to vector<64x64xf32>
    %181 = arith.mulf %178, %180 : vector<64x64xf32>
    %182 = arith.addf %177, %181 : vector<64x64xf32>
    %c13 = arith.constant 13 : index
    %c0_73 = arith.constant 0 : index
    %c0_74 = arith.constant 0 : index
    %183 = vector.load %arg11[%c13, %c0_73, %c0_74] : memref<27x64x64xf32, #tpu.memory_space<vmem>>, vector<1x64x64xf32>
    %184 = vector.shape_cast %183 : vector<1x64x64xf32> to vector<64x64xf32>
    %185 = arith.mulf %116, %184 : vector<64x64xf32>
    %186 = arith.addf %182, %185 : vector<64x64xf32>
    %c63_i32 = arith.constant 63 : i32
    %187 = tpu.dynamic_rotate %116 by %c63_i32 dim 0 : vector<64x64xf32>, i32 -> vector<64x64xf32>
    %c14 = arith.constant 14 : index
    %c0_75 = arith.constant 0 : index
    %c0_76 = arith.constant 0 : index
    %188 = vector.load %arg11[%c14, %c0_75, %c0_76] : memref<27x64x64xf32, #tpu.memory_space<vmem>>, vector<1x64x64xf32>
    %189 = vector.shape_cast %188 : vector<1x64x64xf32> to vector<64x64xf32>
    %190 = arith.mulf %187, %189 : vector<64x64xf32>
    %191 = arith.addf %186, %190 : vector<64x64xf32>
    %c61_i32 = arith.constant 61 : i32
    %192 = tpu.dynamic_rotate %116 by %c61_i32 dim 0 : vector<64x64xf32>, i32 -> vector<64x64xf32>
    %c15 = arith.constant 15 : index
    %c0_77 = arith.constant 0 : index
    %c0_78 = arith.constant 0 : index
    %193 = vector.load %arg11[%c15, %c0_77, %c0_78] : memref<27x64x64xf32, #tpu.memory_space<vmem>>, vector<1x64x64xf32>
    %194 = vector.shape_cast %193 : vector<1x64x64xf32> to vector<64x64xf32>
    %195 = arith.mulf %192, %194 : vector<64x64xf32>
    %196 = arith.addf %191, %195 : vector<64x64xf32>
    %c60_i32 = arith.constant 60 : i32
    %197 = tpu.dynamic_rotate %116 by %c60_i32 dim 0 : vector<64x64xf32>, i32 -> vector<64x64xf32>
    %c16 = arith.constant 16 : index
    %c0_79 = arith.constant 0 : index
    %c0_80 = arith.constant 0 : index
    %198 = vector.load %arg11[%c16, %c0_79, %c0_80] : memref<27x64x64xf32, #tpu.memory_space<vmem>>, vector<1x64x64xf32>
    %199 = vector.shape_cast %198 : vector<1x64x64xf32> to vector<64x64xf32>
    %200 = arith.mulf %197, %199 : vector<64x64xf32>
    %201 = arith.addf %196, %200 : vector<64x64xf32>
    %c59_i32 = arith.constant 59 : i32
    %202 = tpu.dynamic_rotate %116 by %c59_i32 dim 0 : vector<64x64xf32>, i32 -> vector<64x64xf32>
    %c17 = arith.constant 17 : index
    %c0_81 = arith.constant 0 : index
    %c0_82 = arith.constant 0 : index
    %203 = vector.load %arg11[%c17, %c0_81, %c0_82] : memref<27x64x64xf32, #tpu.memory_space<vmem>>, vector<1x64x64xf32>
    %204 = vector.shape_cast %203 : vector<1x64x64xf32> to vector<64x64xf32>
    %205 = arith.mulf %202, %204 : vector<64x64xf32>
    %206 = arith.addf %201, %205 : vector<64x64xf32>
    %c53_i32 = arith.constant 53 : i32
    %207 = tpu.dynamic_rotate %116 by %c53_i32 dim 0 : vector<64x64xf32>, i32 -> vector<64x64xf32>
    %c18 = arith.constant 18 : index
    %c0_83 = arith.constant 0 : index
    %c0_84 = arith.constant 0 : index
    %208 = vector.load %arg11[%c18, %c0_83, %c0_84] : memref<27x64x64xf32, #tpu.memory_space<vmem>>, vector<1x64x64xf32>
    %209 = vector.shape_cast %208 : vector<1x64x64xf32> to vector<64x64xf32>
    %210 = arith.mulf %207, %209 : vector<64x64xf32>
    %211 = arith.addf %206, %210 : vector<64x64xf32>
    %c52_i32 = arith.constant 52 : i32
    %212 = tpu.dynamic_rotate %116 by %c52_i32 dim 0 : vector<64x64xf32>, i32 -> vector<64x64xf32>
    %c19 = arith.constant 19 : index
    %c0_85 = arith.constant 0 : index
    %c0_86 = arith.constant 0 : index
    %213 = vector.load %arg11[%c19, %c0_85, %c0_86] : memref<27x64x64xf32, #tpu.memory_space<vmem>>, vector<1x64x64xf32>
    %214 = vector.shape_cast %213 : vector<1x64x64xf32> to vector<64x64xf32>
    %215 = arith.mulf %212, %214 : vector<64x64xf32>
    %216 = arith.addf %211, %215 : vector<64x64xf32>
    %c51_i32 = arith.constant 51 : i32
    %217 = tpu.dynamic_rotate %116 by %c51_i32 dim 0 : vector<64x64xf32>, i32 -> vector<64x64xf32>
    %c20 = arith.constant 20 : index
    %c0_87 = arith.constant 0 : index
    %c0_88 = arith.constant 0 : index
    %218 = vector.load %arg11[%c20, %c0_87, %c0_88] : memref<27x64x64xf32, #tpu.memory_space<vmem>>, vector<1x64x64xf32>
    %219 = vector.shape_cast %218 : vector<1x64x64xf32> to vector<64x64xf32>
    %220 = arith.mulf %217, %219 : vector<64x64xf32>
    %221 = arith.addf %216, %220 : vector<64x64xf32>
    %c49_i32 = arith.constant 49 : i32
    %222 = tpu.dynamic_rotate %116 by %c49_i32 dim 0 : vector<64x64xf32>, i32 -> vector<64x64xf32>
    %c21 = arith.constant 21 : index
    %c0_89 = arith.constant 0 : index
    %c0_90 = arith.constant 0 : index
    %223 = vector.load %arg11[%c21, %c0_89, %c0_90] : memref<27x64x64xf32, #tpu.memory_space<vmem>>, vector<1x64x64xf32>
    %224 = vector.shape_cast %223 : vector<1x64x64xf32> to vector<64x64xf32>
    %225 = arith.mulf %222, %224 : vector<64x64xf32>
    %226 = arith.addf %221, %225 : vector<64x64xf32>
    %c48_i32 = arith.constant 48 : i32
    %227 = tpu.dynamic_rotate %116 by %c48_i32 dim 0 : vector<64x64xf32>, i32 -> vector<64x64xf32>
    %c22 = arith.constant 22 : index
    %c0_91 = arith.constant 0 : index
    %c0_92 = arith.constant 0 : index
    %228 = vector.load %arg11[%c22, %c0_91, %c0_92] : memref<27x64x64xf32, #tpu.memory_space<vmem>>, vector<1x64x64xf32>
    %229 = vector.shape_cast %228 : vector<1x64x64xf32> to vector<64x64xf32>
    %230 = arith.mulf %227, %229 : vector<64x64xf32>
    %231 = arith.addf %226, %230 : vector<64x64xf32>
    %c47_i32 = arith.constant 47 : i32
    %232 = tpu.dynamic_rotate %116 by %c47_i32 dim 0 : vector<64x64xf32>, i32 -> vector<64x64xf32>
    %c23 = arith.constant 23 : index
    %c0_93 = arith.constant 0 : index
    %c0_94 = arith.constant 0 : index
    %233 = vector.load %arg11[%c23, %c0_93, %c0_94] : memref<27x64x64xf32, #tpu.memory_space<vmem>>, vector<1x64x64xf32>
    %234 = vector.shape_cast %233 : vector<1x64x64xf32> to vector<64x64xf32>
    %235 = arith.mulf %232, %234 : vector<64x64xf32>
    %236 = arith.addf %231, %235 : vector<64x64xf32>
    %c45_i32 = arith.constant 45 : i32
    %237 = tpu.dynamic_rotate %116 by %c45_i32 dim 0 : vector<64x64xf32>, i32 -> vector<64x64xf32>
    %c24 = arith.constant 24 : index
    %c0_95 = arith.constant 0 : index
    %c0_96 = arith.constant 0 : index
    %238 = vector.load %arg11[%c24, %c0_95, %c0_96] : memref<27x64x64xf32, #tpu.memory_space<vmem>>, vector<1x64x64xf32>
    %239 = vector.shape_cast %238 : vector<1x64x64xf32> to vector<64x64xf32>
    %240 = arith.mulf %237, %239 : vector<64x64xf32>
    %241 = arith.addf %236, %240 : vector<64x64xf32>
    %c44_i32 = arith.constant 44 : i32
    %242 = tpu.dynamic_rotate %116 by %c44_i32 dim 0 : vector<64x64xf32>, i32 -> vector<64x64xf32>
    %c25 = arith.constant 25 : index
    %c0_97 = arith.constant 0 : index
    %c0_98 = arith.constant 0 : index
    %243 = vector.load %arg11[%c25, %c0_97, %c0_98] : memref<27x64x64xf32, #tpu.memory_space<vmem>>, vector<1x64x64xf32>
    %244 = vector.shape_cast %243 : vector<1x64x64xf32> to vector<64x64xf32>
    %245 = arith.mulf %242, %244 : vector<64x64xf32>
    %246 = arith.addf %241, %245 : vector<64x64xf32>
    %c43_i32 = arith.constant 43 : i32
    %247 = tpu.dynamic_rotate %116 by %c43_i32 dim 0 : vector<64x64xf32>, i32 -> vector<64x64xf32>
    %c26 = arith.constant 26 : index
    %c0_99 = arith.constant 0 : index
    %c0_100 = arith.constant 0 : index
    %248 = vector.load %arg11[%c26, %c0_99, %c0_100] : memref<27x64x64xf32, #tpu.memory_space<vmem>>, vector<1x64x64xf32>
    %249 = vector.shape_cast %248 : vector<1x64x64xf32> to vector<64x64xf32>
    %250 = arith.mulf %247, %249 : vector<64x64xf32>
    %251 = arith.addf %246, %250 : vector<64x64xf32>
    %cst_101 = arith.constant 5.000000e-01 : f32
    %252 = vector.broadcast %cst_101 : f32 to vector<64x64xf32>
    %253 = arith.mulf %252, %251 : vector<64x64xf32>
    %cst_102 = arith.constant 4.471500e-02 : f32
    %254 = vector.broadcast %cst_102 : f32 to vector<64x64xf32>
    %255 = arith.mulf %254, %251 : vector<64x64xf32>
    %256 = arith.mulf %255, %251 : vector<64x64xf32>
    %257 = arith.mulf %256, %251 : vector<64x64xf32>
    %258 = arith.addf %251, %257 : vector<64x64xf32>
    %cst_103 = arith.constant 0.797884583 : f32
    %259 = vector.broadcast %cst_103 : f32 to vector<64x64xf32>
    %260 = arith.mulf %259, %258 : vector<64x64xf32>
    %261 = math.tanh %260 : vector<64x64xf32>
    %cst_104 = arith.constant 1.000000e+00 : f32
    %262 = vector.broadcast %cst_104 : f32 to vector<64x64xf32>
    %263 = arith.addf %262, %261 : vector<64x64xf32>
    %264 = arith.mulf %253, %263 : vector<64x64xf32>
    %265 = arith.truncf %264 : vector<64x64xf32> to vector<64x64xbf16>
    %c0_105 = arith.constant 0 : index
    %c0_106 = arith.constant 0 : index
    %266 = vector.load %arg12[%c0_105, %c0_106] : memref<64x32xbf16, #tpu.memory_space<vmem>>, vector<64x32xbf16>
    %cst_107 = arith.constant dense<0.000000e+00> : vector<64x32xf32>
    %267 = tpu.matmul %265, %266, %cst_107 {dimension_numbers = #tpu.dot_dimension_numbers<[1], [0], [0], [1], [0, 0, 1, 1], [], []>} : vector<64x64xbf16>, vector<64x32xbf16>, vector<64x32xf32> -> vector<64x32xf32>
    %c0_108 = arith.constant 0 : index
    %c0_109 = arith.constant 0 : index
    %268 = vector.load %arg13[%c0_108, %c0_109] : memref<1x32xf32, #tpu.memory_space<vmem>>, vector<1x32xf32>
    %269 = vector.broadcast %268 : vector<1x32xf32> to vector<64x32xf32>
    %270 = arith.addf %267, %269 : vector<64x32xf32>
    %271 = arith.addf %75, %270 : vector<64x32xf32>
    %c0_110 = arith.constant 0 : index
    %c0_111 = arith.constant 0 : index
    %272 = vector.load %arg14[%c0_110, %c0_111] : memref<64x32xf32, #tpu.memory_space<vmem>>, vector<64x32xf32>
    tpu.vector_store %arg14[%c0_110, %c0_111], %271 {strides = array<i32>} : memref<64x32xf32, #tpu.memory_space<vmem>>, vector<64x32xf32>,
    return
  }
  func.func @transform_0(%arg0: i32) -> (i32, i32) {
    %c0_i32 = arith.constant 0 : i32
    %c0_i32_0 = arith.constant 0 : i32
    return %arg0, %c0_i32 : i32, i32
  }
  func.func @transform_1(%arg0: i32) -> (i32, i32) {
    %c0_i32 = arith.constant 0 : i32
    %c0_i32_0 = arith.constant 0 : i32
    %c0_i32_1 = arith.constant 0 : i32
    return %c0_i32, %c0_i32_0 : i32, i32
  }
  func.func @transform_2(%arg0: i32) -> (i32, i32) {
    %c0_i32 = arith.constant 0 : i32
    %c0_i32_0 = arith.constant 0 : i32
    %c0_i32_1 = arith.constant 0 : i32
    return %c0_i32, %c0_i32_0 : i32, i32
  }
  func.func @transform_3(%arg0: i32) -> (i32, i32) {
    %c0_i32 = arith.constant 0 : i32
    %c0_i32_0 = arith.constant 0 : i32
    %c0_i32_1 = arith.constant 0 : i32
    return %c0_i32, %c0_i32_0 : i32, i32
  }
  func.func @transform_4(%arg0: i32) -> (i32, i32) {
    %c0_i32 = arith.constant 0 : i32
    %c0_i32_0 = arith.constant 0 : i32
    %c0_i32_1 = arith.constant 0 : i32
    return %c0_i32, %c0_i32_0 : i32, i32
  }
  func.func @transform_5(%arg0: i32) -> (i32, i32) {
    %c0_i32 = arith.constant 0 : i32
    %c0_i32_0 = arith.constant 0 : i32
    %c0_i32_1 = arith.constant 0 : i32
    return %c0_i32, %c0_i32_0 : i32, i32
  }
  func.func @transform_6(%arg0: i32) -> (i32, i32) {
    %c0_i32 = arith.constant 0 : i32
    %c0_i32_0 = arith.constant 0 : i32
    %c0_i32_1 = arith.constant 0 : i32
    return %c0_i32, %c0_i32_0 : i32, i32
  }
  func.func @transform_7(%arg0: i32) -> (i32, i32) {
    %c0_i32 = arith.constant 0 : i32
    %c0_i32_0 = arith.constant 0 : i32
    %c0_i32_1 = arith.constant 0 : i32
    return %c0_i32, %c0_i32_0 : i32, i32
  }
  func.func @transform_8(%arg0: i32) -> (i32, i32) {
    %c0_i32 = arith.constant 0 : i32
    %c0_i32_0 = arith.constant 0 : i32
    %c0_i32_1 = arith.constant 0 : i32
    return %c0_i32, %c0_i32_0 : i32, i32
  }
  func.func @transform_9(%arg0: i32) -> (i32, i32) {
    %c0_i32 = arith.constant 0 : i32
    %c0_i32_0 = arith.constant 0 : i32
    %c0_i32_1 = arith.constant 0 : i32
    return %c0_i32, %c0_i32_0 : i32, i32
  }
  func.func @transform_10(%arg0: i32) -> (i32, i32, i32) {
    %c0_i32 = arith.constant 0 : i32
    %c0_i32_0 = arith.constant 0 : i32
    %c0_i32_1 = arith.constant 0 : i32
    %c0_i32_2 = arith.constant 0 : i32
    return %c0_i32, %c0_i32_0, %c0_i32_1 : i32, i32, i32
  }
  func.func @transform_11(%arg0: i32) -> (i32, i32) {
    %c0_i32 = arith.constant 0 : i32
    %c0_i32_0 = arith.constant 0 : i32
    %c0_i32_1 = arith.constant 0 : i32
    return %c0_i32, %c0_i32_0 : i32, i32
  }
  func.func @transform_12(%arg0: i32) -> (i32, i32) {
    %c0_i32 = arith.constant 0 : i32
    %c0_i32_0 = arith.constant 0 : i32
    %c0_i32_1 = arith.constant 0 : i32
    return %c0_i32, %c0_i32_0 : i32, i32
  }
  func.func @transform_13(%arg0: i32) -> (i32, i32) {
    %c0_i32 = arith.constant 0 : i32
    %c0_i32_0 = arith.constant 0 : i32
    return %arg0, %c0_i32 : i32, i32
  }
}

</mosaic_0001>

<llo_original>
// kernel: block_forward.1
$region0: #{block_forward.1}
  #allocation0 [shape = 'u32[]', space=smem, size = 0x4, offset = 0x4, fixed_abs, tag = 'smem constant byte address 0x4 - core index']
  #allocation1 [shape = 'u32[72,128]{1,0:T(1,128)}', space=vmem, size = 0x9000, scoped, tag = 'internal scratch']
  %s0 = inlined_call_operand.vmem [shape: f32[128,32], index: 0, kind: input, shape index: {}]
  %s1 = inlined_call_operand.vmem [shape: bf16[32,96], index: 1, kind: input, shape index: {}]
  %s2 = inlined_call_operand.vmem [shape: bf16[32,32], index: 2, kind: input, shape index: {}]
  %s3 = inlined_call_operand.vmem [shape: f32[1,32], index: 3, kind: input, shape index: {}]
  %s4 = inlined_call_operand.vmem [shape: f32[1,32], index: 4, kind: input, shape index: {}]
  %s5 = inlined_call_operand.vmem [shape: f32[1,32], index: 5, kind: input, shape index: {}]
  %s6 = inlined_call_operand.vmem [shape: f32[1,32], index: 6, kind: input, shape index: {}]
  %s7 = inlined_call_operand.vmem [shape: f32[1,32], index: 7, kind: input, shape index: {}]
  %s8 = inlined_call_operand.vmem [shape: bf16[32,64], index: 8, kind: input, shape index: {}]
  %s9 = inlined_call_operand.vmem [shape: f32[1,64], index: 9, kind: input, shape index: {}]
  %s10 = inlined_call_operand.vmem [shape: f32[27,64,64], index: 10, kind: input, shape index: {}]
  %s11 = inlined_call_operand.vmem [shape: bf16[64,32], index: 11, kind: input, shape index: {}]
  %s12 = inlined_call_operand.vmem [shape: f32[1,32], index: 12, kind: input, shape index: {}]
  %s13 = inlined_call_operand.vmem [shape: f32[128,32], index: 13, kind: output, shape index: {}]
  %s14 = sld [smem:[#allocation0]]
  $region85: #{block_forward.1} parent=0
    _
  %s16 = ssub.s32 1, %s14
  %s17 = scalar_select 0, %s16, %s14
  loop: start=0, step=1, limit=4
  $region2: #{block_forward.1} parent=0 // loop_pre_header
    _
  $region3: #{block_forward.1} parent=0 // loop_header
    %s19 = sphi 0, %s23
    %p20 = scmp.ge.s32.totalorder %s19, 4
    %s29 = sphi 0, %s31
    %s32 = sphi 0, %s29
    %s33 = sphi 0, %s32
    %s49 = sphi 0, %s33
    %s53 = sphi 0, %s53
    %s55 = sphi 0, %s53
    %s56 = sphi 0, %s55
    %s70 = sphi 0, %s56
    %s74 = sphi 0, %s74
    %s76 = sphi 0, %s74
    %s77 = sphi 0, %s76
    %s91 = sphi 0, %s77
    %s95 = sphi 0, %s95
    %s97 = sphi 0, %s95
    %s98 = sphi 0, %s97
    %s112 = sphi 0, %s98
    %s116 = sphi 0, %s116
    %s118 = sphi 0, %s116
    %s119 = sphi 0, %s118
    %s133 = sphi 0, %s119
    %s137 = sphi 0, %s137
    %s139 = sphi 0, %s137
    %s140 = sphi 0, %s139
    %s154 = sphi 0, %s140
    %s158 = sphi 0, %s158
    %s160 = sphi 0, %s158
    %s161 = sphi 0, %s160
    %s175 = sphi 0, %s161
    %s179 = sphi 0, %s179
    %s181 = sphi 0, %s179
    %s182 = sphi 0, %s181
    %s196 = sphi 0, %s182
    %s200 = sphi 0, %s200
    %s202 = sphi 0, %s200
    %s203 = sphi 0, %s202
    %s217 = sphi 0, %s203
    %s221 = sphi 0, %s221
    %s223 = sphi 0, %s221
    %s224 = sphi 0, %s223
    %s238 = sphi 0, %s224
    %s242 = sphi 0, %s242
    %s244 = sphi 0, %s242
    %s245 = sphi 0, %s244
    %s259 = sphi 0, %s245
    %s263 = sphi 0, %s263
    %s265 = sphi 0, %s263
    %s266 = sphi 0, %s265
    %s280 = sphi 0, %s266
    %s284 = sphi 0, %s284
    %s286 = sphi 0, %s284
    %s287 = sphi 0, %s286
    %s301 = sphi 0, %s287
    %s307 = sphi 0, %s309
    %s310 = sphi 0, %s307
    %s311 = sphi 0, %s310
    %s327 = sphi 0, %s311
  $region4: #{block_forward.1} parent=0 // loop_header_branch
    %22 = sbr.rel (%p20) target = $region8
  $region5: #{block_forward.1} parent=0 // loop_body
    %s24 = ssub.s32 %s19, 1
    %s25 = ssub.s32 %s19, 2
    %s26 = sadd.s32 %s19, 1
    %s27 = ssub.s32 %s19, %s26
    %p28 = scmp.eq.s32.totalorder %s27, 0
    %s30 = sadd.s32 %s29, 1
    %s31 = scalar_select %p28, %s29, %s30
    %p34 = pneg %p28
    %p35 = scmp.eq.s32.totalorder %s19, 1
    %p36 = por %p34, %p35
    %p37 = scmp.ne.s32.totalorder %s29, %s32
    %p38 = scmp.eq.s32.totalorder %s19, 0
    %p39 = por %p37, %p38
    %p40 = scmp.ne.s32.totalorder %s29, %s32
    %p41 = scmp.eq.s32.totalorder %s24, 1
    %p42 = por %p40, %p41
    %p43 = scmp.ne.s32.totalorder %s32, %s33
    %p44 = scmp.eq.s32.totalorder %s24, 0
    %p45 = por %p43, %p44
    %p46 = scmp.ne.s32.totalorder %s32, %s33
    %p47 = scmp.eq.s32.totalorder %s25, 1
    %p48 = por %p46, %p47
    %p50 = scmp.ne.s32.totalorder %s33, %s49
    %p51 = scmp.eq.s32.totalorder %s25, 0
    %p52 = por %p50, %p51
    %s54 = sadd.s32 %s53, 1
    %p57 = scmp.eq.s32.totalorder %s19, 1
    %p58 = scmp.ne.s32.totalorder %s53, %s55
    %p59 = scmp.eq.s32.totalorder %s19, 0
    %p60 = por %p58, %p59
    %p61 = scmp.ne.s32.totalorder %s53, %s55
    %p62 = scmp.eq.s32.totalorder %s24, 1
    %p63 = por %p61, %p62
    %p64 = scmp.ne.s32.totalorder %s55, %s56
    %p65 = scmp.eq.s32.totalorder %s24, 0
    %p66 = por %p64, %p65
    %p67 = scmp.ne.s32.totalorder %s55, %s56
    %p68 = scmp.eq.s32.totalorder %s25, 1
    %p69 = por %p67, %p68
    %p71 = scmp.ne.s32.totalorder %s56, %s70
    %p72 = scmp.eq.s32.totalorder %s25, 0
    %p73 = por %p71, %p72
    %s75 = sadd.s32 %s74, 1
    %p78 = scmp.eq.s32.totalorder %s19, 1
    %p79 = scmp.ne.s32.totalorder %s74, %s76
    %p80 = scmp.eq.s32.totalorder %s19, 0
    %p81 = por %p79, %p80
    %p82 = scmp.ne.s32.totalorder %s74, %s76
    %p83 = scmp.eq.s32.totalorder %s24, 1
    %p84 = por %p82, %p83
    %p85 = scmp.ne.s32.totalorder %s76, %s77
    %p86 = scmp.eq.s32.totalorder %s24, 0
    %p87 = por %p85, %p86
    %p88 = scmp.ne.s32.totalorder %s76, %s77
    %p89 = scmp.eq.s32.totalorder %s25, 1
    %p90 = por %p88, %p89
    %p92 = scmp.ne.s32.totalorder %s77, %s91
    %p93 = scmp.eq.s32.totalorder %s25, 0
    %p94 = por %p92, %p93
    %s96 = sadd.s32 %s95, 1
    %p99 = scmp.eq.s32.totalorder %s19, 1
    %p100 = scmp.ne.s32.totalorder %s95, %s97
    %p101 = scmp.eq.s32.totalorder %s19, 0
    %p102 = por %p100, %p101
    %p103 = scmp.ne.s32.totalorder %s95, %s97
    %p104 = scmp.eq.s32.totalorder %s24, 1
    %p105 = por %p103, %p104
    %p106 = scmp.ne.s32.totalorder %s97, %s98
    %p107 = scmp.eq.s32.totalorder %s24, 0
    %p108 = por %p106, %p107
    %p109 = scmp.ne.s32.totalorder %s97, %s98
    %p110 = scmp.eq.s32.totalorder %s25, 1
    %p111 = por %p109, %p110
    %p113 = scmp.ne.s32.totalorder %s98, %s112
    %p114 = scmp.eq.s32.totalorder %s25, 0
    %p115 = por %p113, %p114
    %s117 = sadd.s32 %s116, 1
    %p120 = scmp.eq.s32.totalorder %s19, 1
    %p121 = scmp.ne.s32.totalorder %s116, %s118
    %p122 = scmp.eq.s32.totalorder %s19, 0
    %p123 = por %p121, %p122
    %p124 = scmp.ne.s32.totalorder %s116, %s118
    %p125 = scmp.eq.s32.totalorder %s24, 1
    %p126 = por %p124, %p125
    %p127 = scmp.ne.s32.totalorder %s118, %s119
    %p128 = scmp.eq.s32.totalorder %s24, 0
    %p129 = por %p127, %p128
    %p130 = scmp.ne.s32.totalorder %s118, %s119
    %p131 = scmp.eq.s32.totalorder %s25, 1
    %p132 = por %p130, %p131
    %p134 = scmp.ne.s32.totalorder %s119, %s133
    %p135 = scmp.eq.s32.totalorder %s25, 0
    %p136 = por %p134, %p135
    %s138 = sadd.s32 %s137, 1
    %p141 = scmp.eq.s32.totalorder %s19, 1
    %p142 = scmp.ne.s32.totalorder %s137, %s139
    %p143 = scmp.eq.s32.totalorder %s19, 0
    %p144 = por %p142, %p143
    %p145 = scmp.ne.s32.totalorder %s137, %s139
    %p146 = scmp.eq.s32.totalorder %s24, 1
    %p147 = por %p145, %p146
    %p148 = scmp.ne.s32.totalorder %s139, %s140
    %p149 = scmp.eq.s32.totalorder %s24, 0
    %p150 = por %p148, %p149
    %p151 = scmp.ne.s32.totalorder %s139, %s140
    %p152 = scmp.eq.s32.totalorder %s25, 1
    %p153 = por %p151, %p152
    %p155 = scmp.ne.s32.totalorder %s140, %s154
    %p156 = scmp.eq.s32.totalorder %s25, 0
    %p157 = por %p155, %p156
    %s159 = sadd.s32 %s158, 1
    %p162 = scmp.eq.s32.totalorder %s19, 1
    %p163 = scmp.ne.s32.totalorder %s158, %s160
    %p164 = scmp.eq.s32.totalorder %s19, 0
    %p165 = por %p163, %p164
    %p166 = scmp.ne.s32.totalorder %s158, %s160
    %p167 = scmp.eq.s32.totalorder %s24, 1
    %p168 = por %p166, %p167
    %p169 = scmp.ne.s32.totalorder %s160, %s161
    %p170 = scmp.eq.s32.totalorder %s24, 0
    %p171 = por %p169, %p170
    %p172 = scmp.ne.s32.totalorder %s160, %s161
    %p173 = scmp.eq.s32.totalorder %s25, 1
    %p174 = por %p172, %p173
    %p176 = scmp.ne.s32.totalorder %s161, %s175
    %p177 = scmp.eq.s32.totalorder %s25, 0
    %p178 = por %p176, %p177
    %s180 = sadd.s32 %s179, 1
    %p183 = scmp.eq.s32.totalorder %s19, 1
    %p184 = scmp.ne.s32.totalorder %s179, %s181
    %p185 = scmp.eq.s32.totalorder %s19, 0
    %p186 = por %p184, %p185
    %p187 = scmp.ne.s32.totalorder %s179, %s181
    %p188 = scmp.eq.s32.totalorder %s24, 1
    %p189 = por %p187, %p188
    %p190 = scmp.ne.s32.totalorder %s181, %s182
    %p191 = scmp.eq.s32.totalorder %s24, 0
    %p192 = por %p190, %p191
    %p193 = scmp.ne.s32.totalorder %s181, %s182
    %p194 = scmp.eq.s32.totalorder %s25, 1
    %p195 = por %p193, %p194
    %p197 = scmp.ne.s32.totalorder %s182, %s196
    %p198 = scmp.eq.s32.totalorder %s25, 0
    %p199 = por %p197, %p198
    %s201 = sadd.s32 %s200, 1
    %p204 = scmp.eq.s32.totalorder %s19, 1
    %p205 = scmp.ne.s32.totalorder %s200, %s202
    %p206 = scmp.eq.s32.totalorder %s19, 0
    %p207 = por %p205, %p206
    %p208 = scmp.ne.s32.totalorder %s200, %s202
    %p209 = scmp.eq.s32.totalorder %s24, 1
    %p210 = por %p208, %p209
    %p211 = scmp.ne.s32.totalorder %s202, %s203
    %p212 = scmp.eq.s32.totalorder %s24, 0
    %p213 = por %p211, %p212
    %p214 = scmp.ne.s32.totalorder %s202, %s203
    %p215 = scmp.eq.s32.totalorder %s25, 1
    %p216 = por %p214, %p215
    %p218 = scmp.ne.s32.totalorder %s203, %s217
    %p219 = scmp.eq.s32.totalorder %s25, 0
    %p220 = por %p218, %p219
    %s222 = sadd.s32 %s221, 1
    %p225 = scmp.eq.s32.totalorder %s19, 1
    %p226 = scmp.ne.s32.totalorder %s221, %s223
    %p227 = scmp.eq.s32.totalorder %s19, 0
    %p228 = por %p226, %p227
    %p229 = scmp.ne.s32.totalorder %s221, %s223
    %p230 = scmp.eq.s32.totalorder %s24, 1
    %p231 = por %p229, %p230
    %p232 = scmp.ne.s32.totalorder %s223, %s224
    %p233 = scmp.eq.s32.totalorder %s24, 0
    %p234 = por %p232, %p233
    %p235 = scmp.ne.s32.totalorder %s223, %s224
    %p236 = scmp.eq.s32.totalorder %s25, 1
    %p237 = por %p235, %p236
    %p239 = scmp.ne.s32.totalorder %s224, %s238
    %p240 = scmp.eq.s32.totalorder %s25, 0
    %p241 = por %p239, %p240
    %s243 = sadd.s32 %s242, 1
    %p246 = scmp.eq.s32.totalorder %s19, 1
    %p247 = scmp.ne.s32.totalorder %s242, %s244
    %p248 = scmp.eq.s32.totalorder %s19, 0
    %p249 = por %p247, %p248
    %p250 = scmp.ne.s32.totalorder %s242, %s244
    %p251 = scmp.eq.s32.totalorder %s24, 1
    %p252 = por %p250, %p251
    %p253 = scmp.ne.s32.totalorder %s244, %s245
    %p254 = scmp.eq.s32.totalorder %s24, 0
    %p255 = por %p253, %p254
    %p256 = scmp.ne.s32.totalorder %s244, %s245
    %p257 = scmp.eq.s32.totalorder %s25, 1
    %p258 = por %p256, %p257
    %p260 = scmp.ne.s32.totalorder %s245, %s259
    %p261 = scmp.eq.s32.totalorder %s25, 0
    %p262 = por %p260, %p261
    %s264 = sadd.s32 %s263, 1
    %p267 = scmp.eq.s32.totalorder %s19, 1
    %p268 = scmp.ne.s32.totalorder %s263, %s265
    %p269 = scmp.eq.s32.totalorder %s19, 0
    %p270 = por %p268, %p269
    %p271 = scmp.ne.s32.totalorder %s263, %s265
    %p272 = scmp.eq.s32.totalorder %s24, 1
    %p273 = por %p271, %p272
    %p274 = scmp.ne.s32.totalorder %s265, %s266
    %p275 = scmp.eq.s32.totalorder %s24, 0
    %p276 = por %p274, %p275
    %p277 = scmp.ne.s32.totalorder %s265, %s266
    %p278 = scmp.eq.s32.totalorder %s25, 1
    %p279 = por %p277, %p278
    %p281 = scmp.ne.s32.totalorder %s266, %s280
    %p282 = scmp.eq.s32.totalorder %s25, 0
    %p283 = por %p281, %p282
    %s285 = sadd.s32 %s284, 1
    %p288 = scmp.eq.s32.totalorder %s19, 1
    %p289 = scmp.ne.s32.totalorder %s284, %s286
    %p290 = scmp.eq.s32.totalorder %s19, 0
    %p291 = por %p289, %p290
    %p292 = scmp.ne.s32.totalorder %s284, %s286
    %p293 = scmp.eq.s32.totalorder %s24, 1
    %p294 = por %p292, %p293
    %p295 = scmp.ne.s32.totalorder %s286, %s287
    %p296 = scmp.eq.s32.totalorder %s24, 0
    %p297 = por %p295, %p296
    %p298 = scmp.ne.s32.totalorder %s286, %s287
    %p299 = scmp.eq.s32.totalorder %s25, 1
    %p300 = por %p298, %p299
    %p302 = scmp.ne.s32.totalorder %s287, %s301
    %p303 = scmp.eq.s32.totalorder %s25, 0
    %p304 = por %p302, %p303
    %s305 = ssub.s32 %s19, %s26
    %p306 = scmp.eq.s32.totalorder %s305, 0
    %s308 = sadd.s32 %s307, 1
    %s309 = scalar_select %p306, %s307, %s308
    %p312 = pneg %p306
    %p313 = scmp.eq.s32.totalorder %s19, 1
    %p314 = por %p312, %p313
    %p315 = scmp.ne.s32.totalorder %s307, %s310
    %p316 = scmp.eq.s32.totalorder %s19, 0
    %p317 = por %p315, %p316
    %p318 = scmp.ne.s32.totalorder %s307, %s310
    %p319 = scmp.eq.s32.totalorder %s24, 1
    %p320 = por %p318, %p319
    %p321 = scmp.ne.s32.totalorder %s310, %s311
    %p322 = scmp.eq.s32.totalorder %s24, 0
    %p323 = por %p321, %p322
    %p324 = scmp.ne.s32.totalorder %s310, %s311
    %p325 = scmp.eq.s32.totalorder %s25, 1
    %p326 = por %p324, %p325
    %p328 = scmp.ne.s32.totalorder %s311, %s327
    %p329 = scmp.eq.s32.totalorder %s25, 0
    %p330 = por %p328, %p329
    %p331 = scmp.le.s32.totalorder 1, %s19
    %p332 = scmp.lt.s32.totalorder %s19, 3
    %p333 = pnand %p331, %p332
    %p334 = pneg %p333
    // Predicated region
    $region9: #{block_forward.1} parent=5 // pred_check
      _
    $region10: #{block_forward.1} parent=5 // pred_check_branch
      %336 = sbr.rel (%p333) target = $region12
    $region11: #{block_forward.1} parent=5 // pred_region
      %s337 = ssub.s32 %s19, 1
      // Predicated region
      $region13: #{block_forward.1} parent=11 // pred_check
        %p338 = pneg %p66
      $region14: #{block_forward.1} parent=11 // pred_check_branch
        %340 = sbr.rel (%p338) target = $region16
      $region15: #{block_forward.1} parent=11 // pred_region
        _
      $region16: #{block_forward.1} parent=11 // pred_fallthru
        _
      // Predicated region
      $region17: #{block_forward.1} parent=11 // pred_check
        %p341 = pneg %p87
      $region18: #{block_forward.1} parent=11 // pred_check_branch
        %343 = sbr.rel (%p341) target = $region20
      $region19: #{block_forward.1} parent=11 // pred_region
        _
      $region20: #{block_forward.1} parent=11 // pred_fallthru
        _
      // Predicated region
      $region21: #{block_forward.1} parent=11 // pred_check
        %p344 = pneg %p108
      $region22: #{block_forward.1} parent=11 // pred_check_branch
        %346 = sbr.rel (%p344) target = $region24
      $region23: #{block_forward.1} parent=11 // pred_region
        _
      $region24: #{block_forward.1} parent=11 // pred_fallthru
        _
      // Predicated region
      $region25: #{block_forward.1} parent=11 // pred_check
        %p347 = pneg %p129
      $region26: #{block_forward.1} parent=11 // pred_check_branch
        %349 = sbr.rel (%p347) target = $region28
      $region27: #{block_forward.1} parent=11 // pred_region
        _
      $region28: #{block_forward.1} parent=11 // pred_fallthru
        _
      // Predicated region
      $region29: #{block_forward.1} parent=11 // pred_check
        %p350 = pneg %p150
      $region30: #{block_forward.1} parent=11 // pred_check_branch
        %352 = sbr.rel (%p350) target = $region32
      $region31: #{block_forward.1} parent=11 // pred_region
        _
      $region32: #{block_forward.1} parent=11 // pred_fallthru
        _
      // Predicated region
      $region33: #{block_forward.1} parent=11 // pred_check
        %p353 = pneg %p171
      $region34: #{block_forward.1} parent=11 // pred_check_branch
        %355 = sbr.rel (%p353) target = $region36
      $region35: #{block_forward.1} parent=11 // pred_region
        _
      $region36: #{block_forward.1} parent=11 // pred_fallthru
        _
      // Predicated region
      $region37: #{block_forward.1} parent=11 // pred_check
        %p356 = pneg %p192
      $region38: #{block_forward.1} parent=11 // pred_check_branch
        %358 = sbr.rel (%p356) target = $region40
      $region39: #{block_forward.1} parent=11 // pred_region
        _
      $region40: #{block_forward.1} parent=11 // pred_fallthru
        _
      // Predicated region
      $region41: #{block_forward.1} parent=11 // pred_check
        %p359 = pneg %p213
      $region42: #{block_forward.1} parent=11 // pred_check_branch
        %361 = sbr.rel (%p359) target = $region44
      $region43: #{block_forward.1} parent=11 // pred_region
        _
      $region44: #{block_forward.1} parent=11 // pred_fallthru
        _
      // Predicated region
      $region45: #{block_forward.1} parent=11 // pred_check
        %p362 = pneg %p234
      $region46: #{block_forward.1} parent=11 // pred_check_branch
        %364 = sbr.rel (%p362) target = $region48
      $region47: #{block_forward.1} parent=11 // pred_region
        _
      $region48: #{block_forward.1} parent=11 // pred_fallthru
        _
      // Predicated region
      $region49: #{block_forward.1} parent=11 // pred_check
        %p365 = pneg %p255
      $region50: #{block_forward.1} parent=11 // pred_check_branch
        %367 = sbr.rel (%p365) target = $region52
      $region51: #{block_forward.1} parent=11 // pred_region
        _
      $region52: #{block_forward.1} parent=11 // pred_fallthru
        _
      // Predicated region
      $region53: #{block_forward.1} parent=11 // pred_check
        %p368 = pneg %p276
      $region54: #{block_forward.1} parent=11 // pred_check_branch
        %370 = sbr.rel (%p368) target = $region56
      $region55: #{block_forward.1} parent=11 // pred_region
        _
      $region56: #{block_forward.1} parent=11 // pred_fallthru
        _
      // Predicated region
      $region57: #{block_forward.1} parent=11 // pred_check
        %p371 = pneg %p297
      $region58: #{block_forward.1} parent=11 // pred_check_branch
        %373 = sbr.rel (%p371) target = $region60
      $region59: #{block_forward.1} parent=11 // pred_region
        _
      $region60: #{block_forward.1} parent=11 // pred_fallthru
        _
    $region12: #{block_forward.1} parent=5 // pred_fallthru
      _
    %p374 = scmp.lt.s32.totalorder %s19, 2
    // Predicated region
    $region61: #{block_forward.1} parent=5 // pred_check
      %p375 = pneg %p374
    $region62: #{block_forward.1} parent=5 // pred_check_branch
      %377 = sbr.rel (%p375) target = $region64
    $region63: #{block_forward.1} parent=5 // pred_region
      // Predicated region
      $region65: #{block_forward.1} parent=63 // pred_check
        %p378 = pneg %p39
      $region66: #{block_forward.1} parent=63 // pred_check_branch
        %380 = sbr.rel (%p378) target = $region68
      $region67: #{block_forward.1} parent=63 // pred_region
        %s381 = smul.u32 8, %s19
        %p382 = scmp.lt.s32.totalorder %s381, 15
        %s383 = scalar_select %p382, %s381, 15
        %s384 = smul.addr %s383, 8
        %s385 = scalar_lea.vmem %s0, %s384
        %s386 = smul.u32 8, %s19
      $region68: #{block_forward.1} parent=63 // pred_fallthru
        _
    $region64: #{block_forward.1} parent=5 // pred_fallthru
      _
    %p387 = scmp.le.s32.totalorder 1, %s19
    %p388 = scmp.lt.s32.totalorder %s19, 3
    %p389 = pnand %p387, %p388
    %p390 = pneg %p389
    // Predicated region
    $region69: #{block_forward.1} parent=5 // pred_check
      _
    $region70: #{block_forward.1} parent=5 // pred_check_branch
      %392 = sbr.rel (%p389) target = $region72
    $region71: #{block_forward.1} parent=5 // pred_region
      %s393 = ssub.s32 %s19, 1
      %s394 = smul.u32 8, %s24
      %p395 = scmp.lt.s32.totalorder %s394, 15
      %s396 = scalar_select %p395, %s394, 15
      %s397 = smul.addr %s396, 8
      %s398 = scalar_lea.vmem %s0, %s397
      %p399 = pneg %p45
      %p400 = pneg %p42
      %p401 = pneg %p66
      %p402 = pneg %p63
      %p403 = pneg %p87
      %p404 = pneg %p84
      %p405 = pneg %p108
      %p406 = pneg %p105
      %p407 = pneg %p129
      %p408 = pneg %p126
      %p409 = pneg %p150
      %p410 = pneg %p147
      %p411 = pneg %p171
      %p412 = pneg %p168
      %p413 = pneg %p192
      %p414 = pneg %p189
      %p415 = pneg %p213
      %p416 = pneg %p210
      %p417 = pneg %p234
      %p418 = pneg %p231
      %p419 = pneg %p255
      %p420 = pneg %p252
      %p421 = pneg %p276
      %p422 = pneg %p273
      %p423 = pneg %p297
      %p424 = pneg %p294
      %p425 = pneg %p323
      %p426 = pneg %p320
      %s427 = smul.u32 8, %s24
      %p428 = scmp.lt.s32.totalorder %s427, 15
      %s429 = scalar_select %p428, %s427, 15
      %s430 = smul.addr %s429, 8
      %s431 = scalar_lea.vmem %s13, %s430
      %s432 = smul.u32 8, %s24
      %p433 = scmp.lt.s32.totalorder %s432, 15
      %s434 = scalar_select %p433, %s432, 15
      %s435 = smul.addr %s434, 8
      %s436 = scalar_lea.vmem %s0, %s435
      %s437 = smul.u32 8, %s24
      %s438 = smul.u32 8, %s24
      %p439 = scmp.lt.s32.totalorder %s438, 15
      %s440 = scalar_select %p439, %s438, 15
      %s441 = smul.addr %s440, 8
      %s442 = scalar_lea.vmem %s13, %s441
      %s443 = smul.u32 8, %s24
      %v445 = vld [vmem:[%s436] sm:$0xff]
      %v446 = vld [vmem:[%s436 + $0x8] sm:$0xff]
      %v447 = vld [vmem:[%s436 + $0x10] sm:$0xff]
      %v448 = vld [vmem:[%s436 + $0x18] sm:$0xff]
      %v449 = vld [vmem:[%s436 + $0x20] sm:$0xff]
      %v450 = vld [vmem:[%s436 + $0x28] sm:$0xff]
      %v451 = vld [vmem:[%s436 + $0x30] sm:$0xff]
      %v452 = vld [vmem:[%s436 + $0x38] sm:$0xff]
      %vm453 = vcmask 261120
      %v454 = vsel %vm453, %v445, 0.0
      %455 = vadd.xlane.f32.xlu0 %v454
      %v456 = vpop.xlane.xlu0 %455
      %v457 = vsel %vm453, %v446, 0.0
      %458 = vadd.xlane.f32.xlu0 %v457
      %v459 = vpop.xlane.xlu0 %458
      %v460 = vsel %vm453, %v447, 0.0
      %461 = vadd.xlane.f32.xlu0 %v460
      %v462 = vpop.xlane.xlu0 %461
      %v463 = vsel %vm453, %v448, 0.0
      %464 = vadd.xlane.f32.xlu0 %v463
      %v465 = vpop.xlane.xlu0 %464
      %v466 = vsel %vm453, %v449, 0.0
      %467 = vadd.xlane.f32.xlu0 %v466
      %v468 = vpop.xlane.xlu0 %467
      %v469 = vsel %vm453, %v450, 0.0
      %470 = vadd.xlane.f32.xlu0 %v469
      %v471 = vpop.xlane.xlu0 %470
      %v472 = vsel %vm453, %v451, 0.0
      %473 = vadd.xlane.f32.xlu0 %v472
      %v474 = vpop.xlane.xlu0 %473
      %v475 = vsel %vm453, %v452, 0.0
      %476 = vadd.xlane.f32.xlu0 %v475
      %v477 = vpop.xlane.xlu0 %476
      %v478 = vrcp.pop 32.0
      %v479 = vmul.f32 32.0, %v478
      %v480 = vsub.f32 1.0, %v479
      %v481 = vmul.f32 %v478, %v480
      %v482 = vadd.f32 %v478, %v481
      %vm483 = vweird.f32 %v478
      %v484 = vsel %vm483, %v478, %v482
      %v485 = vmul.f32 %v456, %v484
      %v486 = vmul.f32 %v459, %v484
      %v487 = vmul.f32 %v462, %v484
      %v488 = vmul.f32 %v465, %v484
      %v489 = vmul.f32 %v468, %v484
      %v490 = vmul.f32 %v471, %v484
      %v491 = vmul.f32 %v474, %v484
      %v492 = vmul.f32 %v477, %v484
      %v493 = vsub.f32 %v445, %v485
      %v494 = vsub.f32 %v446, %v486
      %v495 = vsub.f32 %v447, %v487
      %v496 = vsub.f32 %v448, %v488
      %v497 = vsub.f32 %v449, %v489
      %v498 = vsub.f32 %v450, %v490
      %v499 = vsub.f32 %v451, %v491
      %v500 = vsub.f32 %v452, %v492
      %v501 = vmul.f32 %v493, %v493
      %v502 = vmul.f32 %v494, %v494
      %v503 = vmul.f32 %v495, %v495
      %v504 = vmul.f32 %v496, %v496
      %v505 = vmul.f32 %v497, %v497
      %v506 = vmul.f32 %v498, %v498
      %v507 = vmul.f32 %v499, %v499
      %v508 = vmul.f32 %v500, %v500
      %v509 = vsel %vm453, %v501, 0.0
      %510 = vadd.xlane.f32.xlu0 %v509
      %v511 = vpop.xlane.xlu0 %510
      %v512 = vsel %vm453, %v502, 0.0
      %513 = vadd.xlane.f32.xlu0 %v512
      %v514 = vpop.xlane.xlu0 %513
      %v515 = vsel %vm453, %v503, 0.0
      %516 = vadd.xlane.f32.xlu0 %v515
      %v517 = vpop.xlane.xlu0 %516
      %v518 = vsel %vm453, %v504, 0.0
      %519 = vadd.xlane.f32.xlu0 %v518
      %v520 = vpop.xlane.xlu0 %519
      %v521 = vsel %vm453, %v505, 0.0
      %522 = vadd.xlane.f32.xlu0 %v521
      %v523 = vpop.xlane.xlu0 %522
      %v524 = vsel %vm453, %v506, 0.0
      %525 = vadd.xlane.f32.xlu0 %v524
      %v526 = vpop.xlane.xlu0 %525
      %v527 = vsel %vm453, %v507, 0.0
      %528 = vadd.xlane.f32.xlu0 %v527
      %v529 = vpop.xlane.xlu0 %528
      %v530 = vsel %vm453, %v508, 0.0
      %531 = vadd.xlane.f32.xlu0 %v530
      %v532 = vpop.xlane.xlu0 %531
      %v533 = vmul.f32 %v511, %v484
      %v534 = vmul.f32 %v514, %v484
      %v535 = vmul.f32 %v517, %v484
      %v536 = vmul.f32 %v520, %v484
      %v537 = vmul.f32 %v523, %v484
      %v538 = vmul.f32 %v526, %v484
      %v539 = vmul.f32 %v529, %v484
      %v540 = vmul.f32 %v532, %v484
      %v541 = vadd.f32 %v533, 1e-05
      %v542 = vadd.f32 %v534, 1e-05
      %v543 = vadd.f32 %v535, 1e-05
      %v544 = vadd.f32 %v536, 1e-05
      %v545 = vadd.f32 %v537, 1e-05
      %v546 = vadd.f32 %v538, 1e-05
      %v547 = vadd.f32 %v539, 1e-05
      %v548 = vadd.f32 %v540, 1e-05
      %v549 = vrsqrt.pop %v541
      %v550 = vmul.f32 %v549, %v541
      %v551 = vmul.f32 %v550, %v549
      %v552 = vmul.f32 0.5, %v551
      %v553 = vsub.f32 1.5, %v552
      %v554 = vmul.f32 %v549, %v553
      %vm555 = vweird.f32 %v541
      %vm556 = vweird.f32 %v549
      %vm557 = vmor %vm555, %vm556
      %v558 = vsel %vm557, %v549, %v554
      %v559 = vrsqrt.pop %v542
      %v560 = vmul.f32 %v559, %v542
      %v561 = vmul.f32 %v560, %v559
      %v562 = vmul.f32 0.5, %v561
      %v563 = vsub.f32 1.5, %v562
      %v564 = vmul.f32 %v559, %v563
      %vm565 = vweird.f32 %v542
      %vm566 = vweird.f32 %v559
      %vm567 = vmor %vm565, %vm566
      %v568 = vsel %vm567, %v559, %v564
      %v569 = vrsqrt.pop %v543
      %v570 = vmul.f32 %v569, %v543
      %v571 = vmul.f32 %v570, %v569
      %v572 = vmul.f32 0.5, %v571
      %v573 = vsub.f32 1.5, %v572
      %v574 = vmul.f32 %v569, %v573
      %vm575 = vweird.f32 %v543
      %vm576 = vweird.f32 %v569
      %vm577 = vmor %vm575, %vm576
      %v578 = vsel %vm577, %v569, %v574
      %v579 = vrsqrt.pop %v544
      %v580 = vmul.f32 %v579, %v544
      %v581 = vmul.f32 %v580, %v579
      %v582 = vmul.f32 0.5, %v581
      %v583 = vsub.f32 1.5, %v582
      %v584 = vmul.f32 %v579, %v583
      %vm585 = vweird.f32 %v544
      %vm586 = vweird.f32 %v579
      %vm587 = vmor %vm585, %vm586
      %v588 = vsel %vm587, %v579, %v584
      %v589 = vrsqrt.pop %v545
      %v590 = vmul.f32 %v589, %v545
      %v591 = vmul.f32 %v590, %v589
      %v592 = vmul.f32 0.5, %v591
      %v593 = vsub.f32 1.5, %v592
      %v594 = vmul.f32 %v589, %v593
      %vm595 = vweird.f32 %v545
      %vm596 = vweird.f32 %v589
      %vm597 = vmor %vm595, %vm596
      %v598 = vsel %vm597, %v589, %v594
      %v599 = vrsqrt.pop %v546
      %v600 = vmul.f32 %v599, %v546
      %v601 = vmul.f32 %v600, %v599
      %v602 = vmul.f32 0.5, %v601
      %v603 = vsub.f32 1.5, %v602
      %v604 = vmul.f32 %v599, %v603
      %vm605 = vweird.f32 %v546
      %vm606 = vweird.f32 %v599
      %vm607 = vmor %vm605, %vm606
      %v608 = vsel %vm607, %v599, %v604
      %v609 = vrsqrt.pop %v547
      %v610 = vmul.f32 %v609, %v547
      %v611 = vmul.f32 %v610, %v609
      %v612 = vmul.f32 0.5, %v611
      %v613 = vsub.f32 1.5, %v612
      %v614 = vmul.f32 %v609, %v613
      %vm615 = vweird.f32 %v547
      %vm616 = vweird.f32 %v609
      %vm617 = vmor %vm615, %vm616
      %v618 = vsel %vm617, %v609, %v614
      %v619 = vrsqrt.pop %v548
      %v620 = vmul.f32 %v619, %v548
      %v621 = vmul.f32 %v620, %v619
      %v622 = vmul.f32 0.5, %v621
      %v623 = vsub.f32 1.5, %v622
      %v624 = vmul.f32 %v619, %v623
      %vm625 = vweird.f32 %v548
      %vm626 = vweird.f32 %v619
      %vm627 = vmor %vm625, %vm626
      %v628 = vsel %vm627, %v619, %v624
      %v629 = vmul.f32 %v493, %v558
      %v630 = vmul.f32 %v494, %v568
      %v631 = vmul.f32 %v495, %v578
      %v632 = vmul.f32 %v496, %v588
      %v633 = vmul.f32 %v497, %v598
      %v634 = vmul.f32 %v498, %v608
      %v635 = vmul.f32 %v499, %v618
      %v636 = vmul.f32 %v500, %v628
      %v637 = vld [vmem:[%s4] sm:$0x1]
      %v639 = vperm.slane %v637, 0
      %v641 = vmul.f32 %v629, %v639
      %v642 = vmul.f32 %v630, %v639
      %v643 = vmul.f32 %v631, %v639
      %v644 = vmul.f32 %v632, %v639
      %v645 = vmul.f32 %v633, %v639
      %v646 = vmul.f32 %v634, %v639
      %v647 = vmul.f32 %v635, %v639
      %v648 = vmul.f32 %v636, %v639
      %v649 = vld [vmem:[%s5] sm:$0x1]
      %v651 = vperm.slane %v649, 0
      %v653 = vadd.f32 %v641, %v651
      %v654 = vadd.f32 %v642, %v651
      %v655 = vadd.f32 %v643, %v651
      %v656 = vadd.f32 %v644, %v651
      %v657 = vadd.f32 %v645, %v651
      %v658 = vadd.f32 %v646, %v651
      %v659 = vadd.f32 %v647, %v651
      %v660 = vadd.f32 %v648, %v651
      %v661 = vpack.c.bf16 %v654, %v653
      %v662 = vpack.c.bf16 %v656, %v655
      %v663 = vpack.c.bf16 %v658, %v657
      %v664 = vpack.c.bf16 %v660, %v659
      %v665 = vld [vmem:[%s1] sm:$0xf]
      %v666 = vld [vmem:[%s1 + $0x4] sm:$0xf]
      %v667 = vld [vmem:[%s1 + $0x8] sm:$0xf]
      %v668 = vld [vmem:[%s1 + $0xc] sm:$0xf]
      %v673 = vunpack.c.l.b16 %v665
      %v674 = vunpack.c.l.b16 %v666
      %v675 = vunpack.c.l.b16 %v667
      %v676 = vunpack.c.l.b16 %v668
      %v677 = vpack.c.b16 %v674, %v673
      %v678 = vpack.c.b16 %v676, %v675
      %v682 = vsel %vm453, %v661, 0
      %v685 = vsel %vm453, %v662, 0
      %v688 = vsel %vm453, %v663, 0
      %v691 = vsel %vm453, %v664, 0
      %693 = vmatpush.bf16.msra.mxu0 0
      %694 = vmatpush.bf16.msra.mxu0 0
      %695 = vmatpush.bf16.msra.mxu0 0
      %696 = vmatpush.bf16.msra.mxu0 0
      %697 = vmatpush.bf16.msra.mxu0 0
      %698 = vmatpush.bf16.msra.mxu0 0
      %699 = vmatpush.bf16.msra.mxu0 %v678
      %700 = vmatpush.bf16.msra.mxu0 %v677
      %701 = vmatmul.bf16.gmra.mxu0 %v682
      %v702 = vpop.f32.mrf.mxu0
      %v703 = vadd.f32 0.0, %v702
      %v704 = vpop.f32.mrf.mxu0
      %v705 = vadd.f32 0.0, %v704
      %706 = vmatmul.bf16.gmra.mxu0 %v685
      %v707 = vpop.f32.mrf.mxu0
      %v708 = vadd.f32 0.0, %v707
      %v709 = vpop.f32.mrf.mxu0
      %v710 = vadd.f32 0.0, %v709
      %711 = vmatmul.bf16.gmra.mxu0 %v688
      %v712 = vpop.f32.mrf.mxu0
      %v713 = vadd.f32 0.0, %v712
      %v714 = vpop.f32.mrf.mxu0
      %v715 = vadd.f32 0.0, %v714
      %716 = vmatmul.bf16.gmra.mxu0 %v691
      %v717 = vpop.f32.mrf.mxu0
      %v718 = vadd.f32 0.0, %v717
      %v719 = vpop.f32.mrf.mxu0
      %v720 = vadd.f32 0.0, %v719
      %721 = vdwg.mxu0
      %v722 = vpack.c.bf16 %v705, %v703
      %v723 = vpack.c.bf16 %v710, %v708
      %v724 = vpack.c.bf16 %v715, %v713
      %v725 = vpack.c.bf16 %v720, %v718
      %730 = vrot.lane.b32.xlu0 %v722, 96
      %v731 = vpop.permute.xlu0 %730
      %732 = vrot.lane.b32.xlu0 %v723, 96
      %v733 = vpop.permute.xlu0 %732
      %734 = vrot.lane.b32.xlu0 %v724, 96
      %v735 = vpop.permute.xlu0 %734
      %736 = vrot.lane.b32.xlu0 %v725, 96
      %v737 = vpop.permute.xlu0 %736
      %vm738 = vcmask 130048
      %v740 = vsel %vm738, %v722, 0
      %v743 = vsel %vm738, %v723, 0
      %v746 = vsel %vm738, %v724, 0
      %v749 = vsel %vm738, %v725, 0
      %v752 = vsel %vm738, %v731, 0
      %v755 = vsel %vm738, %v733, 0
      %v758 = vsel %vm738, %v735, 0
      %v761 = vsel %vm738, %v737, 0
      %763 = vmatpush.bf16.xpose.msra.mxu0 0
      %764 = vmatpush.bf16.xpose.msra.mxu0 0
      %765 = vmatpush.bf16.xpose.msra.mxu0 0
      %766 = vmatpush.bf16.xpose.msra.mxu0 0
      %767 = vmatpush.bf16.xpose.msra.mxu0 %v761
      %768 = vmatpush.bf16.xpose.msra.mxu0 %v758
      %769 = vmatpush.bf16.xpose.msra.mxu0 %v755
      %770 = vmatpush.bf16.xpose.msra.mxu0 %v752
      %771 = vmatmul.bf16.gmra.mxu0 %v740
      %v772 = vpop.f32.mrf.mxu0
      %v773 = vadd.f32 0.0, %v772
      %v774 = vpop.f32.mrf.mxu0
      %v775 = vadd.f32 0.0, %v774
      %776 = vmatmul.bf16.gmra.mxu0 %v743
      %v777 = vpop.f32.mrf.mxu0
      %v778 = vadd.f32 0.0, %v777
      %v779 = vpop.f32.mrf.mxu0
      %v780 = vadd.f32 0.0, %v779
      %781 = vmatmul.bf16.gmra.mxu0 %v746
      %v782 = vpop.f32.mrf.mxu0
      %v783 = vadd.f32 0.0, %v782
      %v784 = vpop.f32.mrf.mxu0
      %v785 = vadd.f32 0.0, %v784
      %786 = vmatmul.bf16.gmra.mxu0 %v749
      %v787 = vpop.f32.mrf.mxu0
      %v788 = vadd.f32 0.0, %v787
      %v789 = vpop.f32.mrf.mxu0
      %v790 = vadd.f32 0.0, %v789
      %791 = vdwg.mxu0
      %v792 = vmul.f32 %v773, 0.25
      %v793 = vmul.f32 %v775, 0.25
      %v794 = vmul.f32 %v778, 0.25
      %v795 = vmul.f32 %v780, 0.25
      %v796 = vmul.f32 %v783, 0.25
      %v797 = vmul.f32 %v785, 0.25
      %v798 = vmul.f32 %v788, 0.25
      %v799 = vmul.f32 %v790, 0.25
      %vm800 = vcmask 523264
      %v801 = vsel %vm800, %v792, -inf
      %802 = vmax.xlane.f32.xlu0 %v801
      %v803 = vpop.xlane.xlu0 %802
      %v804 = vsel %vm800, %v793, -inf
      %805 = vmax.xlane.f32.xlu0 %v804
      %v806 = vpop.xlane.xlu0 %805
      %v807 = vsel %vm800, %v794, -inf
      %808 = vmax.xlane.f32.xlu0 %v807
      %v809 = vpop.xlane.xlu0 %808
      %v810 = vsel %vm800, %v795, -inf
      %811 = vmax.xlane.f32.xlu0 %v810
      %v812 = vpop.xlane.xlu0 %811
      %v813 = vsel %vm800, %v796, -inf
      %814 = vmax.xlane.f32.xlu0 %v813
      %v815 = vpop.xlane.xlu0 %814
      %v816 = vsel %vm800, %v797, -inf
      %817 = vmax.xlane.f32.xlu0 %v816
      %v818 = vpop.xlane.xlu0 %817
      %v819 = vsel %vm800, %v798, -inf
      %820 = vmax.xlane.f32.xlu0 %v819
      %v821 = vpop.xlane.xlu0 %820
      %v822 = vsel %vm800, %v799, -inf
      %823 = vmax.xlane.f32.xlu0 %v822
      %v824 = vpop.xlane.xlu0 %823
      %v825 = vsub.f32 %v792, %v803
      %v826 = vsub.f32 %v793, %v806
      %v827 = vsub.f32 %v794, %v809
      %v828 = vsub.f32 %v795, %v812
      %v829 = vsub.f32 %v796, %v815
      %v830 = vsub.f32 %v797, %v818
      %v831 = vsub.f32 %v798, %v821
      %v832 = vsub.f32 %v799, %v824
      %v833 = vmul.f32 %v825, 1.442695
      %v834 = vpow.pop %v833
      %v835 = vmul.f32 %v826, 1.442695
      %v836 = vpow.pop %v835
      %v837 = vmul.f32 %v827, 1.442695
      %v838 = vpow.pop %v837
      %v839 = vmul.f32 %v828, 1.442695
      %v840 = vpow.pop %v839
      %v841 = vmul.f32 %v829, 1.442695
      %v842 = vpow.pop %v841
      %v843 = vmul.f32 %v830, 1.442695
      %v844 = vpow.pop %v843
      %v845 = vmul.f32 %v831, 1.442695
      %v846 = vpow.pop %v845
      %v847 = vmul.f32 %v832, 1.442695
      %v848 = vpow.pop %v847
      %v849 = vsel %vm800, %v834, 0.0
      %850 = vadd.xlane.f32.xlu0 %v849
      %v851 = vpop.xlane.xlu0 %850
      %v852 = vsel %vm800, %v836, 0.0
      %853 = vadd.xlane.f32.xlu0 %v852
      %v854 = vpop.xlane.xlu0 %853
      %v855 = vsel %vm800, %v838, 0.0
      %856 = vadd.xlane.f32.xlu0 %v855
      %v857 = vpop.xlane.xlu0 %856
      %v858 = vsel %vm800, %v840, 0.0
      %859 = vadd.xlane.f32.xlu0 %v858
      %v860 = vpop.xlane.xlu0 %859
      %v861 = vsel %vm800, %v842, 0.0
      %862 = vadd.xlane.f32.xlu0 %v861
      %v863 = vpop.xlane.xlu0 %862
      %v864 = vsel %vm800, %v844, 0.0
      %865 = vadd.xlane.f32.xlu0 %v864
      %v866 = vpop.xlane.xlu0 %865
      %v867 = vsel %vm800, %v846, 0.0
      %868 = vadd.xlane.f32.xlu0 %v867
      %v869 = vpop.xlane.xlu0 %868
      %v870 = vsel %vm800, %v848, 0.0
      %871 = vadd.xlane.f32.xlu0 %v870
      %v872 = vpop.xlane.xlu0 %871
      %v873 = vrcp.pop %v851
      %v874 = vrcp.pop %v854
      %v875 = vrcp.pop %v857
      %v876 = vrcp.pop %v860
      %v877 = vrcp.pop %v863
      %v878 = vrcp.pop %v866
      %v879 = vrcp.pop %v869
      %v880 = vrcp.pop %v872
      %v881 = vmul.f32 %v834, %v873
      %v882 = vmul.f32 %v836, %v874
      %v883 = vmul.f32 %v838, %v875
      %v884 = vmul.f32 %v840, %v876
      %v885 = vmul.f32 %v842, %v877
      %v886 = vmul.f32 %v844, %v878
      %v887 = vmul.f32 %v846, %v879
      %v888 = vmul.f32 %v848, %v880
      %v889 = vpack.c.bf16 %v882, %v881
      %v890 = vpack.c.bf16 %v884, %v883
      %v891 = vpack.c.bf16 %v886, %v885
      %v892 = vpack.c.bf16 %v888, %v887
      %893 = vrot.lane.b32.xlu0 %v722, 64
      %v894 = vpop.permute.xlu0 %893
      %895 = vrot.lane.b32.xlu0 %v723, 64
      %v896 = vpop.permute.xlu0 %895
      %897 = vrot.lane.b32.xlu0 %v724, 64
      %v898 = vpop.permute.xlu0 %897
      %899 = vrot.lane.b32.xlu0 %v725, 64
      %v900 = vpop.permute.xlu0 %899
      %v906 = vsel %vm800, %v889, 0
      %v909 = vsel %vm800, %v890, 0
      %v912 = vsel %vm800, %v891, 0
      %v915 = vsel %vm800, %v892, 0
      %917 = vmatpush.bf16.msra.mxu0 0
      %918 = vmatpush.bf16.msra.mxu0 0
      %919 = vmatpush.bf16.msra.mxu0 0
      %920 = vmatpush.bf16.msra.mxu0 0
      %921 = vmatpush.bf16.msra.mxu0 %v900
      %922 = vmatpush.bf16.msra.mxu0 %v898
      %923 = vmatpush.bf16.msra.mxu0 %v896
      %924 = vmatpush.bf16.msra.mxu0 %v894
      %925 = vmatmul.bf16.gmra.mxu0 %v906
      %v926 = vpop.f32.mrf.mxu0
      %v927 = vadd.f32 0.0, %v926
      %v928 = vpop.f32.mrf.mxu0
      %v929 = vadd.f32 0.0, %v928
      %930 = vmatmul.bf16.gmra.mxu0 %v909
      %v931 = vpop.f32.mrf.mxu0
      %v932 = vadd.f32 0.0, %v931
      %v933 = vpop.f32.mrf.mxu0
      %v934 = vadd.f32 0.0, %v933
      %935 = vmatmul.bf16.gmra.mxu0 %v912
      %v936 = vpop.f32.mrf.mxu0
      %v937 = vadd.f32 0.0, %v936
      %v938 = vpop.f32.mrf.mxu0
      %v939 = vadd.f32 0.0, %v938
      %940 = vmatmul.bf16.gmra.mxu0 %v915
      %v941 = vpop.f32.mrf.mxu0
      %v942 = vadd.f32 0.0, %v941
      %v943 = vpop.f32.mrf.mxu0
      %v944 = vadd.f32 0.0, %v943
      %945 = vdwg.mxu0
      %946 = vrot.lane.b32.xlu0 %v722, 112
      %v947 = vpop.permute.xlu0 %946
      %948 = vrot.lane.b32.xlu0 %v723, 112
      %v949 = vpop.permute.xlu0 %948
      %950 = vrot.lane.b32.xlu0 %v724, 112
      %v951 = vpop.permute.xlu0 %950
      %952 = vrot.lane.b32.xlu0 %v725, 112
      %v953 = vpop.permute.xlu0 %952
      %954 = vrot.lane.b32.xlu0 %v722, 80
      %v955 = vpop.permute.xlu0 %954
      %956 = vrot.lane.b32.xlu0 %v723, 80
      %v957 = vpop.permute.xlu0 %956
      %958 = vrot.lane.b32.xlu0 %v724, 80
      %v959 = vpop.permute.xlu0 %958
      %960 = vrot.lane.b32.xlu0 %v725, 80
      %v961 = vpop.permute.xlu0 %960
      %v963 = vsel %vm738, %v947, 0
      %v966 = vsel %vm738, %v949, 0
      %v969 = vsel %vm738, %v951, 0
      %v972 = vsel %vm738, %v953, 0
      %v975 = vsel %vm738, %v955, 0
      %v978 = vsel %vm738, %v957, 0
      %v981 = vsel %vm738, %v959, 0
      %v984 = vsel %vm738, %v961, 0
      %986 = vmatpush.bf16.xpose.msra.mxu0 0
      %987 = vmatpush.bf16.xpose.msra.mxu0 0
      %988 = vmatpush.bf16.xpose.msra.mxu0 0
      %989 = vmatpush.bf16.xpose.msra.mxu0 0
      %990 = vmatpush.bf16.xpose.msra.mxu0 %v984
      %991 = vmatpush.bf16.xpose.msra.mxu0 %v981
      %992 = vmatpush.bf16.xpose.msra.mxu0 %v978
      %993 = vmatpush.bf16.xpose.msra.mxu0 %v975
      %994 = vmatmul.bf16.gmra.mxu0 %v963
      %v995 = vpop.f32.mrf.mxu0
      %v996 = vadd.f32 0.0, %v995
      %v997 = vpop.f32.mrf.mxu0
      %v998 = vadd.f32 0.0, %v997
      %999 = vmatmul.bf16.gmra.mxu0 %v966
      %v1000 = vpop.f32.mrf.mxu0
      %v1001 = vadd.f32 0.0, %v1000
      %v1002 = vpop.f32.mrf.mxu0
      %v1003 = vadd.f32 0.0, %v1002
      %1004 = vmatmul.bf16.gmra.mxu0 %v969
      %v1005 = vpop.f32.mrf.mxu0
      %v1006 = vadd.f32 0.0, %v1005
      %v1007 = vpop.f32.mrf.mxu0
      %v1008 = vadd.f32 0.0, %v1007
      %1009 = vmatmul.bf16.gmra.mxu0 %v972
      %v1010 = vpop.f32.mrf.mxu0
      %v1011 = vadd.f32 0.0, %v1010
      %v1012 = vpop.f32.mrf.mxu0
      %v1013 = vadd.f32 0.0, %v1012
      %1014 = vdwg.mxu0
      %v1015 = vmul.f32 %v996, 0.25
      %v1016 = vmul.f32 %v998, 0.25
      %v1017 = vmul.f32 %v1001, 0.25
      %v1018 = vmul.f32 %v1003, 0.25
      %v1019 = vmul.f32 %v1006, 0.25
      %v1020 = vmul.f32 %v1008, 0.25
      %v1021 = vmul.f32 %v1011, 0.25
      %v1022 = vmul.f32 %v1013, 0.25
      %v1023 = vsel %vm800, %v1015, -inf
      %1024 = vmax.xlane.f32.xlu0 %v1023
      %v1025 = vpop.xlane.xlu0 %1024
      %v1026 = vsel %vm800, %v1016, -inf
      %1027 = vmax.xlane.f32.xlu0 %v1026
      %v1028 = vpop.xlane.xlu0 %1027
      %v1029 = vsel %vm800, %v1017, -inf
      %1030 = vmax.xlane.f32.xlu0 %v1029
      %v1031 = vpop.xlane.xlu0 %1030
      %v1032 = vsel %vm800, %v1018, -inf
      %1033 = vmax.xlane.f32.xlu0 %v1032
      %v1034 = vpop.xlane.xlu0 %1033
      %v1035 = vsel %vm800, %v1019, -inf
      %1036 = vmax.xlane.f32.xlu0 %v1035
      %v1037 = vpop.xlane.xlu0 %1036
      %v1038 = vsel %vm800, %v1020, -inf
      %1039 = vmax.xlane.f32.xlu0 %v1038
      %v1040 = vpop.xlane.xlu0 %1039
      %v1041 = vsel %vm800, %v1021, -inf
      %1042 = vmax.xlane.f32.xlu0 %v1041
      %v1043 = vpop.xlane.xlu0 %1042
      %v1044 = vsel %vm800, %v1022, -inf
      %1045 = vmax.xlane.f32.xlu0 %v1044
      %v1046 = vpop.xlane.xlu0 %1045
      %v1047 = vsub.f32 %v1015, %v1025
      %v1048 = vsub.f32 %v1016, %v1028
      %v1049 = vsub.f32 %v1017, %v1031
      %v1050 = vsub.f32 %v1018, %v1034
      %v1051 = vsub.f32 %v1019, %v1037
      %v1052 = vsub.f32 %v1020, %v1040
      %v1053 = vsub.f32 %v1021, %v1043
      %v1054 = vsub.f32 %v1022, %v1046
      %v1055 = vmul.f32 %v1047, 1.442695
      %v1056 = vpow.pop %v1055
      %v1057 = vmul.f32 %v1048, 1.442695
      %v1058 = vpow.pop %v1057
      %v1059 = vmul.f32 %v1049, 1.442695
      %v1060 = vpow.pop %v1059
      %v1061 = vmul.f32 %v1050, 1.442695
      %v1062 = vpow.pop %v1061
      %v1063 = vmul.f32 %v1051, 1.442695
      %v1064 = vpow.pop %v1063
      %v1065 = vmul.f32 %v1052, 1.442695
      %v1066 = vpow.pop %v1065
      %v1067 = vmul.f32 %v1053, 1.442695
      %v1068 = vpow.pop %v1067
      %v1069 = vmul.f32 %v1054, 1.442695
      %v1070 = vpow.pop %v1069
      %v1071 = vsel %vm800, %v1056, 0.0
      %1072 = vadd.xlane.f32.xlu0 %v1071
      %v1073 = vpop.xlane.xlu0 %1072
      %v1074 = vsel %vm800, %v1058, 0.0
      %1075 = vadd.xlane.f32.xlu0 %v1074
      %v1076 = vpop.xlane.xlu0 %1075
      %v1077 = vsel %vm800, %v1060, 0.0
      %1078 = vadd.xlane.f32.xlu0 %v1077
      %v1079 = vpop.xlane.xlu0 %1078
      %v1080 = vsel %vm800, %v1062, 0.0
      %1081 = vadd.xlane.f32.xlu0 %v1080
      %v1082 = vpop.xlane.xlu0 %1081
      %v1083 = vsel %vm800, %v1064, 0.0
      %1084 = vadd.xlane.f32.xlu0 %v1083
      %v1085 = vpop.xlane.xlu0 %1084
      %v1086 = vsel %vm800, %v1066, 0.0
      %1087 = vadd.xlane.f32.xlu0 %v1086
      %v1088 = vpop.xlane.xlu0 %1087
      %v1089 = vsel %vm800, %v1068, 0.0
      %1090 = vadd.xlane.f32.xlu0 %v1089
      %v1091 = vpop.xlane.xlu0 %1090
      %v1092 = vsel %vm800, %v1070, 0.0
      %1093 = vadd.xlane.f32.xlu0 %v1092
      %v1094 = vpop.xlane.xlu0 %1093
      %v1095 = vrcp.pop %v1073
      %v1096 = vrcp.pop %v1076
      %v1097 = vrcp.pop %v1079
      %v1098 = vrcp.pop %v1082
      %v1099 = vrcp.pop %v1085
      %v1100 = vrcp.pop %v1088
      %v1101 = vrcp.pop %v1091
      %v1102 = vrcp.pop %v1094
      %v1103 = vmul.f32 %v1056, %v1095
      %v1104 = vmul.f32 %v1058, %v1096
      %v1105 = vmul.f32 %v1060, %v1097
      %v1106 = vmul.f32 %v1062, %v1098
      %v1107 = vmul.f32 %v1064, %v1099
      %v1108 = vmul.f32 %v1066, %v1100
      %v1109 = vmul.f32 %v1068, %v1101
      %v1110 = vmul.f32 %v1070, %v1102
      %v1111 = vpack.c.bf16 %v1104, %v1103
      %v1112 = vpack.c.bf16 %v1106, %v1105
      %v1113 = vpack.c.bf16 %v1108, %v1107
      %v1114 = vpack.c.bf16 %v1110, %v1109
      %1115 = vrot.lane.b32.xlu0 %v722, 48
      %v1116 = vpop.permute.xlu0 %1115
      %1117 = vrot.lane.b32.xlu0 %v723, 48
      %v1118 = vpop.permute.xlu0 %1117
      %1119 = vrot.lane.b32.xlu0 %v724, 48
      %v1120 = vpop.permute.xlu0 %1119
      %1121 = vrot.lane.b32.xlu0 %v725, 48
      %v1122 = vpop.permute.xlu0 %1121
      %v1128 = vsel %vm800, %v1111, 0
      %v1131 = vsel %vm800, %v1112, 0
      %v1134 = vsel %vm800, %v1113, 0
      %v1137 = vsel %vm800, %v1114, 0
      %1139 = vmatpush.bf16.msra.mxu0 0
      %1140 = vmatpush.bf16.msra.mxu0 0
      %1141 = vmatpush.bf16.msra.mxu0 0
      %1142 = vmatpush.bf16.msra.mxu0 0
      %1143 = vmatpush.bf16.msra.mxu0 %v1122
      %1144 = vmatpush.bf16.msra.mxu0 %v1120
      %1145 = vmatpush.bf16.msra.mxu0 %v1118
      %1146 = vmatpush.bf16.msra.mxu0 %v1116
      %1147 = vmatmul.bf16.gmra.mxu0 %v1128
      %v1148 = vpop.f32.mrf.mxu0
      %v1149 = vadd.f32 0.0, %v1148
      %v1150 = vpop.f32.mrf.mxu0
      %v1151 = vadd.f32 0.0, %v1150
      %1152 = vmatmul.bf16.gmra.mxu0 %v1131
      %v1153 = vpop.f32.mrf.mxu0
      %v1154 = vadd.f32 0.0, %v1153
      %v1155 = vpop.f32.mrf.mxu0
      %v1156 = vadd.f32 0.0, %v1155
      %1157 = vmatmul.bf16.gmra.mxu0 %v1134
      %v1158 = vpop.f32.mrf.mxu0
      %v1159 = vadd.f32 0.0, %v1158
      %v1160 = vpop.f32.mrf.mxu0
      %v1161 = vadd.f32 0.0, %v1160
      %1162 = vmatmul.bf16.gmra.mxu0 %v1137
      %v1163 = vpop.f32.mrf.mxu0
      %v1164 = vadd.f32 0.0, %v1163
      %v1165 = vpop.f32.mrf.mxu0
      %v1166 = vadd.f32 0.0, %v1165
      %1167 = vdwg.mxu0
      %1176 = vrot.lane.b32.xlu0 %v1149, 16
      %v1177 = vpop.permute.xlu0 %1176
      %1178 = vrot.lane.b32.xlu0 %v1151, 16
      %v1179 = vpop.permute.xlu0 %1178
      %1180 = vrot.lane.b32.xlu0 %v1154, 16
      %v1181 = vpop.permute.xlu0 %1180
      %1182 = vrot.lane.b32.xlu0 %v1156, 16
      %v1183 = vpop.permute.xlu0 %1182
      %1184 = vrot.lane.b32.xlu0 %v1159, 16
      %v1185 = vpop.permute.xlu0 %1184
      %1186 = vrot.lane.b32.xlu0 %v1161, 16
      %v1187 = vpop.permute.xlu0 %1186
      %1188 = vrot.lane.b32.xlu0 %v1164, 16
      %v1189 = vpop.permute.xlu0 %1188
      %1190 = vrot.lane.b32.xlu0 %v1166, 16
      %v1191 = vpop.permute.xlu0 %1190
      %v1200 = vsel %vm738, %v927, %v1177
      %v1201 = vsel %vm738, %v929, %v1179
      %v1202 = vsel %vm738, %v932, %v1181
      %v1203 = vsel %vm738, %v934, %v1183
      %v1204 = vsel %vm738, %v937, %v1185
      %v1205 = vsel %vm738, %v939, %v1187
      %v1206 = vsel %vm738, %v942, %v1189
      %v1207 = vsel %vm738, %v944, %v1191
      %v1208 = vpack.c.bf16 %v1201, %v1200
      %v1209 = vpack.c.bf16 %v1203, %v1202
      %v1210 = vpack.c.bf16 %v1205, %v1204
      %v1211 = vpack.c.bf16 %v1207, %v1206
      %v1212 = vld [vmem:[%s2] sm:$0xf]
      %v1213 = vld [vmem:[%s2 + $0x4] sm:$0xf]
      %v1214 = vld [vmem:[%s2 + $0x8] sm:$0xf]
      %v1215 = vld [vmem:[%s2 + $0xc] sm:$0xf]
      %v1216 = vld [vmem:[%s3] sm:$0x1]
      %v1218 = vperm.slane %v1216, 0
      %v1224 = vunpack.c.l.b16 %v1212
      %v1225 = vunpack.c.l.b16 %v1213
      %v1226 = vunpack.c.l.b16 %v1214
      %v1227 = vunpack.c.l.b16 %v1215
      %v1228 = vpack.c.b16 %v1225, %v1224
      %v1229 = vpack.c.b16 %v1227, %v1226
      %v1233 = vsel %vm453, %v1208, 0
      %v1236 = vsel %vm453, %v1209, 0
      %v1239 = vsel %vm453, %v1210, 0
      %v1242 = vsel %vm453, %v1211, 0
      %1244 = vmatpush.bf16.msra.mxu0 0
      %1245 = vmatpush.bf16.msra.mxu0 0
      %1246 = vmatpush.bf16.msra.mxu0 0
      %1247 = vmatpush.bf16.msra.mxu0 0
      %1248 = vmatpush.bf16.msra.mxu0 0
      %1249 = vmatpush.bf16.msra.mxu0 0
      %1250 = vmatpush.bf16.msra.mxu0 %v1229
      %1251 = vmatpush.bf16.msra.mxu0 %v1228
      %1252 = vmatmul.bf16.gmra.mxu0 %v1233
      %v1253 = vpop.f32.mrf.mxu0
      %v1254 = vadd.f32 %v1218, %v1253
      %v1255 = vpop.f32.mrf.mxu0
      %v1256 = vadd.f32 %v1218, %v1255
      %1257 = vmatmul.bf16.gmra.mxu0 %v1236
      %v1258 = vpop.f32.mrf.mxu0
      %v1259 = vadd.f32 %v1218, %v1258
      %v1260 = vpop.f32.mrf.mxu0
      %v1261 = vadd.f32 %v1218, %v1260
      %1262 = vmatmul.bf16.gmra.mxu0 %v1239
      %v1263 = vpop.f32.mrf.mxu0
      %v1264 = vadd.f32 %v1218, %v1263
      %v1265 = vpop.f32.mrf.mxu0
      %v1266 = vadd.f32 %v1218, %v1265
      %1267 = vmatmul.bf16.gmra.mxu0 %v1242
      %v1268 = vpop.f32.mrf.mxu0
      %v1269 = vadd.f32 %v1218, %v1268
      %v1270 = vpop.f32.mrf.mxu0
      %v1271 = vadd.f32 %v1218, %v1270
      %1272 = vdwg.mxu0
      %v1273 = vadd.f32 %v445, %v1254
      %v1274 = vadd.f32 %v446, %v1256
      %v1275 = vadd.f32 %v447, %v1259
      %v1276 = vadd.f32 %v448, %v1261
      %v1277 = vadd.f32 %v449, %v1264
      %v1278 = vadd.f32 %v450, %v1266
      %v1279 = vadd.f32 %v451, %v1269
      %v1280 = vadd.f32 %v452, %v1271
      %v1281 = vsel %vm453, %v1273, 0.0
      %1282 = vadd.xlane.f32.xlu0 %v1281
      %v1283 = vpop.xlane.xlu0 %1282
      %v1284 = vsel %vm453, %v1274, 0.0
      %1285 = vadd.xlane.f32.xlu0 %v1284
      %v1286 = vpop.xlane.xlu0 %1285
      %v1287 = vsel %vm453, %v1275, 0.0
      %1288 = vadd.xlane.f32.xlu0 %v1287
      %v1289 = vpop.xlane.xlu0 %1288
      %v1290 = vsel %vm453, %v1276, 0.0
      %1291 = vadd.xlane.f32.xlu0 %v1290
      %v1292 = vpop.xlane.xlu0 %1291
      %v1293 = vsel %vm453, %v1277, 0.0
      %1294 = vadd.xlane.f32.xlu0 %v1293
      %v1295 = vpop.xlane.xlu0 %1294
      %v1296 = vsel %vm453, %v1278, 0.0
      %1297 = vadd.xlane.f32.xlu0 %v1296
      %v1298 = vpop.xlane.xlu0 %1297
      %v1299 = vsel %vm453, %v1279, 0.0
      %1300 = vadd.xlane.f32.xlu0 %v1299
      %v1301 = vpop.xlane.xlu0 %1300
      %v1302 = vsel %vm453, %v1280, 0.0
      %1303 = vadd.xlane.f32.xlu0 %v1302
      %v1304 = vpop.xlane.xlu0 %1303
      %v1305 = vmul.f32 %v1283, %v484
      %v1306 = vmul.f32 %v1286, %v484
      %v1307 = vmul.f32 %v1289, %v484
      %v1308 = vmul.f32 %v1292, %v484
      %v1309 = vmul.f32 %v1295, %v484
      %v1310 = vmul.f32 %v1298, %v484
      %v1311 = vmul.f32 %v1301, %v484
      %v1312 = vmul.f32 %v1304, %v484
      %v1313 = vsub.f32 %v1273, %v1305
      %v1314 = vsub.f32 %v1274, %v1306
      %v1315 = vsub.f32 %v1275, %v1307
      %v1316 = vsub.f32 %v1276, %v1308
      %v1317 = vsub.f32 %v1277, %v1309
      %v1318 = vsub.f32 %v1278, %v1310
      %v1319 = vsub.f32 %v1279, %v1311
      %v1320 = vsub.f32 %v1280, %v1312
      %v1321 = vmul.f32 %v1313, %v1313
      %v1322 = vmul.f32 %v1314, %v1314
      %v1323 = vmul.f32 %v1315, %v1315
      %v1324 = vmul.f32 %v1316, %v1316
      %v1325 = vmul.f32 %v1317, %v1317
      %v1326 = vmul.f32 %v1318, %v1318
      %v1327 = vmul.f32 %v1319, %v1319
      %v1328 = vmul.f32 %v1320, %v1320
      %v1329 = vsel %vm453, %v1321, 0.0
      %1330 = vadd.xlane.f32.xlu0 %v1329
      %v1331 = vpop.xlane.xlu0 %1330
      %v1332 = vsel %vm453, %v1322, 0.0
      %1333 = vadd.xlane.f32.xlu0 %v1332
      %v1334 = vpop.xlane.xlu0 %1333
      %v1335 = vsel %vm453, %v1323, 0.0
      %1336 = vadd.xlane.f32.xlu0 %v1335
      %v1337 = vpop.xlane.xlu0 %1336
      %v1338 = vsel %vm453, %v1324, 0.0
      %1339 = vadd.xlane.f32.xlu0 %v1338
      %v1340 = vpop.xlane.xlu0 %1339
      %v1341 = vsel %vm453, %v1325, 0.0
      %1342 = vadd.xlane.f32.xlu0 %v1341
      %v1343 = vpop.xlane.xlu0 %1342
      %v1344 = vsel %vm453, %v1326, 0.0
      %1345 = vadd.xlane.f32.xlu0 %v1344
      %v1346 = vpop.xlane.xlu0 %1345
      %v1347 = vsel %vm453, %v1327, 0.0
      %1348 = vadd.xlane.f32.xlu0 %v1347
      %v1349 = vpop.xlane.xlu0 %1348
      %v1350 = vsel %vm453, %v1328, 0.0
      %1351 = vadd.xlane.f32.xlu0 %v1350
      %v1352 = vpop.xlane.xlu0 %1351
      %v1353 = vmul.f32 %v1331, %v484
      %v1354 = vmul.f32 %v1334, %v484
      %v1355 = vmul.f32 %v1337, %v484
      %v1356 = vmul.f32 %v1340, %v484
      %v1357 = vmul.f32 %v1343, %v484
      %v1358 = vmul.f32 %v1346, %v484
      %v1359 = vmul.f32 %v1349, %v484
      %v1360 = vmul.f32 %v1352, %v484
      %v1361 = vadd.f32 %v1353, 1e-05
      %v1362 = vadd.f32 %v1354, 1e-05
      %v1363 = vadd.f32 %v1355, 1e-05
      %v1364 = vadd.f32 %v1356, 1e-05
      %v1365 = vadd.f32 %v1357, 1e-05
      %v1366 = vadd.f32 %v1358, 1e-05
      %v1367 = vadd.f32 %v1359, 1e-05
      %v1368 = vadd.f32 %v1360, 1e-05
      %v1369 = vrsqrt.pop %v1361
      %v1370 = vmul.f32 %v1369, %v1361
      %v1371 = vmul.f32 %v1370, %v1369
      %v1372 = vmul.f32 0.5, %v1371
      %v1373 = vsub.f32 1.5, %v1372
      %v1374 = vmul.f32 %v1369, %v1373
      %vm1375 = vweird.f32 %v1361
      %vm1376 = vweird.f32 %v1369
      %vm1377 = vmor %vm1375, %vm1376
      %v1378 = vsel %vm1377, %v1369, %v1374
      %v1379 = vrsqrt.pop %v1362
      %v1380 = vmul.f32 %v1379, %v1362
      %v1381 = vmul.f32 %v1380, %v1379
      %v1382 = vmul.f32 0.5, %v1381
      %v1383 = vsub.f32 1.5, %v1382
      %v1384 = vmul.f32 %v1379, %v1383
      %vm1385 = vweird.f32 %v1362
      %vm1386 = vweird.f32 %v1379
      %vm1387 = vmor %vm1385, %vm1386
      %v1388 = vsel %vm1387, %v1379, %v1384
      %v1389 = vrsqrt.pop %v1363
      %v1390 = vmul.f32 %v1389, %v1363
      %v1391 = vmul.f32 %v1390, %v1389
      %v1392 = vmul.f32 0.5, %v1391
      %v1393 = vsub.f32 1.5, %v1392
      %v1394 = vmul.f32 %v1389, %v1393
      %vm1395 = vweird.f32 %v1363
      %vm1396 = vweird.f32 %v1389
      %vm1397 = vmor %vm1395, %vm1396
      %v1398 = vsel %vm1397, %v1389, %v1394
      %v1399 = vrsqrt.pop %v1364
      %v1400 = vmul.f32 %v1399, %v1364
      %v1401 = vmul.f32 %v1400, %v1399
      %v1402 = vmul.f32 0.5, %v1401
      %v1403 = vsub.f32 1.5, %v1402
      %v1404 = vmul.f32 %v1399, %v1403
      %vm1405 = vweird.f32 %v1364
      %vm1406 = vweird.f32 %v1399
      %vm1407 = vmor %vm1405, %vm1406
      %v1408 = vsel %vm1407, %v1399, %v1404
      %v1409 = vrsqrt.pop %v1365
      %v1410 = vmul.f32 %v1409, %v1365
      %v1411 = vmul.f32 %v1410, %v1409
      %v1412 = vmul.f32 0.5, %v1411
      %v1413 = vsub.f32 1.5, %v1412
      %v1414 = vmul.f32 %v1409, %v1413
      %vm1415 = vweird.f32 %v1365
      %vm1416 = vweird.f32 %v1409
      %vm1417 = vmor %vm1415, %vm1416
      %v1418 = vsel %vm1417, %v1409, %v1414
      %v1419 = vrsqrt.pop %v1366
      %v1420 = vmul.f32 %v1419, %v1366
      %v1421 = vmul.f32 %v1420, %v1419
      %v1422 = vmul.f32 0.5, %v1421
      %v1423 = vsub.f32 1.5, %v1422
      %v1424 = vmul.f32 %v1419, %v1423
      %vm1425 = vweird.f32 %v1366
      %vm1426 = vweird.f32 %v1419
      %vm1427 = vmor %vm1425, %vm1426
      %v1428 = vsel %vm1427, %v1419, %v1424
      %v1429 = vrsqrt.pop %v1367
      %v1430 = vmul.f32 %v1429, %v1367
      %v1431 = vmul.f32 %v1430, %v1429
      %v1432 = vmul.f32 0.5, %v1431
      %v1433 = vsub.f32 1.5, %v1432
      %v1434 = vmul.f32 %v1429, %v1433
      %vm1435 = vweird.f32 %v1367
      %vm1436 = vweird.f32 %v1429
      %vm1437 = vmor %vm1435, %vm1436
      %v1438 = vsel %vm1437, %v1429, %v1434
      %v1439 = vrsqrt.pop %v1368
      %v1440 = vmul.f32 %v1439, %v1368
      %v1441 = vmul.f32 %v1440, %v1439
      %v1442 = vmul.f32 0.5, %v1441
      %v1443 = vsub.f32 1.5, %v1442
      %v1444 = vmul.f32 %v1439, %v1443
      %vm1445 = vweird.f32 %v1368
      %vm1446 = vweird.f32 %v1439
      %vm1447 = vmor %vm1445, %vm1446
      %v1448 = vsel %vm1447, %v1439, %v1444
      %v1449 = vmul.f32 %v1313, %v1378
      %v1450 = vmul.f32 %v1314, %v1388
      %v1451 = vmul.f32 %v1315, %v1398
      %v1452 = vmul.f32 %v1316, %v1408
      %v1453 = vmul.f32 %v1317, %v1418
      %v1454 = vmul.f32 %v1318, %v1428
      %v1455 = vmul.f32 %v1319, %v1438
      %v1456 = vmul.f32 %v1320, %v1448
      %v1457 = vld [vmem:[%s6] sm:$0x1]
      %v1459 = vperm.slane %v1457, 0
      %v1461 = vmul.f32 %v1449, %v1459
      %v1462 = vmul.f32 %v1450, %v1459
      %v1463 = vmul.f32 %v1451, %v1459
      %v1464 = vmul.f32 %v1452, %v1459
      %v1465 = vmul.f32 %v1453, %v1459
      %v1466 = vmul.f32 %v1454, %v1459
      %v1467 = vmul.f32 %v1455, %v1459
      %v1468 = vmul.f32 %v1456, %v1459
      %v1469 = vld [vmem:[%s7] sm:$0x1]
      %v1471 = vperm.slane %v1469, 0
      %v1473 = vadd.f32 %v1461, %v1471
      %v1474 = vadd.f32 %v1462, %v1471
      %v1475 = vadd.f32 %v1463, %v1471
      %v1476 = vadd.f32 %v1464, %v1471
      %v1477 = vadd.f32 %v1465, %v1471
      %v1478 = vadd.f32 %v1466, %v1471
      %v1479 = vadd.f32 %v1467, %v1471
      %v1480 = vadd.f32 %v1468, %v1471
      %v1481 = vpack.c.bf16 %v1474, %v1473
      %v1482 = vpack.c.bf16 %v1476, %v1475
      %v1483 = vpack.c.bf16 %v1478, %v1477
      %v1484 = vpack.c.bf16 %v1480, %v1479
      %v1485 = vld [vmem:[%s8] sm:$0xf]
      %v1486 = vld [vmem:[%s8 + $0x4] sm:$0xf]
      %v1487 = vld [vmem:[%s8 + $0x8] sm:$0xf]
      %v1488 = vld [vmem:[%s8 + $0xc] sm:$0xf]
      %v1489 = vld [vmem:[%s9] sm:$0x1]
      %v1491 = vperm.slane %v1489, 0
      %v1497 = vunpack.c.l.b16 %v1485
      %v1498 = vunpack.c.l.b16 %v1486
      %v1499 = vunpack.c.l.b16 %v1487
      %v1500 = vunpack.c.l.b16 %v1488
      %v1501 = vpack.c.b16 %v1498, %v1497
      %v1502 = vpack.c.b16 %v1500, %v1499
      %v1506 = vsel %vm453, %v1481, 0
      %v1509 = vsel %vm453, %v1482, 0
      %v1512 = vsel %vm453, %v1483, 0
      %v1515 = vsel %vm453, %v1484, 0
      %1517 = vmatpush.bf16.msra.mxu0 0
      %1518 = vmatpush.bf16.msra.mxu0 0
      %1519 = vmatpush.bf16.msra.mxu0 0
      %1520 = vmatpush.bf16.msra.mxu0 0
      %1521 = vmatpush.bf16.msra.mxu0 0
      %1522 = vmatpush.bf16.msra.mxu0 0
      %1523 = vmatpush.bf16.msra.mxu0 %v1502
      %1524 = vmatpush.bf16.msra.mxu0 %v1501
      %1525 = vmatmul.bf16.gmra.mxu0 %v1506
      %v1526 = vpop.f32.mrf.mxu0
      %v1527 = vadd.f32 %v1491, %v1526
      %v1528 = vpop.f32.mrf.mxu0
      %v1529 = vadd.f32 %v1491, %v1528
      %1530 = vmatmul.bf16.gmra.mxu0 %v1509
      %v1531 = vpop.f32.mrf.mxu0
      %v1532 = vadd.f32 %v1491, %v1531
      %v1533 = vpop.f32.mrf.mxu0
      %v1534 = vadd.f32 %v1491, %v1533
      %1535 = vmatmul.bf16.gmra.mxu0 %v1512
      %v1536 = vpop.f32.mrf.mxu0
      %v1537 = vadd.f32 %v1491, %v1536
      %v1538 = vpop.f32.mrf.mxu0
      %v1539 = vadd.f32 %v1491, %v1538
      %1540 = vmatmul.bf16.gmra.mxu0 %v1515
      %v1541 = vpop.f32.mrf.mxu0
      %v1542 = vadd.f32 %v1491, %v1541
      %v1543 = vpop.f32.mrf.mxu0
      %v1544 = vadd.f32 %v1491, %v1543
      %1545 = vdwg.mxu0
      %v1546 = vmul.f32 %v1527, 0.5
      %v1547 = vmul.f32 %v1529, 0.5
      %v1548 = vmul.f32 %v1532, 0.5
      %v1549 = vmul.f32 %v1534, 0.5
      %v1550 = vmul.f32 %v1537, 0.5
      %v1551 = vmul.f32 %v1539, 0.5
      %v1552 = vmul.f32 %v1542, 0.5
      %v1553 = vmul.f32 %v1544, 0.5
      %v1554 = vmul.f32 %v1527, 0.044715
      %v1555 = vmul.f32 %v1529, 0.044715
      %v1556 = vmul.f32 %v1532, 0.044715
      %v1557 = vmul.f32 %v1534, 0.044715
      %v1558 = vmul.f32 %v1537, 0.044715
      %v1559 = vmul.f32 %v1539, 0.044715
      %v1560 = vmul.f32 %v1542, 0.044715
      %v1561 = vmul.f32 %v1544, 0.044715
      %v1562 = vmul.f32 %v1554, %v1527
      %v1563 = vmul.f32 %v1555, %v1529
      %v1564 = vmul.f32 %v1556, %v1532
      %v1565 = vmul.f32 %v1557, %v1534
      %v1566 = vmul.f32 %v1558, %v1537
      %v1567 = vmul.f32 %v1559, %v1539
      %v1568 = vmul.f32 %v1560, %v1542
      %v1569 = vmul.f32 %v1561, %v1544
      %v1570 = vmul.f32 %v1562, %v1527
      %v1571 = vmul.f32 %v1563, %v1529
      %v1572 = vmul.f32 %v1564, %v1532
      %v1573 = vmul.f32 %v1565, %v1534
      %v1574 = vmul.f32 %v1566, %v1537
      %v1575 = vmul.f32 %v1567, %v1539
      %v1576 = vmul.f32 %v1568, %v1542
      %v1577 = vmul.f32 %v1569, %v1544
      %v1578 = vadd.f32 %v1527, %v1570
      %v1579 = vadd.f32 %v1529, %v1571
      %v1580 = vadd.f32 %v1532, %v1572
      %v1581 = vadd.f32 %v1534, %v1573
      %v1582 = vadd.f32 %v1537, %v1574
      %v1583 = vadd.f32 %v1539, %v1575
      %v1584 = vadd.f32 %v1542, %v1576
      %v1585 = vadd.f32 %v1544, %v1577
      %v1586 = vmul.f32 %v1578, 0.7978846
      %v1587 = vmul.f32 %v1579, 0.7978846
      %v1588 = vmul.f32 %v1580, 0.7978846
      %v1589 = vmul.f32 %v1581, 0.7978846
      %v1590 = vmul.f32 %v1582, 0.7978846
      %v1591 = vmul.f32 %v1583, 0.7978846
      %v1592 = vmul.f32 %v1584, 0.7978846
      %v1593 = vmul.f32 %v1585, 0.7978846
      %v1594 = vtanh.pop %v1586
      %v1595 = vtanh.pop %v1587
      %v1596 = vtanh.pop %v1588
      %v1597 = vtanh.pop %v1589
      %v1598 = vtanh.pop %v1590
      %v1599 = vtanh.pop %v1591
      %v1600 = vtanh.pop %v1592
      %v1601 = vtanh.pop %v1593
      %v1602 = vadd.f32 %v1594, 1.0
      %v1603 = vadd.f32 %v1595, 1.0
      %v1604 = vadd.f32 %v1596, 1.0
      %v1605 = vadd.f32 %v1597, 1.0
      %v1606 = vadd.f32 %v1598, 1.0
      %v1607 = vadd.f32 %v1599, 1.0
      %v1608 = vadd.f32 %v1600, 1.0
      %v1609 = vadd.f32 %v1601, 1.0
      %v1610 = vmul.f32 %v1546, %v1602
      %v1611 = vmul.f32 %v1547, %v1603
      %v1612 = vmul.f32 %v1548, %v1604
      %v1613 = vmul.f32 %v1549, %v1605
      %v1614 = vmul.f32 %v1550, %v1606
      %v1615 = vmul.f32 %v1551, %v1607
      %v1616 = vmul.f32 %v1552, %v1608
      %v1617 = vmul.f32 %v1553, %v1609
      %v1618 = vrot.slane %v1610, 3
      %v1619 = vrot.slane %v1611, 3
      %v1620 = vrot.slane %v1612, 3
      %v1621 = vrot.slane %v1613, 3
      %v1622 = vrot.slane %v1614, 3
      %v1623 = vrot.slane %v1615, 3
      %v1624 = vrot.slane %v1616, 3
      %v1625 = vrot.slane %v1617, 3
      %v1626 = vlaneseq
      %v1627 = vshrl.u32 %v1626, 7
      %vm1628 = vcmp.lt.s32.totalorder %v1627, 5
      %v1629 = vsel %vm1628, %v1624, %v1625
      %v1630 = vsel %vm1628, %v1623, %v1624
      %v1631 = vsel %vm1628, %v1622, %v1623
      %v1632 = vsel %vm1628, %v1621, %v1622
      %v1633 = vsel %vm1628, %v1620, %v1621
      %v1634 = vsel %vm1628, %v1619, %v1620
      %v1635 = vsel %vm1628, %v1618, %v1619
      %v1636 = vsel %vm1628, %v1625, %v1618
      %v1637 = vld [vmem:[%s10] sm:$0xff]
      %v1638 = vld [vmem:[%s10 + $0x8] sm:$0xff]
      %v1639 = vld [vmem:[%s10 + $0x10] sm:$0xff]
      %v1640 = vld [vmem:[%s10 + $0x18] sm:$0xff]
      %v1641 = vld [vmem:[%s10 + $0x20] sm:$0xff]
      %v1642 = vld [vmem:[%s10 + $0x28] sm:$0xff]
      %v1643 = vld [vmem:[%s10 + $0x30] sm:$0xff]
      %v1644 = vld [vmem:[%s10 + $0x38] sm:$0xff]
      %v1645 = vmul.f32 %v1630, %v1637
      %v1646 = vmul.f32 %v1629, %v1638
      %v1647 = vmul.f32 %v1636, %v1639
      %v1648 = vmul.f32 %v1635, %v1640
      %v1649 = vmul.f32 %v1634, %v1641
      %v1650 = vmul.f32 %v1633, %v1642
      %v1651 = vmul.f32 %v1632, %v1643
      %v1652 = vmul.f32 %v1631, %v1644
      %v1653 = vadd.f32 %v1645, 0.0
      %v1654 = vadd.f32 %v1646, 0.0
      %v1655 = vadd.f32 %v1647, 0.0
      %v1656 = vadd.f32 %v1648, 0.0
      %v1657 = vadd.f32 %v1649, 0.0
      %v1658 = vadd.f32 %v1650, 0.0
      %v1659 = vadd.f32 %v1651, 0.0
      %v1660 = vadd.f32 %v1652, 0.0
      %v1661 = vrot.slane %v1610, 4
      %v1662 = vrot.slane %v1611, 4
      %v1663 = vrot.slane %v1612, 4
      %v1664 = vrot.slane %v1613, 4
      %v1665 = vrot.slane %v1614, 4
      %v1666 = vrot.slane %v1615, 4
      %v1667 = vrot.slane %v1616, 4
      %v1668 = vrot.slane %v1617, 4
      %vm1669 = vcmp.lt.s32.totalorder %v1627, 4
      %v1670 = vsel %vm1669, %v1667, %v1668
      %v1671 = vsel %vm1669, %v1666, %v1667
      %v1672 = vsel %vm1669, %v1665, %v1666
      %v1673 = vsel %vm1669, %v1664, %v1665
      %v1674 = vsel %vm1669, %v1663, %v1664
      %v1675 = vsel %vm1669, %v1662, %v1663
      %v1676 = vsel %vm1669, %v1661, %v1662
      %v1677 = vsel %vm1669, %v1668, %v1661
      %s1678 = scalar_lea.vmem %s10, 64
      %v1679 = vld [vmem:[%s1678] sm:$0xff]
      %v1680 = vld [vmem:[%s1678 + $0x8] sm:$0xff]
      %v1681 = vld [vmem:[%s1678 + $0x10] sm:$0xff]
      %v1682 = vld [vmem:[%s1678 + $0x18] sm:$0xff]
      %v1683 = vld [vmem:[%s1678 + $0x20] sm:$0xff]
      %v1684 = vld [vmem:[%s1678 + $0x28] sm:$0xff]
      %v1685 = vld [vmem:[%s1678 + $0x30] sm:$0xff]
      %v1686 = vld [vmem:[%s1678 + $0x38] sm:$0xff]
      %v1687 = vmul.f32 %v1671, %v1679
      %v1688 = vmul.f32 %v1670, %v1680
      %v1689 = vmul.f32 %v1677, %v1681
      %v1690 = vmul.f32 %v1676, %v1682
      %v1691 = vmul.f32 %v1675, %v1683
      %v1692 = vmul.f32 %v1674, %v1684
      %v1693 = vmul.f32 %v1673, %v1685
      %v1694 = vmul.f32 %v1672, %v1686
      %v1695 = vadd.f32 %v1653, %v1687
      %v1696 = vadd.f32 %v1654, %v1688
      %v1697 = vadd.f32 %v1655, %v1689
      %v1698 = vadd.f32 %v1656, %v1690
      %v1699 = vadd.f32 %v1657, %v1691
      %v1700 = vadd.f32 %v1658, %v1692
      %v1701 = vadd.f32 %v1659, %v1693
      %v1702 = vadd.f32 %v1660, %v1694
      %v1703 = vrot.slane %v1610, 5
      %v1704 = vrot.slane %v1611, 5
      %v1705 = vrot.slane %v1612, 5
      %v1706 = vrot.slane %v1613, 5
      %v1707 = vrot.slane %v1614, 5
      %v1708 = vrot.slane %v1615, 5
      %v1709 = vrot.slane %v1616, 5
      %v1710 = vrot.slane %v1617, 5
      %vm1711 = vcmp.lt.s32.totalorder %v1627, 3
      %v1712 = vsel %vm1711, %v1709, %v1710
      %v1713 = vsel %vm1711, %v1708, %v1709
      %v1714 = vsel %vm1711, %v1707, %v1708
      %v1715 = vsel %vm1711, %v1706, %v1707
      %v1716 = vsel %vm1711, %v1705, %v1706
      %v1717 = vsel %vm1711, %v1704, %v1705
      %v1718 = vsel %vm1711, %v1703, %v1704
      %v1719 = vsel %vm1711, %v1710, %v1703
      %s1720 = scalar_lea.vmem %s10, 128
      %v1721 = vld [vmem:[%s1720] sm:$0xff]
      %v1722 = vld [vmem:[%s1720 + $0x8] sm:$0xff]
      %v1723 = vld [vmem:[%s1720 + $0x10] sm:$0xff]
      %v1724 = vld [vmem:[%s1720 + $0x18] sm:$0xff]
      %v1725 = vld [vmem:[%s1720 + $0x20] sm:$0xff]
      %v1726 = vld [vmem:[%s1720 + $0x28] sm:$0xff]
      %v1727 = vld [vmem:[%s1720 + $0x30] sm:$0xff]
      %v1728 = vld [vmem:[%s1720 + $0x38] sm:$0xff]
      %v1729 = vmul.f32 %v1713, %v1721
      %v1730 = vmul.f32 %v1712, %v1722
      %v1731 = vmul.f32 %v1719, %v1723
      %v1732 = vmul.f32 %v1718, %v1724
      %v1733 = vmul.f32 %v1717, %v1725
      %v1734 = vmul.f32 %v1716, %v1726
      %v1735 = vmul.f32 %v1715, %v1727
      %v1736 = vmul.f32 %v1714, %v1728
      %v1737 = vadd.f32 %v1695, %v1729
      %v1738 = vadd.f32 %v1696, %v1730
      %v1739 = vadd.f32 %v1697, %v1731
      %v1740 = vadd.f32 %v1698, %v1732
      %v1741 = vadd.f32 %v1699, %v1733
      %v1742 = vadd.f32 %v1700, %v1734
      %v1743 = vadd.f32 %v1701, %v1735
      %v1744 = vadd.f32 %v1702, %v1736
      %v1745 = vrot.slane %v1610, 7
      %v1746 = vrot.slane %v1611, 7
      %v1747 = vrot.slane %v1612, 7
      %v1748 = vrot.slane %v1613, 7
      %v1749 = vrot.slane %v1614, 7
      %v1750 = vrot.slane %v1615, 7
      %v1751 = vrot.slane %v1616, 7
      %v1752 = vrot.slane %v1617, 7
      %vm1753 = vcmp.lt.s32.totalorder %v1627, 1
      %v1754 = vsel %vm1753, %v1751, %v1752
      %v1755 = vsel %vm1753, %v1750, %v1751
      %v1756 = vsel %vm1753, %v1749, %v1750
      %v1757 = vsel %vm1753, %v1748, %v1749
      %v1758 = vsel %vm1753, %v1747, %v1748
      %v1759 = vsel %vm1753, %v1746, %v1747
      %v1760 = vsel %vm1753, %v1745, %v1746
      %v1761 = vsel %vm1753, %v1752, %v1745
      %s1762 = scalar_lea.vmem %s10, 192
      %v1763 = vld [vmem:[%s1762] sm:$0xff]
      %v1764 = vld [vmem:[%s1762 + $0x8] sm:$0xff]
      %v1765 = vld [vmem:[%s1762 + $0x10] sm:$0xff]
      %v1766 = vld [vmem:[%s1762 + $0x18] sm:$0xff]
      %v1767 = vld [vmem:[%s1762 + $0x20] sm:$0xff]
      %v1768 = vld [vmem:[%s1762 + $0x28] sm:$0xff]
      %v1769 = vld [vmem:[%s1762 + $0x30] sm:$0xff]
      %v1770 = vld [vmem:[%s1762 + $0x38] sm:$0xff]
      %v1771 = vmul.f32 %v1755, %v1763
      %v1772 = vmul.f32 %v1754, %v1764
      %v1773 = vmul.f32 %v1761, %v1765
      %v1774 = vmul.f32 %v1760, %v1766
      %v1775 = vmul.f32 %v1759, %v1767
      %v1776 = vmul.f32 %v1758, %v1768
      %v1777 = vmul.f32 %v1757, %v1769
      %v1778 = vmul.f32 %v1756, %v1770
      %v1779 = vadd.f32 %v1737, %v1771
      %v1780 = vadd.f32 %v1738, %v1772
      %v1781 = vadd.f32 %v1739, %v1773
      %v1782 = vadd.f32 %v1740, %v1774
      %v1783 = vadd.f32 %v1741, %v1775
      %v1784 = vadd.f32 %v1742, %v1776
      %v1785 = vadd.f32 %v1743, %v1777
      %v1786 = vadd.f32 %v1744, %v1778
      %s1787 = scalar_lea.vmem %s10, 256
      %v1788 = vld [vmem:[%s1787] sm:$0xff]
      %v1789 = vld [vmem:[%s1787 + $0x8] sm:$0xff]
      %v1790 = vld [vmem:[%s1787 + $0x10] sm:$0xff]
      %v1791 = vld [vmem:[%s1787 + $0x18] sm:$0xff]
      %v1792 = vld [vmem:[%s1787 + $0x20] sm:$0xff]
      %v1793 = vld [vmem:[%s1787 + $0x28] sm:$0xff]
      %v1794 = vld [vmem:[%s1787 + $0x30] sm:$0xff]
      %v1795 = vld [vmem:[%s1787 + $0x38] sm:$0xff]
      %v1796 = vmul.f32 %v1616, %v1788
      %v1797 = vmul.f32 %v1617, %v1789
      %v1798 = vmul.f32 %v1610, %v1790
      %v1799 = vmul.f32 %v1611, %v1791
      %v1800 = vmul.f32 %v1612, %v1792
      %v1801 = vmul.f32 %v1613, %v1793
      %v1802 = vmul.f32 %v1614, %v1794
      %v1803 = vmul.f32 %v1615, %v1795
      %v1804 = vadd.f32 %v1779, %v1796
      %v1805 = vadd.f32 %v1780, %v1797
      %v1806 = vadd.f32 %v1781, %v1798
      %v1807 = vadd.f32 %v1782, %v1799
      %v1808 = vadd.f32 %v1783, %v1800
      %v1809 = vadd.f32 %v1784, %v1801
      %v1810 = vadd.f32 %v1785, %v1802
      %v1811 = vadd.f32 %v1786, %v1803
      %v1812 = vrot.slane %v1610, 1
      %v1813 = vrot.slane %v1611, 1
      %v1814 = vrot.slane %v1612, 1
      %v1815 = vrot.slane %v1613, 1
      %v1816 = vrot.slane %v1614, 1
      %v1817 = vrot.slane %v1615, 1
      %v1818 = vrot.slane %v1616, 1
      %v1819 = vrot.slane %v1617, 1
      %vm1820 = vcmp.lt.s32.totalorder %v1627, 7
      %v1821 = vsel %vm1820, %v1818, %v1819
      %v1822 = vsel %vm1820, %v1817, %v1818
      %v1823 = vsel %vm1820, %v1816, %v1817
      %v1824 = vsel %vm1820, %v1815, %v1816
      %v1825 = vsel %vm1820, %v1814, %v1815
      %v1826 = vsel %vm1820, %v1813, %v1814
      %v1827 = vsel %vm1820, %v1812, %v1813
      %v1828 = vsel %vm1820, %v1819, %v1812
      %s1829 = scalar_lea.vmem %s10, 320
      %v1830 = vld [vmem:[%s1829] sm:$0xff]
      %v1831 = vld [vmem:[%s1829 + $0x8] sm:$0xff]
      %v1832 = vld [vmem:[%s1829 + $0x10] sm:$0xff]
      %v1833 = vld [vmem:[%s1829 + $0x18] sm:$0xff]
      %v1834 = vld [vmem:[%s1829 + $0x20] sm:$0xff]
      %v1835 = vld [vmem:[%s1829 + $0x28] sm:$0xff]
      %v1836 = vld [vmem:[%s1829 + $0x30] sm:$0xff]
      %v1837 = vld [vmem:[%s1829 + $0x38] sm:$0xff]
      %v1838 = vmul.f32 %v1821, %v1830
      %v1839 = vmul.f32 %v1828, %v1831
      %v1840 = vmul.f32 %v1827, %v1832
      %v1841 = vmul.f32 %v1826, %v1833
      %v1842 = vmul.f32 %v1825, %v1834
      %v1843 = vmul.f32 %v1824, %v1835
      %v1844 = vmul.f32 %v1823, %v1836
      %v1845 = vmul.f32 %v1822, %v1837
      %v1846 = vadd.f32 %v1804, %v1838
      %v1847 = vadd.f32 %v1805, %v1839
      %v1848 = vadd.f32 %v1806, %v1840
      %v1849 = vadd.f32 %v1807, %v1841
      %v1850 = vadd.f32 %v1808, %v1842
      %v1851 = vadd.f32 %v1809, %v1843
      %v1852 = vadd.f32 %v1810, %v1844
      %v1853 = vadd.f32 %v1811, %v1845
      %s1854 = scalar_lea.vmem %s10, 384
      %v1855 = vld [vmem:[%s1854] sm:$0xff]
      %v1856 = vld [vmem:[%s1854 + $0x8] sm:$0xff]
      %v1857 = vld [vmem:[%s1854 + $0x10] sm:$0xff]
      %v1858 = vld [vmem:[%s1854 + $0x18] sm:$0xff]
      %v1859 = vld [vmem:[%s1854 + $0x20] sm:$0xff]
      %v1860 = vld [vmem:[%s1854 + $0x28] sm:$0xff]
      %v1861 = vld [vmem:[%s1854 + $0x30] sm:$0xff]
      %v1862 = vld [vmem:[%s1854 + $0x38] sm:$0xff]
      %v1863 = vmul.f32 %v1629, %v1855
      %v1864 = vmul.f32 %v1636, %v1856
      %v1865 = vmul.f32 %v1635, %v1857
      %v1866 = vmul.f32 %v1634, %v1858
      %v1867 = vmul.f32 %v1633, %v1859
      %v1868 = vmul.f32 %v1632, %v1860
      %v1869 = vmul.f32 %v1631, %v1861
      %v1870 = vmul.f32 %v1630, %v1862
      %v1871 = vadd.f32 %v1846, %v1863
      %v1872 = vadd.f32 %v1847, %v1864
      %v1873 = vadd.f32 %v1848, %v1865
      %v1874 = vadd.f32 %v1849, %v1866
      %v1875 = vadd.f32 %v1850, %v1867
      %v1876 = vadd.f32 %v1851, %v1868
      %v1877 = vadd.f32 %v1852, %v1869
      %v1878 = vadd.f32 %v1853, %v1870
      %s1879 = scalar_lea.vmem %s10, 448
      %v1880 = vld [vmem:[%s1879] sm:$0xff]
      %v1881 = vld [vmem:[%s1879 + $0x8] sm:$0xff]
      %v1882 = vld [vmem:[%s1879 + $0x10] sm:$0xff]
      %v1883 = vld [vmem:[%s1879 + $0x18] sm:$0xff]
      %v1884 = vld [vmem:[%s1879 + $0x20] sm:$0xff]
      %v1885 = vld [vmem:[%s1879 + $0x28] sm:$0xff]
      %v1886 = vld [vmem:[%s1879 + $0x30] sm:$0xff]
      %v1887 = vld [vmem:[%s1879 + $0x38] sm:$0xff]
      %v1888 = vmul.f32 %v1670, %v1880
      %v1889 = vmul.f32 %v1677, %v1881
      %v1890 = vmul.f32 %v1676, %v1882
      %v1891 = vmul.f32 %v1675, %v1883
      %v1892 = vmul.f32 %v1674, %v1884
      %v1893 = vmul.f32 %v1673, %v1885
      %v1894 = vmul.f32 %v1672, %v1886
      %v1895 = vmul.f32 %v1671, %v1887
      %v1896 = vadd.f32 %v1871, %v1888
      %v1897 = vadd.f32 %v1872, %v1889
      %v1898 = vadd.f32 %v1873, %v1890
      %v1899 = vadd.f32 %v1874, %v1891
      %v1900 = vadd.f32 %v1875, %v1892
      %v1901 = vadd.f32 %v1876, %v1893
      %v1902 = vadd.f32 %v1877, %v1894
      %v1903 = vadd.f32 %v1878, %v1895
      %s1904 = scalar_lea.vmem %s10, 512
      %v1905 = vld [vmem:[%s1904] sm:$0xff]
      %v1906 = vld [vmem:[%s1904 + $0x8] sm:$0xff]
      %v1907 = vld [vmem:[%s1904 + $0x10] sm:$0xff]
      %v1908 = vld [vmem:[%s1904 + $0x18] sm:$0xff]
      %v1909 = vld [vmem:[%s1904 + $0x20] sm:$0xff]
      %v1910 = vld [vmem:[%s1904 + $0x28] sm:$0xff]
      %v1911 = vld [vmem:[%s1904 + $0x30] sm:$0xff]
      %v1912 = vld [vmem:[%s1904 + $0x38] sm:$0xff]
      %v1913 = vmul.f32 %v1712, %v1905
      %v1914 = vmul.f32 %v1719, %v1906
      %v1915 = vmul.f32 %v1718, %v1907
      %v1916 = vmul.f32 %v1717, %v1908
      %v1917 = vmul.f32 %v1716, %v1909
      %v1918 = vmul.f32 %v1715, %v1910
      %v1919 = vmul.f32 %v1714, %v1911
      %v1920 = vmul.f32 %v1713, %v1912
      %v1921 = vadd.f32 %v1896, %v1913
      %v1922 = vadd.f32 %v1897, %v1914
      %v1923 = vadd.f32 %v1898, %v1915
      %v1924 = vadd.f32 %v1899, %v1916
      %v1925 = vadd.f32 %v1900, %v1917
      %v1926 = vadd.f32 %v1901, %v1918
      %v1927 = vadd.f32 %v1902, %v1919
      %v1928 = vadd.f32 %v1903, %v1920
      %s1929 = scalar_lea.vmem %s10, 576
      %v1930 = vld [vmem:[%s1929] sm:$0xff]
      %v1931 = vld [vmem:[%s1929 + $0x8] sm:$0xff]
      %v1932 = vld [vmem:[%s1929 + $0x10] sm:$0xff]
      %v1933 = vld [vmem:[%s1929 + $0x18] sm:$0xff]
      %v1934 = vld [vmem:[%s1929 + $0x20] sm:$0xff]
      %v1935 = vld [vmem:[%s1929 + $0x28] sm:$0xff]
      %v1936 = vld [vmem:[%s1929 + $0x30] sm:$0xff]
      %v1937 = vld [vmem:[%s1929 + $0x38] sm:$0xff]
      %v1938 = vmul.f32 %v1636, %v1930
      %v1939 = vmul.f32 %v1635, %v1931
      %v1940 = vmul.f32 %v1634, %v1932
      %v1941 = vmul.f32 %v1633, %v1933
      %v1942 = vmul.f32 %v1632, %v1934
      %v1943 = vmul.f32 %v1631, %v1935
      %v1944 = vmul.f32 %v1630, %v1936
      %v1945 = vmul.f32 %v1629, %v1937
      %v1946 = vadd.f32 %v1921, %v1938
      %v1947 = vadd.f32 %v1922, %v1939
      %v1948 = vadd.f32 %v1923, %v1940
      %v1949 = vadd.f32 %v1924, %v1941
      %v1950 = vadd.f32 %v1925, %v1942
      %v1951 = vadd.f32 %v1926, %v1943
      %v1952 = vadd.f32 %v1927, %v1944
      %v1953 = vadd.f32 %v1928, %v1945
      %s1954 = scalar_lea.vmem %s10, 640
      %v1955 = vld [vmem:[%s1954] sm:$0xff]
      %v1956 = vld [vmem:[%s1954 + $0x8] sm:$0xff]
      %v1957 = vld [vmem:[%s1954 + $0x10] sm:$0xff]
      %v1958 = vld [vmem:[%s1954 + $0x18] sm:$0xff]
      %v1959 = vld [vmem:[%s1954 + $0x20] sm:$0xff]
      %v1960 = vld [vmem:[%s1954 + $0x28] sm:$0xff]
      %v1961 = vld [vmem:[%s1954 + $0x30] sm:$0xff]
      %v1962 = vld [vmem:[%s1954 + $0x38] sm:$0xff]
      %v1963 = vmul.f32 %v1677, %v1955
      %v1964 = vmul.f32 %v1676, %v1956
      %v1965 = vmul.f32 %v1675, %v1957
      %v1966 = vmul.f32 %v1674, %v1958
      %v1967 = vmul.f32 %v1673, %v1959
      %v1968 = vmul.f32 %v1672, %v1960
      %v1969 = vmul.f32 %v1671, %v1961
      %v1970 = vmul.f32 %v1670, %v1962
      %v1971 = vadd.f32 %v1946, %v1963
      %v1972 = vadd.f32 %v1947, %v1964
      %v1973 = vadd.f32 %v1948, %v1965
      %v1974 = vadd.f32 %v1949, %v1966
      %v1975 = vadd.f32 %v1950, %v1967
      %v1976 = vadd.f32 %v1951, %v1968
      %v1977 = vadd.f32 %v1952, %v1969
      %v1978 = vadd.f32 %v1953, %v1970
      %s1979 = scalar_lea.vmem %s10, 704
      %v1980 = vld [vmem:[%s1979] sm:$0xff]
      %v1981 = vld [vmem:[%s1979 + $0x8] sm:$0xff]
      %v1982 = vld [vmem:[%s1979 + $0x10] sm:$0xff]
      %v1983 = vld [vmem:[%s1979 + $0x18] sm:$0xff]
      %v1984 = vld [vmem:[%s1979 + $0x20] sm:$0xff]
      %v1985 = vld [vmem:[%s1979 + $0x28] sm:$0xff]
      %v1986 = vld [vmem:[%s1979 + $0x30] sm:$0xff]
      %v1987 = vld [vmem:[%s1979 + $0x38] sm:$0xff]
      %v1988 = vmul.f32 %v1719, %v1980
      %v1989 = vmul.f32 %v1718, %v1981
      %v1990 = vmul.f32 %v1717, %v1982
      %v1991 = vmul.f32 %v1716, %v1983
      %v1992 = vmul.f32 %v1715, %v1984
      %v1993 = vmul.f32 %v1714, %v1985
      %v1994 = vmul.f32 %v1713, %v1986
      %v1995 = vmul.f32 %v1712, %v1987
      %v1996 = vadd.f32 %v1971, %v1988
      %v1997 = vadd.f32 %v1972, %v1989
      %v1998 = vadd.f32 %v1973, %v1990
      %v1999 = vadd.f32 %v1974, %v1991
      %v2000 = vadd.f32 %v1975, %v1992
      %v2001 = vadd.f32 %v1976, %v1993
      %v2002 = vadd.f32 %v1977, %v1994
      %v2003 = vadd.f32 %v1978, %v1995
      %s2004 = scalar_lea.vmem %s10, 768
      %v2005 = vld [vmem:[%s2004] sm:$0xff]
      %v2006 = vld [vmem:[%s2004 + $0x8] sm:$0xff]
      %v2007 = vld [vmem:[%s2004 + $0x10] sm:$0xff]
      %v2008 = vld [vmem:[%s2004 + $0x18] sm:$0xff]
      %v2009 = vld [vmem:[%s2004 + $0x20] sm:$0xff]
      %v2010 = vld [vmem:[%s2004 + $0x28] sm:$0xff]
      %v2011 = vld [vmem:[%s2004 + $0x30] sm:$0xff]
      %v2012 = vld [vmem:[%s2004 + $0x38] sm:$0xff]
      %v2013 = vmul.f32 %v1761, %v2005
      %v2014 = vmul.f32 %v1760, %v2006
      %v2015 = vmul.f32 %v1759, %v2007
      %v2016 = vmul.f32 %v1758, %v2008
      %v2017 = vmul.f32 %v1757, %v2009
      %v2018 = vmul.f32 %v1756, %v2010
      %v2019 = vmul.f32 %v1755, %v2011
      %v2020 = vmul.f32 %v1754, %v2012
      %v2021 = vadd.f32 %v1996, %v2013
      %v2022 = vadd.f32 %v1997, %v2014
      %v2023 = vadd.f32 %v1998, %v2015
      %v2024 = vadd.f32 %v1999, %v2016
      %v2025 = vadd.f32 %v2000, %v2017
      %v2026 = vadd.f32 %v2001, %v2018
      %v2027 = vadd.f32 %v2002, %v2019
      %v2028 = vadd.f32 %v2003, %v2020
      %s2029 = scalar_lea.vmem %s10, 832
      %v2030 = vld [vmem:[%s2029] sm:$0xff]
      %v2031 = vld [vmem:[%s2029 + $0x8] sm:$0xff]
      %v2032 = vld [vmem:[%s2029 + $0x10] sm:$0xff]
      %v2033 = vld [vmem:[%s2029 + $0x18] sm:$0xff]
      %v2034 = vld [vmem:[%s2029 + $0x20] sm:$0xff]
      %v2035 = vld [vmem:[%s2029 + $0x28] sm:$0xff]
      %v2036 = vld [vmem:[%s2029 + $0x30] sm:$0xff]
      %v2037 = vld [vmem:[%s2029 + $0x38] sm:$0xff]
      %v2038 = vmul.f32 %v1610, %v2030
      %v2039 = vmul.f32 %v1611, %v2031
      %v2040 = vmul.f32 %v1612, %v2032
      %v2041 = vmul.f32 %v1613, %v2033
      %v2042 = vmul.f32 %v1614, %v2034
      %v2043 = vmul.f32 %v1615, %v2035
      %v2044 = vmul.f32 %v1616, %v2036
      %v2045 = vmul.f32 %v1617, %v2037
      %v2046 = vadd.f32 %v2021, %v2038
      %v2047 = vadd.f32 %v2022, %v2039
      %v2048 = vadd.f32 %v2023, %v2040
      %v2049 = vadd.f32 %v2024, %v2041
      %v2050 = vadd.f32 %v2025, %v2042
      %v2051 = vadd.f32 %v2026, %v2043
      %v2052 = vadd.f32 %v2027, %v2044
      %v2053 = vadd.f32 %v2028, %v2045
      %s2054 = scalar_lea.vmem %s10, 896
      %v2055 = vld [vmem:[%s2054] sm:$0xff]
      %v2056 = vld [vmem:[%s2054 + $0x8] sm:$0xff]
      %v2057 = vld [vmem:[%s2054 + $0x10] sm:$0xff]
      %v2058 = vld [vmem:[%s2054 + $0x18] sm:$0xff]
      %v2059 = vld [vmem:[%s2054 + $0x20] sm:$0xff]
      %v2060 = vld [vmem:[%s2054 + $0x28] sm:$0xff]
      %v2061 = vld [vmem:[%s2054 + $0x30] sm:$0xff]
      %v2062 = vld [vmem:[%s2054 + $0x38] sm:$0xff]
      %v2063 = vmul.f32 %v1827, %v2055
      %v2064 = vmul.f32 %v1826, %v2056
      %v2065 = vmul.f32 %v1825, %v2057
      %v2066 = vmul.f32 %v1824, %v2058
      %v2067 = vmul.f32 %v1823, %v2059
      %v2068 = vmul.f32 %v1822, %v2060
      %v2069 = vmul.f32 %v1821, %v2061
      %v2070 = vmul.f32 %v1828, %v2062
      %v2071 = vadd.f32 %v2046, %v2063
      %v2072 = vadd.f32 %v2047, %v2064
      %v2073 = vadd.f32 %v2048, %v2065
      %v2074 = vadd.f32 %v2049, %v2066
      %v2075 = vadd.f32 %v2050, %v2067
      %v2076 = vadd.f32 %v2051, %v2068
      %v2077 = vadd.f32 %v2052, %v2069
      %v2078 = vadd.f32 %v2053, %v2070
      %s2079 = scalar_lea.vmem %s10, 960
      %v2080 = vld [vmem:[%s2079] sm:$0xff]
      %v2081 = vld [vmem:[%s2079 + $0x8] sm:$0xff]
      %v2082 = vld [vmem:[%s2079 + $0x10] sm:$0xff]
      %v2083 = vld [vmem:[%s2079 + $0x18] sm:$0xff]
      %v2084 = vld [vmem:[%s2079 + $0x20] sm:$0xff]
      %v2085 = vld [vmem:[%s2079 + $0x28] sm:$0xff]
      %v2086 = vld [vmem:[%s2079 + $0x30] sm:$0xff]
      %v2087 = vld [vmem:[%s2079 + $0x38] sm:$0xff]
      %v2088 = vmul.f32 %v1635, %v2080
      %v2089 = vmul.f32 %v1634, %v2081
      %v2090 = vmul.f32 %v1633, %v2082
      %v2091 = vmul.f32 %v1632, %v2083
      %v2092 = vmul.f32 %v1631, %v2084
      %v2093 = vmul.f32 %v1630, %v2085
      %v2094 = vmul.f32 %v1629, %v2086
      %v2095 = vmul.f32 %v1636, %v2087
      %v2096 = vadd.f32 %v2071, %v2088
      %v2097 = vadd.f32 %v2072, %v2089
      %v2098 = vadd.f32 %v2073, %v2090
      %v2099 = vadd.f32 %v2074, %v2091
      %v2100 = vadd.f32 %v2075, %v2092
      %v2101 = vadd.f32 %v2076, %v2093
      %v2102 = vadd.f32 %v2077, %v2094
      %v2103 = vadd.f32 %v2078, %v2095
      %s2104 = scalar_lea.vmem %s10, 1024
      %v2105 = vld [vmem:[%s2104] sm:$0xff]
      %v2106 = vld [vmem:[%s2104 + $0x8] sm:$0xff]
      %v2107 = vld [vmem:[%s2104 + $0x10] sm:$0xff]
      %v2108 = vld [vmem:[%s2104 + $0x18] sm:$0xff]
      %v2109 = vld [vmem:[%s2104 + $0x20] sm:$0xff]
      %v2110 = vld [vmem:[%s2104 + $0x28] sm:$0xff]
      %v2111 = vld [vmem:[%s2104 + $0x30] sm:$0xff]
      %v2112 = vld [vmem:[%s2104 + $0x38] sm:$0xff]
      %v2113 = vmul.f32 %v1676, %v2105
      %v2114 = vmul.f32 %v1675, %v2106
      %v2115 = vmul.f32 %v1674, %v2107
      %v2116 = vmul.f32 %v1673, %v2108
      %v2117 = vmul.f32 %v1672, %v2109
      %v2118 = vmul.f32 %v1671, %v2110
      %v2119 = vmul.f32 %v1670, %v2111
      %v2120 = vmul.f32 %v1677, %v2112
      %v2121 = vadd.f32 %v2096, %v2113
      %v2122 = vadd.f32 %v2097, %v2114
      %v2123 = vadd.f32 %v2098, %v2115
      %v2124 = vadd.f32 %v2099, %v2116
      %v2125 = vadd.f32 %v2100, %v2117
      %v2126 = vadd.f32 %v2101, %v2118
      %v2127 = vadd.f32 %v2102, %v2119
      %v2128 = vadd.f32 %v2103, %v2120
      %s2129 = scalar_lea.vmem %s10, 1088
      %v2130 = vld [vmem:[%s2129] sm:$0xff]
      %v2131 = vld [vmem:[%s2129 + $0x8] sm:$0xff]
      %v2132 = vld [vmem:[%s2129 + $0x10] sm:$0xff]
      %v2133 = vld [vmem:[%s2129 + $0x18] sm:$0xff]
      %v2134 = vld [vmem:[%s2129 + $0x20] sm:$0xff]
      %v2135 = vld [vmem:[%s2129 + $0x28] sm:$0xff]
      %v2136 = vld [vmem:[%s2129 + $0x30] sm:$0xff]
      %v2137 = vld [vmem:[%s2129 + $0x38] sm:$0xff]
      %v2138 = vmul.f32 %v1718, %v2130
      %v2139 = vmul.f32 %v1717, %v2131
      %v2140 = vmul.f32 %v1716, %v2132
      %v2141 = vmul.f32 %v1715, %v2133
      %v2142 = vmul.f32 %v1714, %v2134
      %v2143 = vmul.f32 %v1713, %v2135
      %v2144 = vmul.f32 %v1712, %v2136
      %v2145 = vmul.f32 %v1719, %v2137
      %v2146 = vadd.f32 %v2121, %v2138
      %v2147 = vadd.f32 %v2122, %v2139
      %v2148 = vadd.f32 %v2123, %v2140
      %v2149 = vadd.f32 %v2124, %v2141
      %v2150 = vadd.f32 %v2125, %v2142
      %v2151 = vadd.f32 %v2126, %v2143
      %v2152 = vadd.f32 %v2127, %v2144
      %v2153 = vadd.f32 %v2128, %v2145
      %s2154 = scalar_lea.vmem %s10, 1152
      %v2155 = vld [vmem:[%s2154] sm:$0xff]
      %v2156 = vld [vmem:[%s2154 + $0x8] sm:$0xff]
      %v2157 = vld [vmem:[%s2154 + $0x10] sm:$0xff]
      %v2158 = vld [vmem:[%s2154 + $0x18] sm:$0xff]
      %v2159 = vld [vmem:[%s2154 + $0x20] sm:$0xff]
      %v2160 = vld [vmem:[%s2154 + $0x28] sm:$0xff]
      %v2161 = vld [vmem:[%s2154 + $0x30] sm:$0xff]
      %v2162 = vld [vmem:[%s2154 + $0x38] sm:$0xff]
      %v2163 = vmul.f32 %v1634, %v2155
      %v2164 = vmul.f32 %v1633, %v2156
      %v2165 = vmul.f32 %v1632, %v2157
      %v2166 = vmul.f32 %v1631, %v2158
      %v2167 = vmul.f32 %v1630, %v2159
      %v2168 = vmul.f32 %v1629, %v2160
      %v2169 = vmul.f32 %v1636, %v2161
      %v2170 = vmul.f32 %v1635, %v2162
      %v2171 = vadd.f32 %v2146, %v2163
      %v2172 = vadd.f32 %v2147, %v2164
      %v2173 = vadd.f32 %v2148, %v2165
      %v2174 = vadd.f32 %v2149, %v2166
      %v2175 = vadd.f32 %v2150, %v2167
      %v2176 = vadd.f32 %v2151, %v2168
      %v2177 = vadd.f32 %v2152, %v2169
      %v2178 = vadd.f32 %v2153, %v2170
      %s2179 = scalar_lea.vmem %s10, 1216
      %v2180 = vld [vmem:[%s2179] sm:$0xff]
      %v2181 = vld [vmem:[%s2179 + $0x8] sm:$0xff]
      %v2182 = vld [vmem:[%s2179 + $0x10] sm:$0xff]
      %v2183 = vld [vmem:[%s2179 + $0x18] sm:$0xff]
      %v2184 = vld [vmem:[%s2179 + $0x20] sm:$0xff]
      %v2185 = vld [vmem:[%s2179 + $0x28] sm:$0xff]
      %v2186 = vld [vmem:[%s2179 + $0x30] sm:$0xff]
      %v2187 = vld [vmem:[%s2179 + $0x38] sm:$0xff]
      %v2188 = vmul.f32 %v1675, %v2180
      %v2189 = vmul.f32 %v1674, %v2181
      %v2190 = vmul.f32 %v1673, %v2182
      %v2191 = vmul.f32 %v1672, %v2183
      %v2192 = vmul.f32 %v1671, %v2184
      %v2193 = vmul.f32 %v1670, %v2185
      %v2194 = vmul.f32 %v1677, %v2186
      %v2195 = vmul.f32 %v1676, %v2187
      %v2196 = vadd.f32 %v2171, %v2188
      %v2197 = vadd.f32 %v2172, %v2189
      %v2198 = vadd.f32 %v2173, %v2190
      %v2199 = vadd.f32 %v2174, %v2191
      %v2200 = vadd.f32 %v2175, %v2192
      %v2201 = vadd.f32 %v2176, %v2193
      %v2202 = vadd.f32 %v2177, %v2194
      %v2203 = vadd.f32 %v2178, %v2195
      %s2204 = scalar_lea.vmem %s10, 1280
      %v2205 = vld [vmem:[%s2204] sm:$0xff]
      %v2206 = vld [vmem:[%s2204 + $0x8] sm:$0xff]
      %v2207 = vld [vmem:[%s2204 + $0x10] sm:$0xff]
      %v2208 = vld [vmem:[%s2204 + $0x18] sm:$0xff]
      %v2209 = vld [vmem:[%s2204 + $0x20] sm:$0xff]
      %v2210 = vld [vmem:[%s2204 + $0x28] sm:$0xff]
      %v2211 = vld [vmem:[%s2204 + $0x30] sm:$0xff]
      %v2212 = vld [vmem:[%s2204 + $0x38] sm:$0xff]
      %v2213 = vmul.f32 %v1717, %v2205
      %v2214 = vmul.f32 %v1716, %v2206
      %v2215 = vmul.f32 %v1715, %v2207
      %v2216 = vmul.f32 %v1714, %v2208
      %v2217 = vmul.f32 %v1713, %v2209
      %v2218 = vmul.f32 %v1712, %v2210
      %v2219 = vmul.f32 %v1719, %v2211
      %v2220 = vmul.f32 %v1718, %v2212
      %v2221 = vadd.f32 %v2196, %v2213
      %v2222 = vadd.f32 %v2197, %v2214
      %v2223 = vadd.f32 %v2198, %v2215
      %v2224 = vadd.f32 %v2199, %v2216
      %v2225 = vadd.f32 %v2200, %v2217
      %v2226 = vadd.f32 %v2201, %v2218
      %v2227 = vadd.f32 %v2202, %v2219
      %v2228 = vadd.f32 %v2203, %v2220
      %s2229 = scalar_lea.vmem %s10, 1344
      %v2230 = vld [vmem:[%s2229] sm:$0xff]
      %v2231 = vld [vmem:[%s2229 + $0x8] sm:$0xff]
      %v2232 = vld [vmem:[%s2229 + $0x10] sm:$0xff]
      %v2233 = vld [vmem:[%s2229 + $0x18] sm:$0xff]
      %v2234 = vld [vmem:[%s2229 + $0x20] sm:$0xff]
      %v2235 = vld [vmem:[%s2229 + $0x28] sm:$0xff]
      %v2236 = vld [vmem:[%s2229 + $0x30] sm:$0xff]
      %v2237 = vld [vmem:[%s2229 + $0x38] sm:$0xff]
      %v2238 = vmul.f32 %v1759, %v2230
      %v2239 = vmul.f32 %v1758, %v2231
      %v2240 = vmul.f32 %v1757, %v2232
      %v2241 = vmul.f32 %v1756, %v2233
      %v2242 = vmul.f32 %v1755, %v2234
      %v2243 = vmul.f32 %v1754, %v2235
      %v2244 = vmul.f32 %v1761, %v2236
      %v2245 = vmul.f32 %v1760, %v2237
      %v2246 = vadd.f32 %v2221, %v2238
      %v2247 = vadd.f32 %v2222, %v2239
      %v2248 = vadd.f32 %v2223, %v2240
      %v2249 = vadd.f32 %v2224, %v2241
      %v2250 = vadd.f32 %v2225, %v2242
      %v2251 = vadd.f32 %v2226, %v2243
      %v2252 = vadd.f32 %v2227, %v2244
      %v2253 = vadd.f32 %v2228, %v2245
      %s2254 = scalar_lea.vmem %s10, 1408
      %v2255 = vld [vmem:[%s2254] sm:$0xff]
      %v2256 = vld [vmem:[%s2254 + $0x8] sm:$0xff]
      %v2257 = vld [vmem:[%s2254 + $0x10] sm:$0xff]
      %v2258 = vld [vmem:[%s2254 + $0x18] sm:$0xff]
      %v2259 = vld [vmem:[%s2254 + $0x20] sm:$0xff]
      %v2260 = vld [vmem:[%s2254 + $0x28] sm:$0xff]
      %v2261 = vld [vmem:[%s2254 + $0x30] sm:$0xff]
      %v2262 = vld [vmem:[%s2254 + $0x38] sm:$0xff]
      %v2263 = vmul.f32 %v1612, %v2255
      %v2264 = vmul.f32 %v1613, %v2256
      %v2265 = vmul.f32 %v1614, %v2257
      %v2266 = vmul.f32 %v1615, %v2258
      %v2267 = vmul.f32 %v1616, %v2259
      %v2268 = vmul.f32 %v1617, %v2260
      %v2269 = vmul.f32 %v1610, %v2261
      %v2270 = vmul.f32 %v1611, %v2262
      %v2271 = vadd.f32 %v2246, %v2263
      %v2272 = vadd.f32 %v2247, %v2264
      %v2273 = vadd.f32 %v2248, %v2265
      %v2274 = vadd.f32 %v2249, %v2266
      %v2275 = vadd.f32 %v2250, %v2267
      %v2276 = vadd.f32 %v2251, %v2268
      %v2277 = vadd.f32 %v2252, %v2269
      %v2278 = vadd.f32 %v2253, %v2270
      %s2279 = scalar_lea.vmem %s10, 1472
      %v2280 = vld [vmem:[%s2279] sm:$0xff]
      %v2281 = vld [vmem:[%s2279 + $0x8] sm:$0xff]
      %v2282 = vld [vmem:[%s2279 + $0x10] sm:$0xff]
      %v2283 = vld [vmem:[%s2279 + $0x18] sm:$0xff]
      %v2284 = vld [vmem:[%s2279 + $0x20] sm:$0xff]
      %v2285 = vld [vmem:[%s2279 + $0x28] sm:$0xff]
      %v2286 = vld [vmem:[%s2279 + $0x30] sm:$0xff]
      %v2287 = vld [vmem:[%s2279 + $0x38] sm:$0xff]
      %v2288 = vmul.f32 %v1825, %v2280
      %v2289 = vmul.f32 %v1824, %v2281
      %v2290 = vmul.f32 %v1823, %v2282
      %v2291 = vmul.f32 %v1822, %v2283
      %v2292 = vmul.f32 %v1821, %v2284
      %v2293 = vmul.f32 %v1828, %v2285
      %v2294 = vmul.f32 %v1827, %v2286
      %v2295 = vmul.f32 %v1826, %v2287
      %v2296 = vadd.f32 %v2271, %v2288
      %v2297 = vadd.f32 %v2272, %v2289
      %v2298 = vadd.f32 %v2273, %v2290
      %v2299 = vadd.f32 %v2274, %v2291
      %v2300 = vadd.f32 %v2275, %v2292
      %v2301 = vadd.f32 %v2276, %v2293
      %v2302 = vadd.f32 %v2277, %v2294
      %v2303 = vadd.f32 %v2278, %v2295
      %s2304 = scalar_lea.vmem %s10, 1536
      %v2305 = vld [vmem:[%s2304] sm:$0xff]
      %v2306 = vld [vmem:[%s2304 + $0x8] sm:$0xff]
      %v2307 = vld [vmem:[%s2304 + $0x10] sm:$0xff]
      %v2308 = vld [vmem:[%s2304 + $0x18] sm:$0xff]
      %v2309 = vld [vmem:[%s2304 + $0x20] sm:$0xff]
      %v2310 = vld [vmem:[%s2304 + $0x28] sm:$0xff]
      %v2311 = vld [vmem:[%s2304 + $0x30] sm:$0xff]
      %v2312 = vld [vmem:[%s2304 + $0x38] sm:$0xff]
      %v2313 = vmul.f32 %v1633, %v2305
      %v2314 = vmul.f32 %v1632, %v2306
      %v2315 = vmul.f32 %v1631, %v2307
      %v2316 = vmul.f32 %v1630, %v2308
      %v2317 = vmul.f32 %v1629, %v2309
      %v2318 = vmul.f32 %v1636, %v2310
      %v2319 = vmul.f32 %v1635, %v2311
      %v2320 = vmul.f32 %v1634, %v2312
      %v2321 = vadd.f32 %v2296, %v2313
      %v2322 = vadd.f32 %v2297, %v2314
      %v2323 = vadd.f32 %v2298, %v2315
      %v2324 = vadd.f32 %v2299, %v2316
      %v2325 = vadd.f32 %v2300, %v2317
      %v2326 = vadd.f32 %v2301, %v2318
      %v2327 = vadd.f32 %v2302, %v2319
      %v2328 = vadd.f32 %v2303, %v2320
      %s2329 = scalar_lea.vmem %s10, 1600
      %v2330 = vld [vmem:[%s2329] sm:$0xff]
      %v2331 = vld [vmem:[%s2329 + $0x8] sm:$0xff]
      %v2332 = vld [vmem:[%s2329 + $0x10] sm:$0xff]
      %v2333 = vld [vmem:[%s2329 + $0x18] sm:$0xff]
      %v2334 = vld [vmem:[%s2329 + $0x20] sm:$0xff]
      %v2335 = vld [vmem:[%s2329 + $0x28] sm:$0xff]
      %v2336 = vld [vmem:[%s2329 + $0x30] sm:$0xff]
      %v2337 = vld [vmem:[%s2329 + $0x38] sm:$0xff]
      %v2338 = vmul.f32 %v1674, %v2330
      %v2339 = vmul.f32 %v1673, %v2331
      %v2340 = vmul.f32 %v1672, %v2332
      %v2341 = vmul.f32 %v1671, %v2333
      %v2342 = vmul.f32 %v1670, %v2334
      %v2343 = vmul.f32 %v1677, %v2335
      %v2344 = vmul.f32 %v1676, %v2336
      %v2345 = vmul.f32 %v1675, %v2337
      %v2346 = vadd.f32 %v2321, %v2338
      %v2347 = vadd.f32 %v2322, %v2339
      %v2348 = vadd.f32 %v2323, %v2340
      %v2349 = vadd.f32 %v2324, %v2341
      %v2350 = vadd.f32 %v2325, %v2342
      %v2351 = vadd.f32 %v2326, %v2343
      %v2352 = vadd.f32 %v2327, %v2344
      %v2353 = vadd.f32 %v2328, %v2345
      %s2354 = scalar_lea.vmem %s10, 1664
      %v2355 = vld [vmem:[%s2354] sm:$0xff]
      %v2356 = vld [vmem:[%s2354 + $0x8] sm:$0xff]
      %v2357 = vld [vmem:[%s2354 + $0x10] sm:$0xff]
      %v2358 = vld [vmem:[%s2354 + $0x18] sm:$0xff]
      %v2359 = vld [vmem:[%s2354 + $0x20] sm:$0xff]
      %v2360 = vld [vmem:[%s2354 + $0x28] sm:$0xff]
      %v2361 = vld [vmem:[%s2354 + $0x30] sm:$0xff]
      %v2362 = vld [vmem:[%s2354 + $0x38] sm:$0xff]
      %v2363 = vmul.f32 %v1716, %v2355
      %v2364 = vmul.f32 %v1715, %v2356
      %v2365 = vmul.f32 %v1714, %v2357
      %v2366 = vmul.f32 %v1713, %v2358
      %v2367 = vmul.f32 %v1712, %v2359
      %v2368 = vmul.f32 %v1719, %v2360
      %v2369 = vmul.f32 %v1718, %v2361
      %v2370 = vmul.f32 %v1717, %v2362
      %v2371 = vadd.f32 %v2346, %v2363
      %v2372 = vadd.f32 %v2347, %v2364
      %v2373 = vadd.f32 %v2348, %v2365
      %v2374 = vadd.f32 %v2349, %v2366
      %v2375 = vadd.f32 %v2350, %v2367
      %v2376 = vadd.f32 %v2351, %v2368
      %v2377 = vadd.f32 %v2352, %v2369
      %v2378 = vadd.f32 %v2353, %v2370
      %v2379 = vmul.f32 %v2371, 0.5
      %v2380 = vmul.f32 %v2372, 0.5
      %v2381 = vmul.f32 %v2373, 0.5
      %v2382 = vmul.f32 %v2374, 0.5
      %v2383 = vmul.f32 %v2375, 0.5
      %v2384 = vmul.f32 %v2376, 0.5
      %v2385 = vmul.f32 %v2377, 0.5
      %v2386 = vmul.f32 %v2378, 0.5
      %v2387 = vmul.f32 %v2371, 0.044715
      %v2388 = vmul.f32 %v2372, 0.044715
      %v2389 = vmul.f32 %v2373, 0.044715
      %v2390 = vmul.f32 %v2374, 0.044715
      %v2391 = vmul.f32 %v2375, 0.044715
      %v2392 = vmul.f32 %v2376, 0.044715
      %v2393 = vmul.f32 %v2377, 0.044715
      %v2394 = vmul.f32 %v2378, 0.044715
      %v2395 = vmul.f32 %v2387, %v2371
      %v2396 = vmul.f32 %v2388, %v2372
      %v2397 = vmul.f32 %v2389, %v2373
      %v2398 = vmul.f32 %v2390, %v2374
      %v2399 = vmul.f32 %v2391, %v2375
      %v2400 = vmul.f32 %v2392, %v2376
      %v2401 = vmul.f32 %v2393, %v2377
      %v2402 = vmul.f32 %v2394, %v2378
      %v2403 = vmul.f32 %v2395, %v2371
      %v2404 = vmul.f32 %v2396, %v2372
      %v2405 = vmul.f32 %v2397, %v2373
      %v2406 = vmul.f32 %v2398, %v2374
      %v2407 = vmul.f32 %v2399, %v2375
      %v2408 = vmul.f32 %v2400, %v2376
      %v2409 = vmul.f32 %v2401, %v2377
      %v2410 = vmul.f32 %v2402, %v2378
      %v2411 = vadd.f32 %v2371, %v2403
      %v2412 = vadd.f32 %v2372, %v2404
      %v2413 = vadd.f32 %v2373, %v2405
      %v2414 = vadd.f32 %v2374, %v2406
      %v2415 = vadd.f32 %v2375, %v2407
      %v2416 = vadd.f32 %v2376, %v2408
      %v2417 = vadd.f32 %v2377, %v2409
      %v2418 = vadd.f32 %v2378, %v2410
      %v2419 = vmul.f32 %v2411, 0.7978846
      %v2420 = vmul.f32 %v2412, 0.7978846
      %v2421 = vmul.f32 %v2413, 0.7978846
      %v2422 = vmul.f32 %v2414, 0.7978846
      %v2423 = vmul.f32 %v2415, 0.7978846
      %v2424 = vmul.f32 %v2416, 0.7978846
      %v2425 = vmul.f32 %v2417, 0.7978846
      %v2426 = vmul.f32 %v2418, 0.7978846
      %v2427 = vtanh.pop %v2419
      %v2428 = vtanh.pop %v2420
      %v2429 = vtanh.pop %v2421
      %v2430 = vtanh.pop %v2422
      %v2431 = vtanh.pop %v2423
      %v2432 = vtanh.pop %v2424
      %v2433 = vtanh.pop %v2425
      %v2434 = vtanh.pop %v2426
      %v2435 = vadd.f32 %v2427, 1.0
      %v2436 = vadd.f32 %v2428, 1.0
      %v2437 = vadd.f32 %v2429, 1.0
      %v2438 = vadd.f32 %v2430, 1.0
      %v2439 = vadd.f32 %v2431, 1.0
      %v2440 = vadd.f32 %v2432, 1.0
      %v2441 = vadd.f32 %v2433, 1.0
      %v2442 = vadd.f32 %v2434, 1.0
      %v2443 = vmul.f32 %v2379, %v2435
      %v2444 = vmul.f32 %v2380, %v2436
      %v2445 = vmul.f32 %v2381, %v2437
      %v2446 = vmul.f32 %v2382, %v2438
      %v2447 = vmul.f32 %v2383, %v2439
      %v2448 = vmul.f32 %v2384, %v2440
      %v2449 = vmul.f32 %v2385, %v2441
      %v2450 = vmul.f32 %v2386, %v2442
      %v2451 = vpack.c.bf16 %v2444, %v2443
      %v2452 = vpack.c.bf16 %v2446, %v2445
      %v2453 = vpack.c.bf16 %v2448, %v2447
      %v2454 = vpack.c.bf16 %v2450, %v2449
      %v2455 = vld [vmem:[%s11] sm:$0xf]
      %v2456 = vld [vmem:[%s11 + $0x4] sm:$0xf]
      %v2457 = vld [vmem:[%s11 + $0x8] sm:$0xf]
      %v2458 = vld [vmem:[%s11 + $0xc] sm:$0xf]
      %v2459 = vld [vmem:[%s11 + $0x10] sm:$0xf]
      %v2460 = vld [vmem:[%s11 + $0x14] sm:$0xf]
      %v2461 = vld [vmem:[%s11 + $0x18] sm:$0xf]
      %v2462 = vld [vmem:[%s11 + $0x1c] sm:$0xf]
      %v2463 = vld [vmem:[%s12] sm:$0x1]
      %v2465 = vperm.slane %v2463, 0
      %v2475 = vunpack.c.l.b16 %v2455
      %v2476 = vunpack.c.l.b16 %v2456
      %v2477 = vunpack.c.l.b16 %v2457
      %v2478 = vunpack.c.l.b16 %v2458
      %v2479 = vunpack.c.l.b16 %v2459
      %v2480 = vunpack.c.l.b16 %v2460
      %v2481 = vunpack.c.l.b16 %v2461
      %v2482 = vunpack.c.l.b16 %v2462
      %v2483 = vpack.c.b16 %v2476, %v2475
      %v2484 = vpack.c.b16 %v2478, %v2477
      %v2485 = vpack.c.b16 %v2480, %v2479
      %v2486 = vpack.c.b16 %v2482, %v2481
      %v2492 = vsel %vm800, %v2451, 0
      %v2495 = vsel %vm800, %v2452, 0
      %v2498 = vsel %vm800, %v2453, 0
      %v2501 = vsel %vm800, %v2454, 0
      %2503 = vmatpush.bf16.msra.mxu0 0
      %2504 = vmatpush.bf16.msra.mxu0 0
      %2505 = vmatpush.bf16.msra.mxu0 0
      %2506 = vmatpush.bf16.msra.mxu0 0
      %2507 = vmatpush.bf16.msra.mxu0 %v2486
      %2508 = vmatpush.bf16.msra.mxu0 %v2485
      %2509 = vmatpush.bf16.msra.mxu0 %v2484
      %2510 = vmatpush.bf16.msra.mxu0 %v2483
      %2511 = vmatmul.bf16.gmra.mxu0 %v2492
      %v2512 = vpop.f32.mrf.mxu0
      %v2513 = vadd.f32 %v2465, %v2512
      %v2514 = vpop.f32.mrf.mxu0
      %v2515 = vadd.f32 %v2465, %v2514
      %2516 = vmatmul.bf16.gmra.mxu0 %v2495
      %v2517 = vpop.f32.mrf.mxu0
      %v2518 = vadd.f32 %v2465, %v2517
      %v2519 = vpop.f32.mrf.mxu0
      %v2520 = vadd.f32 %v2465, %v2519
      %2521 = vmatmul.bf16.gmra.mxu0 %v2498
      %v2522 = vpop.f32.mrf.mxu0
      %v2523 = vadd.f32 %v2465, %v2522
      %v2524 = vpop.f32.mrf.mxu0
      %v2525 = vadd.f32 %v2465, %v2524
      %2526 = vmatmul.bf16.gmra.mxu0 %v2501
      %v2527 = vpop.f32.mrf.mxu0
      %v2528 = vadd.f32 %v2465, %v2527
      %v2529 = vpop.f32.mrf.mxu0
      %v2530 = vadd.f32 %v2465, %v2529
      %2531 = vdwg.mxu0
      %v2532 = vadd.f32 %v1273, %v2513
      %v2533 = vadd.f32 %v1274, %v2515
      %v2534 = vadd.f32 %v1275, %v2518
      %v2535 = vadd.f32 %v1276, %v2520
      %v2536 = vadd.f32 %v1277, %v2523
      %v2537 = vadd.f32 %v1278, %v2525
      %v2538 = vadd.f32 %v1279, %v2528
      %v2539 = vadd.f32 %v1280, %v2530
      %2540 = vst.msk [vmem:[%s442] sm:$0xff] %vm453, %v2532
      %2541 = vst.msk [vmem:[%s442 + $0x8] sm:$0xff] %vm453, %v2533
      %2542 = vst.msk [vmem:[%s442 + $0x10] sm:$0xff] %vm453, %v2534
      %2543 = vst.msk [vmem:[%s442 + $0x18] sm:$0xff] %vm453, %v2535
      %2544 = vst.msk [vmem:[%s442 + $0x20] sm:$0xff] %vm453, %v2536
      %2545 = vst.msk [vmem:[%s442 + $0x28] sm:$0xff] %vm453, %v2537
      %2546 = vst.msk [vmem:[%s442 + $0x30] sm:$0xff] %vm453, %v2538
      %2547 = vst.msk [vmem:[%s442 + $0x38] sm:$0xff] %vm453, %v2539
      %s2548 = smul.u32 8, %s24
      %p2549 = scmp.lt.s32.totalorder %s2548, 15
      %s2550 = scalar_select %p2549, %s2548, 15
      %s2551 = smul.addr %s2550, 8
      %s2552 = scalar_lea.vmem %s13, %s2551
      // Predicated region
      $region73: #{block_forward.1} parent=71 // pred_check
        %p2553 = pneg %p320
      $region74: #{block_forward.1} parent=71 // pred_check_branch
        %2555 = sbr.rel (%p2553) target = $region76
      $region75: #{block_forward.1} parent=71 // pred_region
        %s2556 = smul.u32 8, %s24
      $region76: #{block_forward.1} parent=71 // pred_fallthru
        _
    $region72: #{block_forward.1} parent=5 // pred_fallthru
      _
    %p2557 = scmp.le.s32.totalorder 2, %s19
    // Predicated region
    $region77: #{block_forward.1} parent=5 // pred_check
      %p2558 = pneg %p2557
    $region78: #{block_forward.1} parent=5 // pred_check_branch
      %2560 = sbr.rel (%p2558) target = $region80
    $region79: #{block_forward.1} parent=5 // pred_region
      %s2561 = ssub.s32 %s19, 2
      // Predicated region
      $region81: #{block_forward.1} parent=79 // pred_check
        %p2562 = pneg %p326
      $region82: #{block_forward.1} parent=79 // pred_check_branch
        %2564 = sbr.rel (%p2562) target = $region84
      $region83: #{block_forward.1} parent=79 // pred_region
        %s2565 = smul.u32 8, %s25
        %p2566 = scmp.lt.s32.totalorder %s2565, 15
        %s2567 = scalar_select %p2566, %s2565, 15
        %s2568 = smul.addr %s2567, 8
        %s2569 = scalar_lea.vmem %s13, %s2568
      $region84: #{block_forward.1} parent=79 // pred_fallthru
        _
    $region80: #{block_forward.1} parent=5 // pred_fallthru
      _
  $region6: #{block_forward.1} parent=0 // loop_footer
    %s23 = sadd.s32 1, %s19
  $region7: #{block_forward.1} parent=0 // loop_footer_branch
    %18 = sbr.rel target = $region3
  $region8: #{block_forward.1} parent=0 // loop_exit
    _

</llo_original>
